<compile_context>
chip_gen: v5e
topology: v5e:2x2
jax: 0.10.0
libtpu: 0.0.40
codegen_flags: <defaults>
</compile_context>

<pallas_src>
import jax
import jax.numpy as jnp
from jax import lax
from jax.experimental import pallas as pl
from jax.experimental.pallas import tpu as pltpu

_EPS = 1e-5
_GUARD = 8       # guard rows at both ends of the flat padded-h1 scratch
_MAX_M = 8192    # cap on matmul M (= tile_rows * W) per grid step


# ---------------------------------------------------------------------------
# Fused kernel
# ---------------------------------------------------------------------------
def _xblock_kernel(x_hbm, x_ref, w1_ref, w2_ref, w3_ref,
                   s1_ref, t1_ref, s2_ref, t2_ref, s3_ref, t3_ref,
                   o_ref,
                   halo, sem, carry, h1buf, im2col):
    n = pl.program_id(0)
    r = pl.program_id(1)
    num_r = pl.num_programs(1)

    _, tr, w, cin = x_ref.shape
    mid = w1_ref.shape[1]
    cout = w3_ref.shape[1]
    m = tr * w
    g = _GUARD
    bf16, f32 = jnp.bfloat16, jnp.float32

    slot = r & 1            # halo slot consumed by THIS step
    nslot = 1 - slot        # halo slot the NEXT step will consume

    def start_bottom(dst_slot, src_row):
        pltpu.make_async_copy(x_hbm.at[n, src_row], halo.at[dst_slot],
                              sem.at[dst_slot]).start()

    def wait_bottom(dst_slot):
        pltpu.make_async_copy(x_hbm.at[n, 0], halo.at[dst_slot],
                              sem.at[dst_slot]).wait()

    # ---- issue halo DMAs as early as possible --------------------------------
    @pl.when(jnp.logical_and(r == 0, num_r > 1))
    def _():                      # first row-tile of this image: own bottom halo
        start_bottom(slot, tr)

    @pl.when(r < num_r - 2)
    def _():                      # prefetch NEXT step's bottom halo, one step ahead
        start_bottom(nslot, (r + 2) * tr)

    def conv1(v):                 # 1x1 conv + folded bias/BN + ReLU -> bf16
        y = jnp.dot(v, w1_ref[...], preferred_element_type=f32)
        return jnp.maximum(y * s1_ref[...] + t1_ref[...], 0.0).astype(bf16)

    # ---- zero the guard rows (corner taps land there; also edge-masked) ------
    zguard = jnp.zeros((g, mid), bf16)
    h1buf[0:g, :] = zguard
    h1buf[g + (tr + 2) * w:2 * g + (tr + 2) * w, :] = zguard

    # ---- top halo row of h1: carried from the previous row-tile --------------
    @pl.when(r > 0)
    def _():
        h1buf[pl.ds(g, w), :] = carry[...]

    @pl.when(r == 0)
    def _():
        h1buf[pl.ds(g, w), :] = jnp.zeros((w, mid), bf16)

    # ---- main tile: pw1, and save the carry for the next row-tile ------------
    x2d = x_ref[0].reshape(m, cin)            # bf16; reused for the residual below
    h1_main = conv1(x2d)
    h1buf[pl.ds(g + w, m), :] = h1_main
    carry[...] = h1_main[m - w:, :]

    # ---- hoisted W-edge masks -------------------------------------------------
    col = lax.broadcasted_iota(jnp.int32, (m, 1), 0) % w
    left = col == 0
    right = col == w - 1

    def stage(taps):
        for dy, dx in taps:
            start = g + dy * w + (dx - 1)          # static python int
            patch = h1buf[start:start + m, :]      # (m, mid) bf16, direct ref slice
            if dx == 0:
                patch = jnp.where(left, jnp.zeros_like(patch), patch)
            elif dx == 2:
                patch = jnp.where(right, jnp.zeros_like(patch), patch)
            im2col[:, pl.ds((dy * 3 + dx) * mid, mid)] = patch

    # Taps that do not read the bottom-halo row: staged before the halo wait so the
    # (rare) same-step bottom-halo DMA is covered by real work.
    stage([(0, 0), (0, 1), (0, 2), (1, 0), (1, 1)])

    # ---- bottom halo row of h1 (DMA was prefetched one step ahead) ------------
    @pl.when(r < num_r - 1)
    def _():
        wait_bottom(slot)
        h1buf[pl.ds(g + (tr + 1) * w, w), :] = conv1(halo[slot])

    @pl.when(r == num_r - 1)
    def _():
        h1buf[pl.ds(g + (tr + 1) * w, w), :] = jnp.zeros((w, mid), bf16)

    stage([(1, 2), (2, 0), (2, 1), (2, 2)])

    # ---- 3x3 conv as ONE K = 9*mid matmul + BN + ReLU --------------------------
    h2 = jnp.dot(im2col[...], w2_ref[...], preferred_element_type=f32)
    h2 = jnp.maximum(h2 * s2_ref[...] + t2_ref[...], 0.0)

    # ---- final 1x1 conv + BN + ReLU, fused identity residual -------------------
    y = jnp.dot(h2.astype(bf16), w3_ref[...], preferred_element_type=f32)
    y = jnp.maximum(y * s3_ref[...] + t3_ref[...], 0.0)
    y = y + x2d.astype(f32)
    o_ref[0] = y.reshape(tr, w, cout).astype(o_ref.dtype)


# ---------------------------------------------------------------------------
# Host-side helpers
# ---------------------------------------------------------------------------
def _fold_affine(bn, bias):
    """Fold conv bias + BatchNorm (eval) into a single (scale, shift) pair."""
    gamma, beta, mean, var = bn
    s = gamma / jnp.sqrt(var + _EPS)
    t = beta - mean * s + bias * s
    return s[None, :].astype(jnp.float32), t[None, :].astype(jnp.float32)


def _vmem_limits():
    """Generation-aware (budget_for_tiling, vmem_limit_bytes)."""
    try:
        cap = int(pltpu.get_tpu_info().vmem_capacity_bytes)
    except Exception:
        cap = 128 * 1024 * 1024
    limit = min(cap * 3 // 4, 100 * 1024 * 1024)   # 96 MiB on v5e/v6e, 48 MiB on v7x
    budget = int(limit * 0.6)                      # headroom for compiler temps
    return budget, limit


def _pick_tile_rows(H, W, cin, mid, cout, budget):
    """Largest divisor of H whose per-step working set fits the VMEM budget."""
    g = _GUARD
    best = 1
    for tr in range(1, H + 1):
        if H % tr:
            continue
        m = tr * W
        if m > _MAX_M:
            break
        est = (2 * m * cin * 2 + 2 * m * cout * 2          # x / out tiles, dbl-buf, bf16
               + (2 * g + (tr + 2) * W) * mid * 2          # flat padded h1 (bf16)
               + m * 9 * mid * 2                           # im2col (bf16)
               + m * mid * 4 + m * cout * 4                # f32 h2 / y temporaries
               + 2 * W * cin * 2 + W * mid * 2             # halo ring + carry
               + 2 * 2 * (cin * mid + 9 * mid * mid + mid * cout)   # weights x2 (bf16)
               + 2 * 4 * 2 * (2 * mid + cout))             # scales/shifts x2 (f32)
        if est <= budget:
            best = tr
    return best


def xblock_forward_nhwc(x_nhwc, p, *, tile_rows=None, interpret=False):
    x = x_nhwc.astype(jnp.bfloat16)                 # bf16 HBM I/O
    N, H, W, cin = x.shape
    mid = p["w1"].shape[1]
    cout = p["w3"].shape[1]
    if cin != cout:
        # TODO(synk): 1x1-conv identity branch (only needed when spatial dims change).
        raise ValueError("identity residual requires in_channels == block_width")
    if cin % 128 or mid % 128 or cout % 128:
        # TODO(synk): pad channels to 128 lanes for the general case.
        raise ValueError("channel counts must be multiples of 128 for lane alignment")

    budget, vmem_limit = _vmem_limits()
    tr = tile_rows if tile_rows is not None else _pick_tile_rows(H, W, cin, mid, cout,
                                                                 budget)
    if H % tr:
        raise ValueError(f"tile_rows={tr} must divide H={H}")
    num_r = H // tr

    s1, t1 = _fold_affine(p["bn1"], p["b1"])
    s2, t2 = _fold_affine(p["bn2"], p["b2"])
    s3, t3 = _fold_affine(p["bn3"], p["b3"])
    w1 = p["w1"].astype(jnp.bfloat16)                              # (cin, mid)
    w2 = p["w2"].reshape(9 * mid, mid).astype(jnp.bfloat16)        # tap-major packing
    w3 = p["w3"].astype(jnp.bfloat16)                              # (mid, cout)

    def const(shape):
        return pl.BlockSpec(shape, lambda n, r: (0,) * len(shape))

    return pl.pallas_call(
        _xblock_kernel,
        out_shape=jax.ShapeDtypeStruct((N, H, W, cout), jnp.bfloat16),
        grid=(N, num_r),
        in_specs=[
            pl.BlockSpec(memory_space=pl.ANY),                          # x (halo DMAs)
            pl.BlockSpec((1, tr, W, cin), lambda n, r: (n, r, 0, 0)),   # x row tile
            const((cin, mid)),                                          # w1
            const((9 * mid, mid)),                                      # w2 packed
            const((mid, cout)),                                         # w3
            const((1, mid)), const((1, mid)),                           # s1, t1
            const((1, mid)), const((1, mid)),                           # s2, t2
            const((1, cout)), const((1, cout)),                         # s3, t3
        ],
        out_specs=pl.BlockSpec((1, tr, W, cout), lambda n, r: (n, r, 0, 0)),
        scratch_shapes=[
            pltpu.VMEM((2, W, cin), jnp.bfloat16),                      # bottom-halo ring
            pltpu.SemaphoreType.DMA((2,)),
            pltpu.VMEM((W, mid), jnp.bfloat16),                         # h1 carry row
            pltpu.VMEM((2 * _GUARD + (tr + 2) * W, mid), jnp.bfloat16),  # flat padded h1
            pltpu.VMEM((tr * W, 9 * mid), jnp.bfloat16),                # im2col
        ],
        compiler_params=pltpu.CompilerParams(
            dimension_semantics=("parallel", "arbitrary"),   # r carries the halo chain
            vmem_limit_bytes=vmem_limit),
        interpret=interpret,
    )(x, x, w1, w2, w3, s1, t1, s2, t2, s3, t3)


def xblock_forward(x_nchw, p, *, tile_rows=None):
    # NCHW adapter for PyTorch interface parity; the kernel itself is NHWC/bf16.
    x = jnp.transpose(x_nchw, (0, 2, 3, 1))
    out = xblock_forward_nhwc(x, p, tile_rows=tile_rows)
    return jnp.transpose(out, (0, 3, 1, 2))


# ---------------------------------------------------------------------------
# Parameter init + pure-JAX reference (same bf16 rounding points as the kernel)
# ---------------------------------------------------------------------------
def init_xblock_params(key, in_channels, block_width, bottleneck_ratio):
    mid = int(block_width / bottleneck_ratio)
    ks = jax.random.split(key, 9)

    def bn(k, c):
        k1, k2, k3, k4 = jax.random.split(k, 4)
        gamma = 1.0 + 0.1 * jax.random.normal(k1, (c,), jnp.float32)
        beta = 0.1 * jax.random.normal(k2, (c,), jnp.float32)
        mean = 0.1 * jax.random.normal(k3, (c,), jnp.float32)
        var = jnp.abs(0.5 + 0.1 * jax.random.normal(k4, (c,), jnp.float32))
        return gamma, beta, mean, var

    return {
        "w1": 0.1 * jax.random.normal(ks[0], (in_channels, mid), jnp.float32),
        "b1": 0.1 * jax.random.normal(ks[1], (mid,), jnp.float32),
        "bn1": bn(ks[2], mid),
        "w2": 0.1 * jax.random.normal(ks[3], (3, 3, mid, mid), jnp.float32),  # HWIO
        "b2": 0.1 * jax.random.normal(ks[4], (mid,), jnp.float32),
        "bn2": bn(ks[5], mid),
        "w3": 0.1 * jax.random.normal(ks[6], (mid, block_width), jnp.float32),
        "b3": 0.1 * jax.random.normal(ks[7], (block_width,), jnp.float32),
        "bn3": bn(ks[8], block_width),
    }


def xblock_reference_nhwc(x_nhwc, p):
    f32, bf16 = jnp.float32, jnp.bfloat16
    N, H, W, cin = x_nhwc.shape
    mid = p["w1"].shape[1]
    cout = p["w3"].shape[1]
    s1, t1 = _fold_affine(p["bn1"], p["b1"])
    s2, t2 = _fold_affine(p["bn2"], p["b2"])
    s3, t3 = _fold_affine(p["bn3"], p["b3"])
    w1 = p["w1"].astype(bf16)
    w2 = p["w2"].reshape(9 * mid, mid).astype(bf16)
    w3 = p["w3"].astype(bf16)

    x2d = x_nhwc.astype(bf16).reshape(-1, cin)
    h1 = jnp.maximum(jnp.dot(x2d, w1, preferred_element_type=f32) * s1 + t1, 0.0)
    h1 = h1.reshape(N, H, W, mid).astype(bf16)
    h1p = jnp.pad(h1, ((0, 0), (1, 1), (1, 1), (0, 0)))
    taps = [h1p[:, dy:dy + H, dx:dx + W, :] for dy in range(3) for dx in range(3)]
    im2col = jnp.concatenate(taps, axis=-1).reshape(-1, 9 * mid)
    h2 = jnp.maximum(jnp.dot(im2col, w2, preferred_element_type=f32) * s2 + t2, 0.0)
    y = jnp.maximum(jnp.dot(h2.astype(bf16), w3, preferred_element_type=f32) * s3 + t3,
                    0.0)
    out = y + x2d.astype(f32)
    return out.reshape(N, H, W, cout).astype(bf16)


def xblock_reference(x_nchw, p):
    x = jnp.transpose(x_nchw, (0, 2, 3, 1))
    out = xblock_reference_nhwc(x, p)
    return jnp.transpose(out, (0, 3, 1, 2))


if __name__ == "__main__":
    key = jax.random.PRNGKey(0)
    kx, kp = jax.random.split(key)

    # XBlock(activation='relu', in_channels=128, block_width=128,
    #        bottleneck_ratio=1, stride=1, padding='same')  -> mid channels = 128.
    # H=24 with tile_rows=8 exercises the top / interior / bottom row-tiles, the h1
    # carry and the one-step-ahead bottom-halo DMA prefetch.
    N, C, H, W = 2, 128, 24, 16
    x = jax.random.normal(kx, (N, C, H, W), jnp.float32)   # NCHW, PyTorch interface
    params = init_xblock_params(kp, in_channels=C, block_width=C, bottleneck_ratio=1)

    ref = xblock_reference(x, params).astype(jnp.float32)

    out_tiled = jax.block_until_ready(xblock_forward(x, params, tile_rows=8))
    out_auto = jax.block_until_ready(xblock_forward(x, params))   # auto VMEM-budget tile

    for out in (out_tiled, out_auto):
        assert out.shape == (N, C, H, W)
        ok = jnp.allclose(out.astype(jnp.float32), ref, atol=2e-2, rtol=2e-2)
        assert bool(ok), "mismatch vs reference"

    print("KERNEL_OK")
</pallas_src>

<mosaic_0001>
module attributes {stable_mosaic.version = 11 : i64} {
  func.func @_xblock_kernel(%arg0: i32, %arg1: i32, %arg2: memref<2x24x16x128xbf16, #tpu.memory_space<any>>, %arg3: memref<1x8x16x128xbf16, #tpu.memory_space<vmem>>, %arg4: memref<128x128xbf16, #tpu.memory_space<vmem>>, %arg5: memref<1152x128xbf16, #tpu.memory_space<vmem>>, %arg6: memref<128x128xbf16, #tpu.memory_space<vmem>>, %arg7: memref<1x128xf32, #tpu.memory_space<vmem>>, %arg8: memref<1x128xf32, #tpu.memory_space<vmem>>, %arg9: memref<1x128xf32, #tpu.memory_space<vmem>>, %arg10: memref<1x128xf32, #tpu.memory_space<vmem>>, %arg11: memref<1x128xf32, #tpu.memory_space<vmem>>, %arg12: memref<1x128xf32, #tpu.memory_space<vmem>>, %arg13: memref<1x8x16x128xbf16, #tpu.memory_space<vmem>>, %arg14: memref<2x16x128xbf16, #tpu.memory_space<vmem>>, %arg15: memref<2x!tpu.dma_semaphore, #tpu.memory_space<semaphore_mem>>, %arg16: memref<16x128xbf16, #tpu.memory_space<vmem>>, %arg17: memref<176x128xbf16, #tpu.memory_space<vmem>>, %arg18: memref<128x1152xbf16, #tpu.memory_space<vmem>>) attributes {dimension_semantics = [#tpu.dimension_semantics<parallel>, #tpu.dimension_semantics<arbitrary>], iteration_bounds = array<i64: 2, 3>, scalar_prefetch = 0 : i64, scratch_operands = 5 : i64, tpu.core_type = #tpu.core_type<tc>, window_params = [{}, {transform_indices = @transform_1, window_bounds = array<i64: 1, 8, 16, 128>}, {pipeline_mode = #tpu.pipeline_mode<synchronous>, transform_indices = @transform_2, window_bounds = array<i64: 128, 128>}, {pipeline_mode = #tpu.pipeline_mode<synchronous>, transform_indices = @transform_3, window_bounds = array<i64: 1152, 128>}, {pipeline_mode = #tpu.pipeline_mode<synchronous>, transform_indices = @transform_4, window_bounds = array<i64: 128, 128>}, {pipeline_mode = #tpu.pipeline_mode<synchronous>, transform_indices = @transform_5, window_bounds = array<i64: 1, 128>}, {pipeline_mode = #tpu.pipeline_mode<synchronous>, transform_indices = @transform_6, window_bounds = array<i64: 1, 128>}, {pipeline_mode = #tpu.pipeline_mode<synchronous>, transform_indices = @transform_7, window_bounds = array<i64: 1, 128>}, {pipeline_mode = #tpu.pipeline_mode<synchronous>, transform_indices = @transform_8, window_bounds = array<i64: 1, 128>}, {pipeline_mode = #tpu.pipeline_mode<synchronous>, transform_indices = @transform_9, window_bounds = array<i64: 1, 128>}, {pipeline_mode = #tpu.pipeline_mode<synchronous>, transform_indices = @transform_10, window_bounds = array<i64: 1, 128>}, {transform_indices = @transform_11, window_bounds = array<i64: 1, 8, 16, 128>}]} {
    %c1_i32 = arith.constant 1 : i32
    %0 = arith.andi %arg1, %c1_i32 : i32
    %c1_i32_0 = arith.constant 1 : i32
    %1 = arith.subi %c1_i32_0, %0 : i32
    %c0_i32 = arith.constant 0 : i32
    %2 = arith.cmpi eq, %arg1, %c0_i32 : i32
    %true = arith.constant true
    %3 = arith.andi %2, %true : i1
    %4 = arith.extui %3 : i1 to i32
    %c0_i32_1 = arith.constant 0 : i32
    %5 = arith.cmpi ne, %4, %c0_i32_1 : i32
    scf.if %5 {
      %c8_i32 = arith.constant 8 : i32
      %c0_i32_82 = arith.constant 0 : i32
      %c0_i32_83 = arith.constant 0 : i32
      %133 = tpu.memref_slice %arg2[%arg0, %c8_i32, %c0_i32_82, %c0_i32_83] : memref<2x24x16x128xbf16, #tpu.memory_space<any>> -> memref<1x1x16x128xbf16, #tpu.memory_space<any>>
      %134 = tpu.memref_squeeze %133 : memref<1x1x16x128xbf16, #tpu.memory_space<any>> -> memref<16x128xbf16, #tpu.memory_space<any>>
      %c0_i32_84 = arith.constant 0 : i32
      %c0_i32_85 = arith.constant 0 : i32
      %135 = tpu.memref_slice %arg14[%0, %c0_i32_84, %c0_i32_85] : memref<2x16x128xbf16, #tpu.memory_space<vmem>> -> memref<1x16x128xbf16, #tpu.memory_space<vmem>>
      %136 = tpu.memref_squeeze %135 : memref<1x16x128xbf16, #tpu.memory_space<vmem>> -> memref<16x128xbf16, #tpu.memory_space<vmem>>
      %137 = tpu.memref_slice %arg15[%0] : memref<2x!tpu.dma_semaphore, #tpu.memory_space<semaphore_mem>> -> memref<1x!tpu.dma_semaphore, #tpu.memory_space<semaphore_mem>>
      %138 = tpu.memref_squeeze %137 : memref<1x!tpu.dma_semaphore, #tpu.memory_space<semaphore_mem>> -> memref<!tpu.dma_semaphore, #tpu.memory_space<semaphore_mem>>
      tpu.enqueue_dma source(%134 : memref<16x128xbf16, #tpu.memory_space<any>>) target(%136 : memref<16x128xbf16, #tpu.memory_space<vmem>>) target_semaphore(%138 : memref<!tpu.dma_semaphore, #tpu.memory_space<semaphore_mem>>)
    } else {
    }
    %c1_i32_2 = arith.constant 1 : i32
    %6 = arith.cmpi slt, %arg1, %c1_i32_2 : i32
    %7 = arith.extui %6 : i1 to i32
    %c0_i32_3 = arith.constant 0 : i32
    %8 = arith.cmpi ne, %7, %c0_i32_3 : i32
    scf.if %8 {
      %c2_i32_82 = arith.constant 2 : i32
      %133 = arith.addi %arg1, %c2_i32_82 : i32
      %c8_i32 = arith.constant 8 : i32
      %134 = arith.muli %133, %c8_i32 : i32
      %c0_i32_83 = arith.constant 0 : i32
      %c0_i32_84 = arith.constant 0 : i32
      %135 = tpu.memref_slice %arg2[%arg0, %134, %c0_i32_83, %c0_i32_84] : memref<2x24x16x128xbf16, #tpu.memory_space<any>> -> memref<1x1x16x128xbf16, #tpu.memory_space<any>>
      %136 = tpu.memref_squeeze %135 : memref<1x1x16x128xbf16, #tpu.memory_space<any>> -> memref<16x128xbf16, #tpu.memory_space<any>>
      %c0_i32_85 = arith.constant 0 : i32
      %c0_i32_86 = arith.constant 0 : i32
      %137 = tpu.memref_slice %arg14[%1, %c0_i32_85, %c0_i32_86] : memref<2x16x128xbf16, #tpu.memory_space<vmem>> -> memref<1x16x128xbf16, #tpu.memory_space<vmem>>
      %138 = tpu.memref_squeeze %137 : memref<1x16x128xbf16, #tpu.memory_space<vmem>> -> memref<16x128xbf16, #tpu.memory_space<vmem>>
      %139 = tpu.memref_slice %arg15[%1] : memref<2x!tpu.dma_semaphore, #tpu.memory_space<semaphore_mem>> -> memref<1x!tpu.dma_semaphore, #tpu.memory_space<semaphore_mem>>
      %140 = tpu.memref_squeeze %139 : memref<1x!tpu.dma_semaphore, #tpu.memory_space<semaphore_mem>> -> memref<!tpu.dma_semaphore, #tpu.memory_space<semaphore_mem>>
      tpu.enqueue_dma source(%136 : memref<16x128xbf16, #tpu.memory_space<any>>) target(%138 : memref<16x128xbf16, #tpu.memory_space<vmem>>) target_semaphore(%140 : memref<!tpu.dma_semaphore, #tpu.memory_space<semaphore_mem>>)
    } else {
    }
    %cst = arith.constant 0.000000e+00 : bf16
    %9 = vector.broadcast %cst : bf16 to vector<8x128xbf16>
    %c0 = arith.constant 0 : index
    %c0_4 = arith.constant 0 : index
    %10 = vector.load %arg17[%c0, %c0_4] : memref<176x128xbf16, #tpu.memory_space<vmem>>, vector<8x128xbf16>
    tpu.vector_store %arg17[%c0, %c0_4], %9 {strides = array<i32>} : memref<176x128xbf16, #tpu.memory_space<vmem>>, vector<8x128xbf16>,
    %c168 = arith.constant 168 : index
    %c0_5 = arith.constant 0 : index
    %11 = vector.load %arg17[%c168, %c0_5] : memref<176x128xbf16, #tpu.memory_space<vmem>>, vector<8x128xbf16>
    tpu.vector_store %arg17[%c168, %c0_5], %9 {strides = array<i32>} : memref<176x128xbf16, #tpu.memory_space<vmem>>, vector<8x128xbf16>,
    %c0_i32_6 = arith.constant 0 : i32
    %12 = arith.cmpi sgt, %arg1, %c0_i32_6 : i32
    %13 = arith.extui %12 : i1 to i32
    %c0_i32_7 = arith.constant 0 : i32
    %14 = arith.cmpi ne, %13, %c0_i32_7 : i32
    scf.if %14 {
      %c0_82 = arith.constant 0 : index
      %c0_83 = arith.constant 0 : index
      %133 = vector.load %arg16[%c0_82, %c0_83] : memref<16x128xbf16, #tpu.memory_space<vmem>>, vector<16x128xbf16>
      %c8_84 = arith.constant 8 : index
      %c0_85 = arith.constant 0 : index
      %134 = vector.load %arg17[%c8_84, %c0_85] : memref<176x128xbf16, #tpu.memory_space<vmem>>, vector<16x128xbf16>
      tpu.vector_store %arg17[%c8_84, %c0_85], %133 {strides = array<i32>} : memref<176x128xbf16, #tpu.memory_space<vmem>>, vector<16x128xbf16>,
    } else {
    }
    %c0_i32_8 = arith.constant 0 : i32
    %15 = arith.cmpi eq, %arg1, %c0_i32_8 : i32
    %16 = arith.extui %15 : i1 to i32
    %c0_i32_9 = arith.constant 0 : i32
    %17 = arith.cmpi ne, %16, %c0_i32_9 : i32
    scf.if %17 {
      %cst_82 = arith.constant 0.000000e+00 : bf16
      %133 = vector.broadcast %cst_82 : bf16 to vector<16x128xbf16>
      %c8_83 = arith.constant 8 : index
      %c0_84 = arith.constant 0 : index
      %134 = vector.load %arg17[%c8_83, %c0_84] : memref<176x128xbf16, #tpu.memory_space<vmem>>, vector<16x128xbf16>
      tpu.vector_store %arg17[%c8_83, %c0_84], %133 {strides = array<i32>} : memref<176x128xbf16, #tpu.memory_space<vmem>>, vector<16x128xbf16>,
    } else {
    }
    %c0_10 = arith.constant 0 : index
    %c0_11 = arith.constant 0 : index
    %c0_12 = arith.constant 0 : index
    %c0_13 = arith.constant 0 : index
    %18 = vector.load %arg3[%c0_10, %c0_11, %c0_12, %c0_13] : memref<1x8x16x128xbf16, #tpu.memory_space<vmem>>, vector<1x8x16x128xbf16>
    %19 = vector.shape_cast %18 : vector<1x8x16x128xbf16> to vector<8x16x128xbf16>
    %20 = vector.shape_cast %19 : vector<8x16x128xbf16> to vector<128x128xbf16>
    %c0_14 = arith.constant 0 : index
    %c0_15 = arith.constant 0 : index
    %21 = vector.load %arg4[%c0_14, %c0_15] : memref<128x128xbf16, #tpu.memory_space<vmem>>, vector<128x128xbf16>
    %cst_16 = arith.constant dense<0.000000e+00> : vector<128x128xf32>
    %22 = tpu.matmul %20, %21, %cst_16 {dimension_numbers = #tpu.dot_dimension_numbers<[1], [0], [0], [1], [0, 0, 1, 1], [], []>} : vector<128x128xbf16>, vector<128x128xbf16>, vector<128x128xf32> -> vector<128x128xf32>
    %c0_17 = arith.constant 0 : index
    %c0_18 = arith.constant 0 : index
    %23 = vector.load %arg7[%c0_17, %c0_18] : memref<1x128xf32, #tpu.memory_space<vmem>>, vector<1x128xf32>
    %24 = vector.broadcast %23 : vector<1x128xf32> to vector<128x128xf32>
    %25 = arith.mulf %22, %24 : vector<128x128xf32>
    %c0_19 = arith.constant 0 : index
    %c0_20 = arith.constant 0 : index
    %26 = vector.load %arg8[%c0_19, %c0_20] : memref<1x128xf32, #tpu.memory_space<vmem>>, vector<1x128xf32>
    %27 = vector.broadcast %26 : vector<1x128xf32> to vector<128x128xf32>
    %28 = arith.addf %25, %27 : vector<128x128xf32>
    %cst_21 = arith.constant 0.000000e+00 : f32
    %29 = vector.broadcast %cst_21 : f32 to vector<128x128xf32>
    %30 = arith.maximumf %28, %29 : vector<128x128xf32>
    %31 = arith.truncf %30 : vector<128x128xf32> to vector<128x128xbf16>
    %c24 = arith.constant 24 : index
    %c0_22 = arith.constant 0 : index
    %32 = vector.load %arg17[%c24, %c0_22] : memref<176x128xbf16, #tpu.memory_space<vmem>>, vector<128x128xbf16>
    tpu.vector_store %arg17[%c24, %c0_22], %31 {strides = array<i32>} : memref<176x128xbf16, #tpu.memory_space<vmem>>, vector<128x128xbf16>,
    %33 = vector.extract_strided_slice %31 {offsets = [112, 0], sizes = [16, 128], strides = [1, 1]} : vector<128x128xbf16> to vector<16x128xbf16>
    %c0_23 = arith.constant 0 : index
    %c0_24 = arith.constant 0 : index
    %34 = vector.load %arg16[%c0_23, %c0_24] : memref<16x128xbf16, #tpu.memory_space<vmem>>, vector<16x128xbf16>
    tpu.vector_store %arg16[%c0_23, %c0_24], %33 {strides = array<i32>} : memref<16x128xbf16, #tpu.memory_space<vmem>>, vector<16x128xbf16>,
    %35 = tpu.iota {dimensions = array<i32: 0>} : vector<128x1xi32>
    %c16_i32 = arith.constant 16 : i32
    %c0_i32_25 = arith.constant 0 : i32
    %36 = arith.cmpi eq, %c16_i32, %c0_i32_25 : i32
    %c1_i32_26 = arith.constant 1 : i32
    %37 = arith.select %36, %c1_i32_26, %c16_i32 : i32
    %38 = vector.broadcast %37 : i32 to vector<128x1xi32>
    %39 = arith.remsi %35, %38 : vector<128x1xi32>
    %c0_i32_27 = arith.constant 0 : i32
    %40 = vector.broadcast %c0_i32_27 : i32 to vector<128x1xi32>
    %41 = arith.cmpi ne, %39, %40 : vector<128x1xi32>
    %c0_i32_28 = arith.constant 0 : i32
    %42 = vector.broadcast %c0_i32_28 : i32 to vector<128x1xi32>
    %43 = arith.cmpi slt, %39, %42 : vector<128x1xi32>
    %c0_i32_29 = arith.constant 0 : i32
    %44 = arith.cmpi slt, %37, %c0_i32_29 : i32
    %45 = vector.broadcast %44 : i1 to vector<128x1xi1>
    %46 = vector.broadcast %45 : vector<128x1xi1> to vector<128x1xi1>
    %47 = arith.xori %43, %46 : vector<128x1xi1>
    %48 = arith.andi %47, %41 : vector<128x1xi1>
    %49 = vector.broadcast %37 : i32 to vector<128x1xi32>
    %50 = arith.addi %39, %49 : vector<128x1xi32>
    %51 = arith.select %48, %50, %39 : vector<128x1xi1>, vector<128x1xi32>
    %c0_i32_30 = arith.constant 0 : i32
    %52 = vector.broadcast %c0_i32_30 : i32 to vector<128x1xi32>
    %53 = arith.cmpi eq, %51, %52 : vector<128x1xi32>
    %c15_i32 = arith.constant 15 : i32
    %54 = vector.broadcast %c15_i32 : i32 to vector<128x1xi32>
    %55 = arith.cmpi eq, %51, %54 : vector<128x1xi32>
    %c7 = arith.constant 7 : index
    %c0_31 = arith.constant 0 : index
    %56 = vector.load %arg17[%c7, %c0_31] : memref<176x128xbf16, #tpu.memory_space<vmem>>, vector<128x128xbf16>
    %cst_32 = arith.constant 0.000000e+00 : bf16
    %57 = vector.broadcast %cst_32 : bf16 to vector<128x128xbf16>
    %58 = vector.shape_cast %53 : vector<128x1xi1> to vector<128x1xi1>
    %59 = vector.broadcast %58 : vector<128x1xi1> to vector<128x128xi1>
    %60 = arith.select %59, %57, %56 : vector<128x128xi1>, vector<128x128xbf16>
    %c0_33 = arith.constant 0 : index
    %c0_34 = arith.constant 0 : index
    %61 = vector.load %arg18[%c0_33, %c0_34] : memref<128x1152xbf16, #tpu.memory_space<vmem>>, vector<128x128xbf16>
    tpu.vector_store %arg18[%c0_33, %c0_34], %60 {strides = array<i32>} : memref<128x1152xbf16, #tpu.memory_space<vmem>>, vector<128x128xbf16>,
    %c8 = arith.constant 8 : index
    %c0_35 = arith.constant 0 : index
    %62 = vector.load %arg17[%c8, %c0_35] : memref<176x128xbf16, #tpu.memory_space<vmem>>, vector<128x128xbf16>
    %c0_36 = arith.constant 0 : index
    %c128 = arith.constant 128 : index
    %63 = vector.load %arg18[%c0_36, %c128] : memref<128x1152xbf16, #tpu.memory_space<vmem>>, vector<128x128xbf16>
    tpu.vector_store %arg18[%c0_36, %c128], %62 {strides = array<i32>} : memref<128x1152xbf16, #tpu.memory_space<vmem>>, vector<128x128xbf16>,
    %c9 = arith.constant 9 : index
    %c0_37 = arith.constant 0 : index
    %64 = vector.load %arg17[%c9, %c0_37] : memref<176x128xbf16, #tpu.memory_space<vmem>>, vector<128x128xbf16>
    %cst_38 = arith.constant 0.000000e+00 : bf16
    %65 = vector.broadcast %cst_38 : bf16 to vector<128x128xbf16>
    %66 = vector.shape_cast %55 : vector<128x1xi1> to vector<128x1xi1>
    %67 = vector.broadcast %66 : vector<128x1xi1> to vector<128x128xi1>
    %68 = arith.select %67, %65, %64 : vector<128x128xi1>, vector<128x128xbf16>
    %c0_39 = arith.constant 0 : index
    %c256 = arith.constant 256 : index
    %69 = vector.load %arg18[%c0_39, %c256] : memref<128x1152xbf16, #tpu.memory_space<vmem>>, vector<128x128xbf16>
    tpu.vector_store %arg18[%c0_39, %c256], %68 {strides = array<i32>} : memref<128x1152xbf16, #tpu.memory_space<vmem>>, vector<128x128xbf16>,
    %c23 = arith.constant 23 : index
    %c0_40 = arith.constant 0 : index
    %70 = vector.load %arg17[%c23, %c0_40] : memref<176x128xbf16, #tpu.memory_space<vmem>>, vector<128x128xbf16>
    %cst_41 = arith.constant 0.000000e+00 : bf16
    %71 = vector.broadcast %cst_41 : bf16 to vector<128x128xbf16>
    %72 = vector.shape_cast %53 : vector<128x1xi1> to vector<128x1xi1>
    %73 = vector.broadcast %72 : vector<128x1xi1> to vector<128x128xi1>
    %74 = arith.select %73, %71, %70 : vector<128x128xi1>, vector<128x128xbf16>
    %c0_42 = arith.constant 0 : index
    %c384 = arith.constant 384 : index
    %75 = vector.load %arg18[%c0_42, %c384] : memref<128x1152xbf16, #tpu.memory_space<vmem>>, vector<128x128xbf16>
    tpu.vector_store %arg18[%c0_42, %c384], %74 {strides = array<i32>} : memref<128x1152xbf16, #tpu.memory_space<vmem>>, vector<128x128xbf16>,
    %c24_43 = arith.constant 24 : index
    %c0_44 = arith.constant 0 : index
    %76 = vector.load %arg17[%c24_43, %c0_44] : memref<176x128xbf16, #tpu.memory_space<vmem>>, vector<128x128xbf16>
    %c0_45 = arith.constant 0 : index
    %c512 = arith.constant 512 : index
    %77 = vector.load %arg18[%c0_45, %c512] : memref<128x1152xbf16, #tpu.memory_space<vmem>>, vector<128x128xbf16>
    tpu.vector_store %arg18[%c0_45, %c512], %76 {strides = array<i32>} : memref<128x1152xbf16, #tpu.memory_space<vmem>>, vector<128x128xbf16>,
    %c2_i32 = arith.constant 2 : i32
    %78 = arith.cmpi slt, %arg1, %c2_i32 : i32
    %79 = arith.extui %78 : i1 to i32
    %c0_i32_46 = arith.constant 0 : i32
    %80 = arith.cmpi ne, %79, %c0_i32_46 : i32
    scf.if %80 {
      %c0_i32_82 = arith.constant 0 : i32
      %c0_i32_83 = arith.constant 0 : i32
      %c0_i32_84 = arith.constant 0 : i32
      %133 = tpu.memref_slice %arg2[%arg0, %c0_i32_82, %c0_i32_83, %c0_i32_84] : memref<2x24x16x128xbf16, #tpu.memory_space<any>> -> memref<1x1x16x128xbf16, #tpu.memory_space<any>>
      %134 = tpu.memref_squeeze %133 : memref<1x1x16x128xbf16, #tpu.memory_space<any>> -> memref<16x128xbf16, #tpu.memory_space<any>>
      %c0_i32_85 = arith.constant 0 : i32
      %c0_i32_86 = arith.constant 0 : i32
      %135 = tpu.memref_slice %arg14[%0, %c0_i32_85, %c0_i32_86] : memref<2x16x128xbf16, #tpu.memory_space<vmem>> -> memref<1x16x128xbf16, #tpu.memory_space<vmem>>
      %136 = tpu.memref_squeeze %135 : memref<1x16x128xbf16, #tpu.memory_space<vmem>> -> memref<16x128xbf16, #tpu.memory_space<vmem>>
      %137 = tpu.memref_slice %arg15[%0] : memref<2x!tpu.dma_semaphore, #tpu.memory_space<semaphore_mem>> -> memref<1x!tpu.dma_semaphore, #tpu.memory_space<semaphore_mem>>
      %138 = tpu.memref_squeeze %137 : memref<1x!tpu.dma_semaphore, #tpu.memory_space<semaphore_mem>> -> memref<!tpu.dma_semaphore, #tpu.memory_space<semaphore_mem>>
      tpu.wait_dma2 semaphore(%138 : memref<!tpu.dma_semaphore, #tpu.memory_space<semaphore_mem>>) src(%134 : memref<16x128xbf16, #tpu.memory_space<any>>) dst(%136 : memref<16x128xbf16, #tpu.memory_space<vmem>>)
      %139 = arith.index_cast %0 : i32 to index
      %c0_87 = arith.constant 0 : index
      %c0_88 = arith.constant 0 : index
      %140 = vector.load %arg14[%139, %c0_87, %c0_88] : memref<2x16x128xbf16, #tpu.memory_space<vmem>>, vector<1x16x128xbf16>
      %141 = vector.shape_cast %140 : vector<1x16x128xbf16> to vector<16x128xbf16>
      %c0_89 = arith.constant 0 : index
      %c0_90 = arith.constant 0 : index
      %142 = vector.load %arg4[%c0_89, %c0_90] : memref<128x128xbf16, #tpu.memory_space<vmem>>, vector<128x128xbf16>
      %cst_91 = arith.constant dense<0.000000e+00> : vector<16x128xf32>
      %143 = tpu.matmul %141, %142, %cst_91 {dimension_numbers = #tpu.dot_dimension_numbers<[1], [0], [0], [1], [0, 0, 1, 1], [], []>} : vector<16x128xbf16>, vector<128x128xbf16>, vector<16x128xf32> -> vector<16x128xf32>
      %c0_92 = arith.constant 0 : index
      %c0_93 = arith.constant 0 : index
      %144 = vector.load %arg7[%c0_92, %c0_93] : memref<1x128xf32, #tpu.memory_space<vmem>>, vector<1x128xf32>
      %145 = vector.broadcast %144 : vector<1x128xf32> to vector<16x128xf32>
      %146 = arith.mulf %143, %145 : vector<16x128xf32>
      %c0_94 = arith.constant 0 : index
      %c0_95 = arith.constant 0 : index
      %147 = vector.load %arg8[%c0_94, %c0_95] : memref<1x128xf32, #tpu.memory_space<vmem>>, vector<1x128xf32>
      %148 = vector.broadcast %147 : vector<1x128xf32> to vector<16x128xf32>
      %149 = arith.addf %146, %148 : vector<16x128xf32>
      %cst_96 = arith.constant 0.000000e+00 : f32
      %150 = vector.broadcast %cst_96 : f32 to vector<16x128xf32>
      %151 = arith.maximumf %149, %150 : vector<16x128xf32>
      %152 = arith.truncf %151 : vector<16x128xf32> to vector<16x128xbf16>
      %c152 = arith.constant 152 : index
      %c0_97 = arith.constant 0 : index
      %153 = vector.load %arg17[%c152, %c0_97] : memref<176x128xbf16, #tpu.memory_space<vmem>>, vector<16x128xbf16>
      tpu.vector_store %arg17[%c152, %c0_97], %152 {strides = array<i32>} : memref<176x128xbf16, #tpu.memory_space<vmem>>, vector<16x128xbf16>,
    } else {
    }
    %c2_i32_47 = arith.constant 2 : i32
    %81 = arith.cmpi eq, %arg1, %c2_i32_47 : i32
    %82 = arith.extui %81 : i1 to i32
    %c0_i32_48 = arith.constant 0 : i32
    %83 = arith.cmpi ne, %82, %c0_i32_48 : i32
    scf.if %83 {
      %cst_82 = arith.constant 0.000000e+00 : bf16
      %133 = vector.broadcast %cst_82 : bf16 to vector<16x128xbf16>
      %c152 = arith.constant 152 : index
      %c0_83 = arith.constant 0 : index
      %134 = vector.load %arg17[%c152, %c0_83] : memref<176x128xbf16, #tpu.memory_space<vmem>>, vector<16x128xbf16>
      tpu.vector_store %arg17[%c152, %c0_83], %133 {strides = array<i32>} : memref<176x128xbf16, #tpu.memory_space<vmem>>, vector<16x128xbf16>,
    } else {
    }
    %c25 = arith.constant 25 : index
    %c0_49 = arith.constant 0 : index
    %84 = vector.load %arg17[%c25, %c0_49] : memref<176x128xbf16, #tpu.memory_space<vmem>>, vector<128x128xbf16>
    %cst_50 = arith.constant 0.000000e+00 : bf16
    %85 = vector.broadcast %cst_50 : bf16 to vector<128x128xbf16>
    %86 = vector.shape_cast %55 : vector<128x1xi1> to vector<128x1xi1>
    %87 = vector.broadcast %86 : vector<128x1xi1> to vector<128x128xi1>
    %88 = arith.select %87, %85, %84 : vector<128x128xi1>, vector<128x128xbf16>
    %c0_51 = arith.constant 0 : index
    %c640 = arith.constant 640 : index
    %89 = vector.load %arg18[%c0_51, %c640] : memref<128x1152xbf16, #tpu.memory_space<vmem>>, vector<128x128xbf16>
    tpu.vector_store %arg18[%c0_51, %c640], %88 {strides = array<i32>} : memref<128x1152xbf16, #tpu.memory_space<vmem>>, vector<128x128xbf16>,
    %c39 = arith.constant 39 : index
    %c0_52 = arith.constant 0 : index
    %90 = vector.load %arg17[%c39, %c0_52] : memref<176x128xbf16, #tpu.memory_space<vmem>>, vector<128x128xbf16>
    %cst_53 = arith.constant 0.000000e+00 : bf16
    %91 = vector.broadcast %cst_53 : bf16 to vector<128x128xbf16>
    %92 = vector.shape_cast %53 : vector<128x1xi1> to vector<128x1xi1>
    %93 = vector.broadcast %92 : vector<128x1xi1> to vector<128x128xi1>
    %94 = arith.select %93, %91, %90 : vector<128x128xi1>, vector<128x128xbf16>
    %c0_54 = arith.constant 0 : index
    %c768 = arith.constant 768 : index
    %95 = vector.load %arg18[%c0_54, %c768] : memref<128x1152xbf16, #tpu.memory_space<vmem>>, vector<128x128xbf16>
    tpu.vector_store %arg18[%c0_54, %c768], %94 {strides = array<i32>} : memref<128x1152xbf16, #tpu.memory_space<vmem>>, vector<128x128xbf16>,
    %c40 = arith.constant 40 : index
    %c0_55 = arith.constant 0 : index
    %96 = vector.load %arg17[%c40, %c0_55] : memref<176x128xbf16, #tpu.memory_space<vmem>>, vector<128x128xbf16>
    %c0_56 = arith.constant 0 : index
    %c896 = arith.constant 896 : index
    %97 = vector.load %arg18[%c0_56, %c896] : memref<128x1152xbf16, #tpu.memory_space<vmem>>, vector<128x128xbf16>
    tpu.vector_store %arg18[%c0_56, %c896], %96 {strides = array<i32>} : memref<128x1152xbf16, #tpu.memory_space<vmem>>, vector<128x128xbf16>,
    %c41 = arith.constant 41 : index
    %c0_57 = arith.constant 0 : index
    %98 = vector.load %arg17[%c41, %c0_57] : memref<176x128xbf16, #tpu.memory_space<vmem>>, vector<128x128xbf16>
    %cst_58 = arith.constant 0.000000e+00 : bf16
    %99 = vector.broadcast %cst_58 : bf16 to vector<128x128xbf16>
    %100 = vector.shape_cast %55 : vector<128x1xi1> to vector<128x1xi1>
    %101 = vector.broadcast %100 : vector<128x1xi1> to vector<128x128xi1>
    %102 = arith.select %101, %99, %98 : vector<128x128xi1>, vector<128x128xbf16>
    %c0_59 = arith.constant 0 : index
    %c1024 = arith.constant 1024 : index
    %103 = vector.load %arg18[%c0_59, %c1024] : memref<128x1152xbf16, #tpu.memory_space<vmem>>, vector<128x128xbf16>
    tpu.vector_store %arg18[%c0_59, %c1024], %102 {strides = array<i32>} : memref<128x1152xbf16, #tpu.memory_space<vmem>>, vector<128x128xbf16>,
    %c0_60 = arith.constant 0 : index
    %c0_61 = arith.constant 0 : index
    %104 = vector.load %arg18[%c0_60, %c0_61] : memref<128x1152xbf16, #tpu.memory_space<vmem>>, vector<128x1152xbf16>
    %c0_62 = arith.constant 0 : index
    %c0_63 = arith.constant 0 : index
    %105 = vector.load %arg5[%c0_62, %c0_63] : memref<1152x128xbf16, #tpu.memory_space<vmem>>, vector<1152x128xbf16>
    %cst_64 = arith.constant dense<0.000000e+00> : vector<128x128xf32>
    %106 = tpu.matmul %104, %105, %cst_64 {dimension_numbers = #tpu.dot_dimension_numbers<[1], [0], [0], [1], [0, 0, 1, 1], [], []>} : vector<128x1152xbf16>, vector<1152x128xbf16>, vector<128x128xf32> -> vector<128x128xf32>
    %c0_65 = arith.constant 0 : index
    %c0_66 = arith.constant 0 : index
    %107 = vector.load %arg9[%c0_65, %c0_66] : memref<1x128xf32, #tpu.memory_space<vmem>>, vector<1x128xf32>
    %108 = vector.broadcast %107 : vector<1x128xf32> to vector<128x128xf32>
    %109 = arith.mulf %106, %108 : vector<128x128xf32>
    %c0_67 = arith.constant 0 : index
    %c0_68 = arith.constant 0 : index
    %110 = vector.load %arg10[%c0_67, %c0_68] : memref<1x128xf32, #tpu.memory_space<vmem>>, vector<1x128xf32>
    %111 = vector.broadcast %110 : vector<1x128xf32> to vector<128x128xf32>
    %112 = arith.addf %109, %111 : vector<128x128xf32>
    %cst_69 = arith.constant 0.000000e+00 : f32
    %113 = vector.broadcast %cst_69 : f32 to vector<128x128xf32>
    %114 = arith.maximumf %112, %113 : vector<128x128xf32>
    %115 = arith.truncf %114 : vector<128x128xf32> to vector<128x128xbf16>
    %c0_70 = arith.constant 0 : index
    %c0_71 = arith.constant 0 : index
    %116 = vector.load %arg6[%c0_70, %c0_71] : memref<128x128xbf16, #tpu.memory_space<vmem>>, vector<128x128xbf16>
    %cst_72 = arith.constant dense<0.000000e+00> : vector<128x128xf32>
    %117 = tpu.matmul %115, %116, %cst_72 {dimension_numbers = #tpu.dot_dimension_numbers<[1], [0], [0], [1], [0, 0, 1, 1], [], []>} : vector<128x128xbf16>, vector<128x128xbf16>, vector<128x128xf32> -> vector<128x128xf32>
    %c0_73 = arith.constant 0 : index
    %c0_74 = arith.constant 0 : index
    %118 = vector.load %arg11[%c0_73, %c0_74] : memref<1x128xf32, #tpu.memory_space<vmem>>, vector<1x128xf32>
    %119 = vector.broadcast %118 : vector<1x128xf32> to vector<128x128xf32>
    %120 = arith.mulf %117, %119 : vector<128x128xf32>
    %c0_75 = arith.constant 0 : index
    %c0_76 = arith.constant 0 : index
    %121 = vector.load %arg12[%c0_75, %c0_76] : memref<1x128xf32, #tpu.memory_space<vmem>>, vector<1x128xf32>
    %122 = vector.broadcast %121 : vector<1x128xf32> to vector<128x128xf32>
    %123 = arith.addf %120, %122 : vector<128x128xf32>
    %cst_77 = arith.constant 0.000000e+00 : f32
    %124 = vector.broadcast %cst_77 : f32 to vector<128x128xf32>
    %125 = arith.maximumf %123, %124 : vector<128x128xf32>
    %126 = arith.extf %20 : vector<128x128xbf16> to vector<128x128xf32>
    %127 = arith.addf %125, %126 : vector<128x128xf32>
    %128 = vector.shape_cast %127 : vector<128x128xf32> to vector<8x16x128xf32>
    %129 = arith.truncf %128 : vector<8x16x128xf32> to vector<8x16x128xbf16>
    %c0_78 = arith.constant 0 : index
    %c0_79 = arith.constant 0 : index
    %c0_80 = arith.constant 0 : index
    %c0_81 = arith.constant 0 : index
    %130 = vector.load %arg13[%c0_78, %c0_79, %c0_80, %c0_81] : memref<1x8x16x128xbf16, #tpu.memory_space<vmem>>, vector<1x8x16x128xbf16>
    %131 = vector.shape_cast %130 : vector<1x8x16x128xbf16> to vector<8x16x128xbf16>
    %132 = vector.shape_cast %129 : vector<8x16x128xbf16> to vector<1x8x16x128xbf16>
    tpu.vector_store %arg13[%c0_78, %c0_79, %c0_80, %c0_81], %132 {strides = array<i32>} : memref<1x8x16x128xbf16, #tpu.memory_space<vmem>>, vector<1x8x16x128xbf16>,
    return
  }
  func.func @transform_1(%arg0: i32, %arg1: i32) -> (i32, i32, i32, i32) {
    %c0_i32 = arith.constant 0 : i32
    %c0_i32_0 = arith.constant 0 : i32
    %c0_i32_1 = arith.constant 0 : i32
    return %arg0, %arg1, %c0_i32, %c0_i32_0 : i32, i32, i32, i32
  }
  func.func @transform_2(%arg0: i32, %arg1: i32) -> (i32, i32) {
    %c0_i32 = arith.constant 0 : i32
    %c0_i32_0 = arith.constant 0 : i32
    %c0_i32_1 = arith.constant 0 : i32
    return %c0_i32, %c0_i32_0 : i32, i32
  }
  func.func @transform_3(%arg0: i32, %arg1: i32) -> (i32, i32) {
    %c0_i32 = arith.constant 0 : i32
    %c0_i32_0 = arith.constant 0 : i32
    %c0_i32_1 = arith.constant 0 : i32
    return %c0_i32, %c0_i32_0 : i32, i32
  }
  func.func @transform_4(%arg0: i32, %arg1: i32) -> (i32, i32) {
    %c0_i32 = arith.constant 0 : i32
    %c0_i32_0 = arith.constant 0 : i32
    %c0_i32_1 = arith.constant 0 : i32
    return %c0_i32, %c0_i32_0 : i32, i32
  }
  func.func @transform_5(%arg0: i32, %arg1: i32) -> (i32, i32) {
    %c0_i32 = arith.constant 0 : i32
    %c0_i32_0 = arith.constant 0 : i32
    %c0_i32_1 = arith.constant 0 : i32
    return %c0_i32, %c0_i32_0 : i32, i32
  }
  func.func @transform_6(%arg0: i32, %arg1: i32) -> (i32, i32) {
    %c0_i32 = arith.constant 0 : i32
    %c0_i32_0 = arith.constant 0 : i32
    %c0_i32_1 = arith.constant 0 : i32
    return %c0_i32, %c0_i32_0 : i32, i32
  }
  func.func @transform_7(%arg0: i32, %arg1: i32) -> (i32, i32) {
    %c0_i32 = arith.constant 0 : i32
    %c0_i32_0 = arith.constant 0 : i32
    %c0_i32_1 = arith.constant 0 : i32
    return %c0_i32, %c0_i32_0 : i32, i32
  }
  func.func @transform_8(%arg0: i32, %arg1: i32) -> (i32, i32) {
    %c0_i32 = arith.constant 0 : i32
    %c0_i32_0 = arith.constant 0 : i32
    %c0_i32_1 = arith.constant 0 : i32
    return %c0_i32, %c0_i32_0 : i32, i32
  }
  func.func @transform_9(%arg0: i32, %arg1: i32) -> (i32, i32) {
    %c0_i32 = arith.constant 0 : i32
    %c0_i32_0 = arith.constant 0 : i32
    %c0_i32_1 = arith.constant 0 : i32
    return %c0_i32, %c0_i32_0 : i32, i32
  }
  func.func @transform_10(%arg0: i32, %arg1: i32) -> (i32, i32) {
    %c0_i32 = arith.constant 0 : i32
    %c0_i32_0 = arith.constant 0 : i32
    %c0_i32_1 = arith.constant 0 : i32
    return %c0_i32, %c0_i32_0 : i32, i32
  }
  func.func @transform_11(%arg0: i32, %arg1: i32) -> (i32, i32, i32, i32) {
    %c0_i32 = arith.constant 0 : i32
    %c0_i32_0 = arith.constant 0 : i32
    %c0_i32_1 = arith.constant 0 : i32
    return %arg0, %arg1, %c0_i32, %c0_i32_0 : i32, i32, i32, i32
  }
}

</mosaic_0001>

<llo_original>
// kernel: tpu_custom_call.1
$region0: #{tpu_custom_call.1}
  #allocation0 [shape = 'u32[]', space=smem, size = 0x4, offset = 0x4, fixed_abs, tag = 'smem constant byte address 0x4 - core index']
  #allocation1 [shape = 'u32[72,128]{1,0:T(1,128)}', space=vmem, size = 0x9000, scoped, tag = 'internal scratch']
  #allocation2 [shape = 'bf16[2,16,128]{2,1,0:T(8,128)(2,1)}', space=vmem, size = 0x2000, scoped, tag = 'scratch operand']
  #allocation3 [shape = 's32[2]{0}', space=sflag, size = 0x8, scoped, tag = 'scratch operand']
  #allocation4 [shape = 'bf16[16,128]{1,0:T(8,128)(2,1)}', space=vmem, size = 0x1000, scoped, tag = 'scratch operand']
  #allocation5 [shape = 'bf16[176,128]{1,0:T(8,128)(2,1)}', space=vmem, size = 0xb000, scoped, tag = 'scratch operand']
  #allocation6 [shape = 'bf16[128,1152]{1,0:T(8,128)(2,1)}', space=vmem, size = 0x48000, scoped, tag = 'scratch operand']
  #allocation16 [shape = 's32[]', space=sflag, size = 0x4, offset = 0, fixed_abs, tag = 'sflag constant byte address 0x0 - dummy sync flag']
  #allocation17 [shape = 's32[]', space=sflag, size = 0x4, offset = 0, fixed_abs, tag = 'sflag constant byte address 0x0 - dummy sync flag']
  #allocation18 [shape = 'u32[]', space=smem, size = 0x4, offset = 0x44, fixed_abs, tag = 'smem constant byte address 0x44 - assertion arg 0']
  #allocation19 [shape = 'u32[]', space=smem, size = 0x4, offset = 0x48, fixed_abs, tag = 'smem constant byte address 0x48 - assertion arg 1']
  #allocation20 [shape = 's32[]', space=sflag, size = 0x4, offset = 0, fixed_abs, tag = 'sflag constant byte address 0x0 - dummy sync flag']
  #allocation21 [shape = 's32[]', space=sflag, size = 0x4, offset = 0, fixed_abs, tag = 'sflag constant byte address 0x0 - dummy sync flag']
  %s0 = inlined_call_operand.hbm [shape: bf16[2,24,16,128], index: 0, kind: input, shape index: {}]
  %s1 = inlined_call_operand.hbm [shape: bf16[2,24,16,128], index: 1, kind: input, shape index: {}]
  %s2 = inlined_call_operand.hbm [shape: bf16[128,128], index: 2, kind: input, shape index: {}]
  %s3 = inlined_call_operand.hbm [shape: bf16[1152,128], index: 3, kind: input, shape index: {}]
  %s4 = inlined_call_operand.hbm [shape: bf16[128,128], index: 4, kind: input, shape index: {}]
  %s5 = inlined_call_operand.vmem [shape: f32[1,128], index: 5, kind: input, shape index: {}]
  %s6 = inlined_call_operand.vmem [shape: f32[1,128], index: 6, kind: input, shape index: {}]
  %s7 = inlined_call_operand.vmem [shape: f32[1,128], index: 7, kind: input, shape index: {}]
  %s8 = inlined_call_operand.vmem [shape: f32[1,128], index: 8, kind: input, shape index: {}]
  %s9 = inlined_call_operand.vmem [shape: f32[1,128], index: 9, kind: input, shape index: {}]
  %s10 = inlined_call_operand.vmem [shape: f32[1,128], index: 10, kind: input, shape index: {}]
  %s11 = inlined_call_operand.hbm [shape: bf16[2,24,16,128], index: 11, kind: output, shape index: {}]
  %s12 = sld [smem:[#allocation0]]
  $region121: #{tpu_custom_call.1} parent=0
    _
  %s14 = ssub.s32 1, %s12
  %s15 = scalar_select 0, %s14, %s12
  $region1: #{tpu_custom_call.1} parent=0
    #allocation7 [shape = 'u8[65536]{0}', space=vmem, size = 0x10000, scoped, tag = 'input window, operand 1']
    #allocation8 [shape = 's32[2]{0}', space=sflag, size = 0x8, scoped, tag = 'scoped memory for tpu_custom_call.1']
    #allocation9 [shape = 's32[2]{0}', space=sflag, size = 0x8, scoped, tag = 'scoped memory for tpu_custom_call.1']
    #allocation10 [shape = 'u8[32768]{0}', space=vmem, size = 0x8000, scoped, tag = 'input window, operand 2, single buffered']
    #allocation11 [shape = 's32[1]{0}', space=sflag, size = 0x4, scoped, tag = 'scoped memory for tpu_custom_call.1']
    #allocation12 [shape = 'u8[294912]{0}', space=vmem, size = 0x48000, scoped, tag = 'input window, operand 3, single buffered']
    #allocation13 [shape = 'u8[32768]{0}', space=vmem, size = 0x8000, scoped, tag = 'input window, operand 4, single buffered']
    #allocation14 [shape = 's32[1]{0}', space=sflag, size = 0x4, scoped, tag = 'scoped memory for tpu_custom_call.1']
    #allocation15 [shape = 'u8[65536]{0}', space=vmem, size = 0x10000, scoped, tag = 'output window, operand 0']
    %16 = vsyncpa [#allocation8], 0
    %s17 = scalar_lea.sflag [#allocation8], 1
    %18 = vsyncpa %s17, 0
    %19 = vsyncpa [#allocation11], 0
    %20 = vsyncpa [#allocation14], 0
    %21 = vsyncpa [#allocation9], 0
    %s22 = scalar_lea.sflag [#allocation9], 1
    %23 = vsyncpa %s22, 0
    loop: start=0, step=1, limit=8
    $region2: #{tpu_custom_call.1} parent=1 // loop_pre_header
      _
    $region3: #{tpu_custom_call.1} parent=1 // loop_header
      %s25 = sphi 0, %s29
      %p26 = scmp.ge.s32.totalorder %s25, 8
      %s32 = sphi 0, %s44
      %s33 = sphi 0, %s40
      %s34 = sphi 0, %s32
      %s35 = sphi 0, %s33
      %s36 = sphi 0, %s34
      %s37 = sphi 0, %s35
      %s49 = sphi 0, %s51
      %s52 = sphi 0, %s49
      %s53 = sphi 0, %s52
      %s69 = sphi 0, %s53
      %s73 = sphi 0, %s73
      %s75 = sphi 0, %s73
      %s76 = sphi 0, %s75
      %s90 = sphi 0, %s76
      %s94 = sphi 0, %s94
      %s96 = sphi 0, %s94
      %s97 = sphi 0, %s96
      %s111 = sphi 0, %s97
      %s115 = sphi 0, %s115
      %s117 = sphi 0, %s115
      %s118 = sphi 0, %s117
      %s132 = sphi 0, %s118
      %s136 = sphi 0, %s136
      %s138 = sphi 0, %s136
      %s139 = sphi 0, %s138
      %s153 = sphi 0, %s139
      %s157 = sphi 0, %s157
      %s159 = sphi 0, %s157
      %s160 = sphi 0, %s159
      %s174 = sphi 0, %s160
      %s178 = sphi 0, %s178
      %s180 = sphi 0, %s178
      %s181 = sphi 0, %s180
      %s195 = sphi 0, %s181
      %s199 = sphi 0, %s199
      %s201 = sphi 0, %s199
      %s202 = sphi 0, %s201
      %s216 = sphi 0, %s202
      %s220 = sphi 0, %s220
      %s222 = sphi 0, %s220
      %s223 = sphi 0, %s222
      %s237 = sphi 0, %s223
      %s241 = sphi 0, %s241
      %s243 = sphi 0, %s241
      %s244 = sphi 0, %s243
      %s258 = sphi 0, %s244
      %s266 = sphi 0, %s268
      %s269 = sphi 0, %s266
      %s270 = sphi 0, %s269
      %s286 = sphi 0, %s270
    $region4: #{tpu_custom_call.1} parent=1 // loop_header_branch
      %28 = sbr.rel (%p26) target = $region8
    $region5: #{tpu_custom_call.1} parent=1 // loop_body
      %s30 = ssub.s32 %s25, 1
      %s31 = ssub.s32 %s25, 2
      %s38 = sadd.s32 1, %s33
      %p39 = scmp.ge.s32.totalorder %s38, 3
      %s40 = scalar_select %p39, 0, %s38
      %s41 = sadd.s32 1, %s32
      %s42 = scalar_select %p39, %s41, %s32
      %p43 = scmp.ge.s32.totalorder %s42, 2
      %s44 = scalar_select %p43, 0, %s42
      %s45 = ssub.s32 %s32, %s44
      %s46 = ssub.s32 %s33, %s40
      %s47 = sor.u32 %s45, %s46
      %p48 = scmp.eq.s32.totalorder %s47, 0
      %s50 = sadd.s32 %s49, 1
      %s51 = scalar_select %p48, %s49, %s50
      %p54 = pneg %p48
      %p55 = scmp.eq.s32.totalorder %s25, 5
      %p56 = por %p54, %p55
      %p57 = scmp.ne.s32.totalorder %s49, %s52
      %p58 = scmp.eq.s32.totalorder %s25, 0
      %p59 = por %p57, %p58
      %p60 = scmp.ne.s32.totalorder %s49, %s52
      %p61 = scmp.eq.s32.totalorder %s30, 5
      %p62 = por %p60, %p61
      %p63 = scmp.ne.s32.totalorder %s52, %s53
      %p64 = scmp.eq.s32.totalorder %s30, 0
      %p65 = por %p63, %p64
      %p66 = scmp.ne.s32.totalorder %s52, %s53
      %p67 = scmp.eq.s32.totalorder %s31, 5
      %p68 = por %p66, %p67
      %p70 = scmp.ne.s32.totalorder %s53, %s69
      %p71 = scmp.eq.s32.totalorder %s31, 0
      %p72 = por %p70, %p71
      %s74 = sadd.s32 %s73, 1
      %p77 = scmp.eq.s32.totalorder %s25, 5
      %p78 = scmp.ne.s32.totalorder %s73, %s75
      %p79 = scmp.eq.s32.totalorder %s25, 0
      %p80 = por %p78, %p79
      %p81 = scmp.ne.s32.totalorder %s73, %s75
      %p82 = scmp.eq.s32.totalorder %s30, 5
      %p83 = por %p81, %p82
      %p84 = scmp.ne.s32.totalorder %s75, %s76
      %p85 = scmp.eq.s32.totalorder %s30, 0
      %p86 = por %p84, %p85
      %p87 = scmp.ne.s32.totalorder %s75, %s76
      %p88 = scmp.eq.s32.totalorder %s31, 5
      %p89 = por %p87, %p88
      %p91 = scmp.ne.s32.totalorder %s76, %s90
      %p92 = scmp.eq.s32.totalorder %s31, 0
      %p93 = por %p91, %p92
      %s95 = sadd.s32 %s94, 1
      %p98 = scmp.eq.s32.totalorder %s25, 5
      %p99 = scmp.ne.s32.totalorder %s94, %s96
      %p100 = scmp.eq.s32.totalorder %s25, 0
      %p101 = por %p99, %p100
      %p102 = scmp.ne.s32.totalorder %s94, %s96
      %p103 = scmp.eq.s32.totalorder %s30, 5
      %p104 = por %p102, %p103
      %p105 = scmp.ne.s32.totalorder %s96, %s97
      %p106 = scmp.eq.s32.totalorder %s30, 0
      %p107 = por %p105, %p106
      %p108 = scmp.ne.s32.totalorder %s96, %s97
      %p109 = scmp.eq.s32.totalorder %s31, 5
      %p110 = por %p108, %p109
      %p112 = scmp.ne.s32.totalorder %s97, %s111
      %p113 = scmp.eq.s32.totalorder %s31, 0
      %p114 = por %p112, %p113
      %s116 = sadd.s32 %s115, 1
      %p119 = scmp.eq.s32.totalorder %s25, 5
      %p120 = scmp.ne.s32.totalorder %s115, %s117
      %p121 = scmp.eq.s32.totalorder %s25, 0
      %p122 = por %p120, %p121
      %p123 = scmp.ne.s32.totalorder %s115, %s117
      %p124 = scmp.eq.s32.totalorder %s30, 5
      %p125 = por %p123, %p124
      %p126 = scmp.ne.s32.totalorder %s117, %s118
      %p127 = scmp.eq.s32.totalorder %s30, 0
      %p128 = por %p126, %p127
      %p129 = scmp.ne.s32.totalorder %s117, %s118
      %p130 = scmp.eq.s32.totalorder %s31, 5
      %p131 = por %p129, %p130
      %p133 = scmp.ne.s32.totalorder %s118, %s132
      %p134 = scmp.eq.s32.totalorder %s31, 0
      %p135 = por %p133, %p134
      %s137 = sadd.s32 %s136, 1
      %p140 = scmp.eq.s32.totalorder %s25, 5
      %p141 = scmp.ne.s32.totalorder %s136, %s138
      %p142 = scmp.eq.s32.totalorder %s25, 0
      %p143 = por %p141, %p142
      %p144 = scmp.ne.s32.totalorder %s136, %s138
      %p145 = scmp.eq.s32.totalorder %s30, 5
      %p146 = por %p144, %p145
      %p147 = scmp.ne.s32.totalorder %s138, %s139
      %p148 = scmp.eq.s32.totalorder %s30, 0
      %p149 = por %p147, %p148
      %p150 = scmp.ne.s32.totalorder %s138, %s139
      %p151 = scmp.eq.s32.totalorder %s31, 5
      %p152 = por %p150, %p151
      %p154 = scmp.ne.s32.totalorder %s139, %s153
      %p155 = scmp.eq.s32.totalorder %s31, 0
      %p156 = por %p154, %p155
      %s158 = sadd.s32 %s157, 1
      %p161 = scmp.eq.s32.totalorder %s25, 5
      %p162 = scmp.ne.s32.totalorder %s157, %s159
      %p163 = scmp.eq.s32.totalorder %s25, 0
      %p164 = por %p162, %p163
      %p165 = scmp.ne.s32.totalorder %s157, %s159
      %p166 = scmp.eq.s32.totalorder %s30, 5
      %p167 = por %p165, %p166
      %p168 = scmp.ne.s32.totalorder %s159, %s160
      %p169 = scmp.eq.s32.totalorder %s30, 0
      %p170 = por %p168, %p169
      %p171 = scmp.ne.s32.totalorder %s159, %s160
      %p172 = scmp.eq.s32.totalorder %s31, 5
      %p173 = por %p171, %p172
      %p175 = scmp.ne.s32.totalorder %s160, %s174
      %p176 = scmp.eq.s32.totalorder %s31, 0
      %p177 = por %p175, %p176
      %s179 = sadd.s32 %s178, 1
      %p182 = scmp.eq.s32.totalorder %s25, 5
      %p183 = scmp.ne.s32.totalorder %s178, %s180
      %p184 = scmp.eq.s32.totalorder %s25, 0
      %p185 = por %p183, %p184
      %p186 = scmp.ne.s32.totalorder %s178, %s180
      %p187 = scmp.eq.s32.totalorder %s30, 5
      %p188 = por %p186, %p187
      %p189 = scmp.ne.s32.totalorder %s180, %s181
      %p190 = scmp.eq.s32.totalorder %s30, 0
      %p191 = por %p189, %p190
      %p192 = scmp.ne.s32.totalorder %s180, %s181
      %p193 = scmp.eq.s32.totalorder %s31, 5
      %p194 = por %p192, %p193
      %p196 = scmp.ne.s32.totalorder %s181, %s195
      %p197 = scmp.eq.s32.totalorder %s31, 0
      %p198 = por %p196, %p197
      %s200 = sadd.s32 %s199, 1
      %p203 = scmp.eq.s32.totalorder %s25, 5
      %p204 = scmp.ne.s32.totalorder %s199, %s201
      %p205 = scmp.eq.s32.totalorder %s25, 0
      %p206 = por %p204, %p205
      %p207 = scmp.ne.s32.totalorder %s199, %s201
      %p208 = scmp.eq.s32.totalorder %s30, 5
      %p209 = por %p207, %p208
      %p210 = scmp.ne.s32.totalorder %s201, %s202
      %p211 = scmp.eq.s32.totalorder %s30, 0
      %p212 = por %p210, %p211
      %p213 = scmp.ne.s32.totalorder %s201, %s202
      %p214 = scmp.eq.s32.totalorder %s31, 5
      %p215 = por %p213, %p214
      %p217 = scmp.ne.s32.totalorder %s202, %s216
      %p218 = scmp.eq.s32.totalorder %s31, 0
      %p219 = por %p217, %p218
      %s221 = sadd.s32 %s220, 1
      %p224 = scmp.eq.s32.totalorder %s25, 5
      %p225 = scmp.ne.s32.totalorder %s220, %s222
      %p226 = scmp.eq.s32.totalorder %s25, 0
      %p227 = por %p225, %p226
      %p228 = scmp.ne.s32.totalorder %s220, %s222
      %p229 = scmp.eq.s32.totalorder %s30, 5
      %p230 = por %p228, %p229
      %p231 = scmp.ne.s32.totalorder %s222, %s223
      %p232 = scmp.eq.s32.totalorder %s30, 0
      %p233 = por %p231, %p232
      %p234 = scmp.ne.s32.totalorder %s222, %s223
      %p235 = scmp.eq.s32.totalorder %s31, 5
      %p236 = por %p234, %p235
      %p238 = scmp.ne.s32.totalorder %s223, %s237
      %p239 = scmp.eq.s32.totalorder %s31, 0
      %p240 = por %p238, %p239
      %s242 = sadd.s32 %s241, 1
      %p245 = scmp.eq.s32.totalorder %s25, 5
      %p246 = scmp.ne.s32.totalorder %s241, %s243
      %p247 = scmp.eq.s32.totalorder %s25, 0
      %p248 = por %p246, %p247
      %p249 = scmp.ne.s32.totalorder %s241, %s243
      %p250 = scmp.eq.s32.totalorder %s30, 5
      %p251 = por %p249, %p250
      %p252 = scmp.ne.s32.totalorder %s243, %s244
      %p253 = scmp.eq.s32.totalorder %s30, 0
      %p254 = por %p252, %p253
      %p255 = scmp.ne.s32.totalorder %s243, %s244
      %p256 = scmp.eq.s32.totalorder %s31, 5
      %p257 = por %p255, %p256
      %p259 = scmp.ne.s32.totalorder %s244, %s258
      %p260 = scmp.eq.s32.totalorder %s31, 0
      %p261 = por %p259, %p260
      %s262 = ssub.s32 %s32, %s44
      %s263 = ssub.s32 %s33, %s40
      %s264 = sor.u32 %s262, %s263
      %p265 = scmp.eq.s32.totalorder %s264, 0
      %s267 = sadd.s32 %s266, 1
      %s268 = scalar_select %p265, %s266, %s267
      %p271 = pneg %p265
      %p272 = scmp.eq.s32.totalorder %s25, 5
      %p273 = por %p271, %p272
      %p274 = scmp.ne.s32.totalorder %s266, %s269
      %p275 = scmp.eq.s32.totalorder %s25, 0
      %p276 = por %p274, %p275
      %p277 = scmp.ne.s32.totalorder %s266, %s269
      %p278 = scmp.eq.s32.totalorder %s30, 5
      %p279 = por %p277, %p278
      %p280 = scmp.ne.s32.totalorder %s269, %s270
      %p281 = scmp.eq.s32.totalorder %s30, 0
      %p282 = por %p280, %p281
      %p283 = scmp.ne.s32.totalorder %s269, %s270
      %p284 = scmp.eq.s32.totalorder %s31, 5
      %p285 = por %p283, %p284
      %p287 = scmp.ne.s32.totalorder %s270, %s286
      %p288 = scmp.eq.s32.totalorder %s31, 0
      %p289 = por %p287, %p288
      %p290 = scmp.le.s32.totalorder 1, %s25
      %p291 = scmp.lt.s32.totalorder %s25, 7
      %p292 = pnand %p290, %p291
      %p293 = pneg %p292
      // Predicated region
      $region9: #{tpu_custom_call.1} parent=5 // pred_check
        _
      $region10: #{tpu_custom_call.1} parent=5 // pred_check_branch
        %295 = sbr.rel (%p292) target = $region12
      $region11: #{tpu_custom_call.1} parent=5 // pred_region
        %s296 = ssub.s32 %s25, 1
        // Predicated region
        $region13: #{tpu_custom_call.1} parent=11 // pred_check
          %p297 = pneg %p86
        $region14: #{tpu_custom_call.1} parent=11 // pred_check_branch
          %299 = sbr.rel (%p297) target = $region16
        $region15: #{tpu_custom_call.1} parent=11 // pred_region
          %301 = vsyncadd [#allocation11], 0
          %s302 = sshll.u32 %s2, 4
          %s303 = int_to_ptr.hbm [resolvable:$true] %s302
          %s304 = sshll.u32 [#allocation10], 4
          %s305 = int_to_ptr.vmem [resolvable:$true] %s304
          %310 = dma.hbm_to_vmem [thread:$0]  %s303, 1024, %s305, [#allocation11], 64, 64, 4
        $region16: #{tpu_custom_call.1} parent=11 // pred_fallthru
          _
        // Predicated region
        $region17: #{tpu_custom_call.1} parent=11 // pred_check
          %p311 = pneg %p107
        $region18: #{tpu_custom_call.1} parent=11 // pred_check_branch
          %313 = sbr.rel (%p311) target = $region20
        $region19: #{tpu_custom_call.1} parent=11 // pred_region
          %315 = vsyncadd [#allocation11], 0
          %s316 = sshll.u32 %s3, 4
          %s317 = int_to_ptr.hbm [resolvable:$true] %s316
          %s318 = sshll.u32 [#allocation12], 4
          %s319 = int_to_ptr.vmem [resolvable:$true] %s318
          %324 = dma.hbm_to_vmem [thread:$0]  %s317, 9216, %s319, [#allocation11], 64, 64, 4
        $region20: #{tpu_custom_call.1} parent=11 // pred_fallthru
          _
        // Predicated region
        $region21: #{tpu_custom_call.1} parent=11 // pred_check
          %p325 = pneg %p128
        $region22: #{tpu_custom_call.1} parent=11 // pred_check_branch
          %327 = sbr.rel (%p325) target = $region24
        $region23: #{tpu_custom_call.1} parent=11 // pred_region
          %329 = vsyncadd [#allocation14], 0
          %s330 = sshll.u32 %s4, 4
          %s331 = int_to_ptr.hbm [resolvable:$true] %s330
          %s332 = sshll.u32 [#allocation13], 4
          %s333 = int_to_ptr.vmem [resolvable:$true] %s332
          %338 = dma.hbm_to_vmem [thread:$0]  %s331, 1024, %s333, [#allocation14], 64, 64, 4
        $region24: #{tpu_custom_call.1} parent=11 // pred_fallthru
          _
        // Predicated region
        $region25: #{tpu_custom_call.1} parent=11 // pred_check
          %p339 = pneg %p149
        $region26: #{tpu_custom_call.1} parent=11 // pred_check_branch
          %341 = sbr.rel (%p339) target = $region28
        $region27: #{tpu_custom_call.1} parent=11 // pred_region
          _
        $region28: #{tpu_custom_call.1} parent=11 // pred_fallthru
          _
        // Predicated region
        $region29: #{tpu_custom_call.1} parent=11 // pred_check
          %p342 = pneg %p170
        $region30: #{tpu_custom_call.1} parent=11 // pred_check_branch
          %344 = sbr.rel (%p342) target = $region32
        $region31: #{tpu_custom_call.1} parent=11 // pred_region
          _
        $region32: #{tpu_custom_call.1} parent=11 // pred_fallthru
          _
        // Predicated region
        $region33: #{tpu_custom_call.1} parent=11 // pred_check
          %p345 = pneg %p191
        $region34: #{tpu_custom_call.1} parent=11 // pred_check_branch
          %347 = sbr.rel (%p345) target = $region36
        $region35: #{tpu_custom_call.1} parent=11 // pred_region
          _
        $region36: #{tpu_custom_call.1} parent=11 // pred_fallthru
          _
        // Predicated region
        $region37: #{tpu_custom_call.1} parent=11 // pred_check
          %p348 = pneg %p212
        $region38: #{tpu_custom_call.1} parent=11 // pred_check_branch
          %350 = sbr.rel (%p348) target = $region40
        $region39: #{tpu_custom_call.1} parent=11 // pred_region
          _
        $region40: #{tpu_custom_call.1} parent=11 // pred_fallthru
          _
        // Predicated region
        $region41: #{tpu_custom_call.1} parent=11 // pred_check
          %p351 = pneg %p233
        $region42: #{tpu_custom_call.1} parent=11 // pred_check_branch
          %353 = sbr.rel (%p351) target = $region44
        $region43: #{tpu_custom_call.1} parent=11 // pred_region
          _
        $region44: #{tpu_custom_call.1} parent=11 // pred_fallthru
          _
        // Predicated region
        $region45: #{tpu_custom_call.1} parent=11 // pred_check
          %p354 = pneg %p254
        $region46: #{tpu_custom_call.1} parent=11 // pred_check_branch
          %356 = sbr.rel (%p354) target = $region48
        $region47: #{tpu_custom_call.1} parent=11 // pred_region
          _
        $region48: #{tpu_custom_call.1} parent=11 // pred_fallthru
          _
      $region12: #{tpu_custom_call.1} parent=5 // pred_fallthru
        _
      %p357 = scmp.lt.s32.totalorder %s25, 6
      // Predicated region
      $region49: #{tpu_custom_call.1} parent=5 // pred_check
        %p358 = pneg %p357
      $region50: #{tpu_custom_call.1} parent=5 // pred_check_branch
        %360 = sbr.rel (%p358) target = $region52
      $region51: #{tpu_custom_call.1} parent=5 // pred_region
        // Predicated region
        $region53: #{tpu_custom_call.1} parent=51 // pred_check
          %p361 = pneg %p59
        $region54: #{tpu_custom_call.1} parent=51 // pred_check_branch
          %363 = sbr.rel (%p361) target = $region56
        $region55: #{tpu_custom_call.1} parent=51 // pred_region
          %s364 = sand.u32 %s49, 1
          %s365 = scalar_lea.sflag [#allocation8], %s364
          %s366 = sand.u32 %s49, 1
          %s367 = smul.addr %s366, 64
          %s368 = scalar_lea.vmem [#allocation7], %s367
          %s369 = smul.u32 8, %s33
          %371 = vsyncadd %s365, 0
          %s372 = smul.addr %s369, 2
          %s373 = smul.addr %s32, 48
          %s374 = sadd.s32 %s372, %s373
          %s375 = smul.addr %s374, 4
          %s376 = scalar_lea.hbm %s1, %s375
          %s377 = sshll.u32 %s376, 4
          %s378 = int_to_ptr.hbm [resolvable:$true] %s377
          %s379 = sshll.u32 %s368, 4
          %s380 = int_to_ptr.vmem [resolvable:$true] %s379
          %385 = dma.hbm_to_vmem [thread:$0]  %s378, 1024, %s380, %s365, 64, 64, 4
        $region56: #{tpu_custom_call.1} parent=51 // pred_fallthru
          _
      $region52: #{tpu_custom_call.1} parent=5 // pred_fallthru
        _
      %p386 = scmp.le.s32.totalorder 1, %s25
      %p387 = scmp.lt.s32.totalorder %s25, 7
      %p388 = pnand %p386, %p387
      %p389 = pneg %p388
      // Predicated region
      $region57: #{tpu_custom_call.1} parent=5 // pred_check
        _
      $region58: #{tpu_custom_call.1} parent=5 // pred_check_branch
        %391 = sbr.rel (%p388) target = $region60
      $region59: #{tpu_custom_call.1} parent=5 // pred_region
        %s392 = ssub.s32 %s25, 1
        %s393 = sand.u32 %s52, 1
        %s394 = scalar_lea.sflag [#allocation8], %s393
        %s395 = sand.u32 %s52, 1
        %s396 = smul.addr %s395, 64
        %s397 = scalar_lea.vmem [#allocation7], %s396
        // Predicated region
        $region61: #{tpu_custom_call.1} parent=59 // pred_check
          %p398 = pneg %p65
        $region62: #{tpu_custom_call.1} parent=59 // pred_check_branch
          %400 = sbr.rel (%p398) target = $region64
        $region63: #{tpu_custom_call.1} parent=59 // pred_region
          %402 = dma.done %s394, 1024
        $region64: #{tpu_custom_call.1} parent=59 // pred_fallthru
          _
        // Predicated region
        $region65: #{tpu_custom_call.1} parent=59 // pred_check
          %p403 = pneg %p86
        $region66: #{tpu_custom_call.1} parent=59 // pred_check_branch
          %405 = sbr.rel (%p403) target = $region68
        $region67: #{tpu_custom_call.1} parent=59 // pred_region
          %407 = dma.done [#allocation11], 1024
        $region68: #{tpu_custom_call.1} parent=59 // pred_fallthru
          _
        // Predicated region
        $region69: #{tpu_custom_call.1} parent=59 // pred_check
          %p408 = pneg %p107
        $region70: #{tpu_custom_call.1} parent=59 // pred_check_branch
          %410 = sbr.rel (%p408) target = $region72
        $region71: #{tpu_custom_call.1} parent=59 // pred_region
          %412 = dma.done [#allocation11], 9216
        $region72: #{tpu_custom_call.1} parent=59 // pred_fallthru
          _
        // Predicated region
        $region73: #{tpu_custom_call.1} parent=59 // pred_check
          %p413 = pneg %p128
        $region74: #{tpu_custom_call.1} parent=59 // pred_check_branch
          %415 = sbr.rel (%p413) target = $region76
        $region75: #{tpu_custom_call.1} parent=59 // pred_region
          %417 = dma.done [#allocation14], 1024
        $region76: #{tpu_custom_call.1} parent=59 // pred_fallthru
          _
        %s418 = sand.u32 %s52, 1
        %s419 = scalar_lea.sflag [#allocation8], %s418
        %s420 = sand.u32 %s52, 1
        %s421 = smul.addr %s420, 64
        %s422 = scalar_lea.vmem [#allocation7], %s421
        %p423 = pneg %p65
        %p424 = pneg %p62
        %p425 = pneg %p86
        %p426 = pneg %p83
        %p427 = pneg %p107
        %p428 = pneg %p104
        %p429 = pneg %p128
        %p430 = pneg %p125
        %p431 = pneg %p149
        %p432 = pneg %p146
        %p433 = pneg %p170
        %p434 = pneg %p167
        %p435 = pneg %p191
        %p436 = pneg %p188
        %p437 = pneg %p212
        %p438 = pneg %p209
        %p439 = pneg %p233
        %p440 = pneg %p230
        %p441 = pneg %p254
        %p442 = pneg %p251
        %p443 = pneg %p282
        %p444 = pneg %p279
        %s445 = sand.u32 %s269, 1
        %s446 = scalar_lea.sflag [#allocation9], %s445
        %s447 = sand.u32 %s269, 1
        %s448 = smul.addr %s447, 64
        %s449 = scalar_lea.vmem [#allocation15], %s448
        %s450 = smul.u32 8, %s35
        %s451 = smul.u32 8, %s35
        %s455 = sand.u32 %s35, 1
        %s456 = ssub.s32 1, %s455
        %p457 = scmp.eq.s32.totalorder %s35, 0
        // Predicated region
        $region77: #{tpu_custom_call.1} parent=59 // pred_check
          %p458 = pneg %p457
        $region78: #{tpu_custom_call.1} parent=59 // pred_check_branch
          %460 = sbr.rel (%p458) target = $region80
        $region79: #{tpu_custom_call.1} parent=59 // pred_region
          %s461 = smul.u32 %s34, 48
          %s462 = sadd.s32 16, %s461
          %s463 = smul.addr %s462, 4
          %s464 = scalar_lea.hbm %s0, %s463
          %s465 = smul.u32 %s455, 2
          %s466 = smul.addr %s465, 4
          %s467 = scalar_lea.vmem [#allocation2], %s466
          %s468 = scalar_lea.sflag [#allocation3], %s455
          // Predicated region
          $region81: #{tpu_custom_call.1} parent=79 // pred_check
            _
          $region82: #{tpu_custom_call.1} parent=79 // pred_check_branch
            %470 = sbr.rel target = $region84
          $region83: #{tpu_custom_call.1} parent=79 // pred_region
            %471 = sst [smem:[#allocation18]] [#allocation17]
            %472 = sst [smem:[#allocation19]] [#allocation16]
          $region84: #{tpu_custom_call.1} parent=79 // pred_fallthru
            _
          %474 = shalt.err (0)
          %s476 = sshll.u32 %s464, 4
          %s477 = int_to_ptr.hbm [resolvable:$true] %s476
          %s478 = sshll.u32 %s467, 4
          %s479 = int_to_ptr.vmem [resolvable:$true] %s478
          %481 = dma.hbm_to_vmem [thread:$0]  %s477, 128, %s479, %s468
        $region80: #{tpu_custom_call.1} parent=59 // pred_fallthru
          _
        %p482 = scmp.lt.s32.totalorder %s35, 1
        // Predicated region
        $region85: #{tpu_custom_call.1} parent=59 // pred_check
          %p483 = pneg %p482
        $region86: #{tpu_custom_call.1} parent=59 // pred_check_branch
          %485 = sbr.rel (%p483) target = $region88
        $region87: #{tpu_custom_call.1} parent=59 // pred_region
          %s486 = sadd.s32 %s35, 2
          %s487 = smul.u32 %s486, 8
          %s488 = smul.u32 %s487, 2
          %s489 = smul.u32 %s34, 48
          %s490 = sadd.s32 %s488, %s489
          %s491 = smul.addr %s490, 4
          %s492 = scalar_lea.hbm %s0, %s491
          %s493 = smul.u32 %s456, 2
          %s494 = smul.addr %s493, 4
          %s495 = scalar_lea.vmem [#allocation2], %s494
          %s496 = scalar_lea.sflag [#allocation3], %s456
          // Predicated region
          $region89: #{tpu_custom_call.1} parent=87 // pred_check
            _
          $region90: #{tpu_custom_call.1} parent=87 // pred_check_branch
            %498 = sbr.rel target = $region92
          $region91: #{tpu_custom_call.1} parent=87 // pred_region
            %499 = sst [smem:[#allocation18]] [#allocation21]
            %500 = sst [smem:[#allocation19]] [#allocation20]
          $region92: #{tpu_custom_call.1} parent=87 // pred_fallthru
            _
          %502 = shalt.err (0)
          %s504 = sshll.u32 %s492, 4
          %s505 = int_to_ptr.hbm [resolvable:$true] %s504
          %s506 = sshll.u32 %s495, 4
          %s507 = int_to_ptr.vmem [resolvable:$true] %s506
          %509 = dma.hbm_to_vmem [thread:$0]  %s505, 128, %s507, %s496
        $region88: #{tpu_custom_call.1} parent=59 // pred_fallthru
          _
        %510 = vst [vmem:[#allocation5] sm:$0xf] 0
        %511 = vst [vmem:[#allocation5 + $0x54] sm:$0xf] 0
        %p512 = scmp.gt.s32.totalorder %s35, 0
        // Predicated region
        $region93: #{tpu_custom_call.1} parent=59 // pred_check
          %p513 = pneg %p512
        $region94: #{tpu_custom_call.1} parent=59 // pred_check_branch
          %515 = sbr.rel (%p513) target = $region96
        $region95: #{tpu_custom_call.1} parent=59 // pred_region
          %v516 = vld [vmem:[#allocation4] sm:$0xf]
          %v517 = vld [vmem:[#allocation4 + $0x4] sm:$0xf]
          %518 = vst [vmem:[#allocation5 + $0x4] sm:$0xf] %v516
          %519 = vst [vmem:[#allocation5 + $0x8] sm:$0xf] %v517
        $region96: #{tpu_custom_call.1} parent=59 // pred_fallthru
          _
        // Predicated region
        $region97: #{tpu_custom_call.1} parent=59 // pred_check
          %p520 = pneg %p457
        $region98: #{tpu_custom_call.1} parent=59 // pred_check_branch
          %522 = sbr.rel (%p520) target = $region100
        $region99: #{tpu_custom_call.1} parent=59 // pred_region
          %523 = vst [vmem:[#allocation5 + $0x4] sm:$0xf] 0
          %524 = vst [vmem:[#allocation5 + $0x8] sm:$0xf] 0
        $region100: #{tpu_custom_call.1} parent=59 // pred_fallthru
          _
        %v525 = vld [vmem:[%s397] sm:$0xf]
        %v526 = vld [vmem:[%s397 + $0x4] sm:$0xf]
        %v527 = vld [vmem:[%s397 + $0x8] sm:$0xf]
        %v528 = vld [vmem:[%s397 + $0xc] sm:$0xf]
        %v529 = vld [vmem:[%s397 + $0x10] sm:$0xf]
        %v530 = vld [vmem:[%s397 + $0x14] sm:$0xf]
        %v531 = vld [vmem:[%s397 + $0x18] sm:$0xf]
        %v532 = vld [vmem:[%s397 + $0x1c] sm:$0xf]
        %v533 = vld [vmem:[%s397 + $0x20] sm:$0xf]
        %v534 = vld [vmem:[%s397 + $0x24] sm:$0xf]
        %v535 = vld [vmem:[%s397 + $0x28] sm:$0xf]
        %v536 = vld [vmem:[%s397 + $0x2c] sm:$0xf]
        %v537 = vld [vmem:[%s397 + $0x30] sm:$0xf]
        %v538 = vld [vmem:[%s397 + $0x34] sm:$0xf]
        %v539 = vld [vmem:[%s397 + $0x38] sm:$0xf]
        %v540 = vld [vmem:[%s397 + $0x3c] sm:$0xf]
        %v541 = vld [vmem:[#allocation10] sm:$0xf]
        %v542 = vld [vmem:[#allocation10 + $0x4] sm:$0xf]
        %v543 = vld [vmem:[#allocation10 + $0x8] sm:$0xf]
        %v544 = vld [vmem:[#allocation10 + $0xc] sm:$0xf]
        %v545 = vld [vmem:[#allocation10 + $0x10] sm:$0xf]
        %v546 = vld [vmem:[#allocation10 + $0x14] sm:$0xf]
        %v547 = vld [vmem:[#allocation10 + $0x18] sm:$0xf]
        %v548 = vld [vmem:[#allocation10 + $0x1c] sm:$0xf]
        %v549 = vld [vmem:[#allocation10 + $0x20] sm:$0xf]
        %v550 = vld [vmem:[#allocation10 + $0x24] sm:$0xf]
        %v551 = vld [vmem:[#allocation10 + $0x28] sm:$0xf]
        %v552 = vld [vmem:[#allocation10 + $0x2c] sm:$0xf]
        %v553 = vld [vmem:[#allocation10 + $0x30] sm:$0xf]
        %v554 = vld [vmem:[#allocation10 + $0x34] sm:$0xf]
        %v555 = vld [vmem:[#allocation10 + $0x38] sm:$0xf]
        %v556 = vld [vmem:[#allocation10 + $0x3c] sm:$0xf]
        %v573 = vunpack.c.l.b16 %v525
        %v574 = vunpack.c.l.b16 %v526
        %v575 = vunpack.c.l.b16 %v527
        %v576 = vunpack.c.l.b16 %v528
        %v577 = vunpack.c.l.b16 %v529
        %v578 = vunpack.c.l.b16 %v530
        %v579 = vunpack.c.l.b16 %v531
        %v580 = vunpack.c.l.b16 %v532
        %v581 = vunpack.c.l.b16 %v533
        %v582 = vunpack.c.l.b16 %v534
        %v583 = vunpack.c.l.b16 %v535
        %v584 = vunpack.c.l.b16 %v536
        %v585 = vunpack.c.l.b16 %v537
        %v586 = vunpack.c.l.b16 %v538
        %v587 = vunpack.c.l.b16 %v539
        %v588 = vunpack.c.l.b16 %v540
        %v589 = vpack.c.b16 %v574, %v573
        %v590 = vpack.c.b16 %v576, %v575
        %v591 = vpack.c.b16 %v578, %v577
        %v592 = vpack.c.b16 %v580, %v579
        %v593 = vpack.c.b16 %v582, %v581
        %v594 = vpack.c.b16 %v584, %v583
        %v595 = vpack.c.b16 %v586, %v585
        %v596 = vpack.c.b16 %v588, %v587
        %v621 = vunpack.c.l.b16 %v541
        %v622 = vunpack.c.l.b16 %v542
        %v623 = vunpack.c.l.b16 %v543
        %v624 = vunpack.c.l.b16 %v544
        %v625 = vunpack.c.l.b16 %v545
        %v626 = vunpack.c.l.b16 %v546
        %v627 = vunpack.c.l.b16 %v547
        %v628 = vunpack.c.l.b16 %v548
        %v629 = vunpack.c.l.b16 %v549
        %v630 = vunpack.c.l.b16 %v550
        %v631 = vunpack.c.l.b16 %v551
        %v632 = vunpack.c.l.b16 %v552
        %v633 = vunpack.c.l.b16 %v553
        %v634 = vunpack.c.l.b16 %v554
        %v635 = vunpack.c.l.b16 %v555
        %v636 = vunpack.c.l.b16 %v556
        %v637 = vpack.c.b16 %v622, %v621
        %v638 = vpack.c.b16 %v624, %v623
        %v639 = vpack.c.b16 %v626, %v625
        %v640 = vpack.c.b16 %v628, %v627
        %v641 = vpack.c.b16 %v630, %v629
        %v642 = vpack.c.b16 %v632, %v631
        %v643 = vpack.c.b16 %v634, %v633
        %v644 = vpack.c.b16 %v636, %v635
        %653 = vmatpush.bf16.msra.mxu0 %v644
        %654 = vmatpush.bf16.msra.mxu0 %v643
        %655 = vmatpush.bf16.msra.mxu0 %v642
        %656 = vmatpush.bf16.msra.mxu0 %v641
        %657 = vmatpush.bf16.msra.mxu0 %v640
        %658 = vmatpush.bf16.msra.mxu0 %v639
        %659 = vmatpush.bf16.msra.mxu0 %v638
        %660 = vmatpush.bf16.msra.mxu0 %v637
        %661 = vmatmul.bf16.gmra.mxu0 %v589
        %v662 = vpop.f32.mrf.mxu0
        %v663 = vadd.f32 0.0, %v662
        %v664 = vpop.f32.mrf.mxu0
        %v665 = vadd.f32 0.0, %v664
        %666 = vmatmul.bf16.gmra.mxu0 %v590
        %v667 = vpop.f32.mrf.mxu0
        %v668 = vadd.f32 0.0, %v667
        %v669 = vpop.f32.mrf.mxu0
        %v670 = vadd.f32 0.0, %v669
        %671 = vmatmul.bf16.gmra.mxu0 %v591
        %v672 = vpop.f32.mrf.mxu0
        %v673 = vadd.f32 0.0, %v672
        %v674 = vpop.f32.mrf.mxu0
        %v675 = vadd.f32 0.0, %v674
        %676 = vmatmul.bf16.gmra.mxu0 %v592
        %v677 = vpop.f32.mrf.mxu0
        %v678 = vadd.f32 0.0, %v677
        %v679 = vpop.f32.mrf.mxu0
        %v680 = vadd.f32 0.0, %v679
        %681 = vmatmul.bf16.gmra.mxu0 %v593
        %v682 = vpop.f32.mrf.mxu0
        %v683 = vadd.f32 0.0, %v682
        %v684 = vpop.f32.mrf.mxu0
        %v685 = vadd.f32 0.0, %v684
        %686 = vmatmul.bf16.gmra.mxu0 %v594
        %v687 = vpop.f32.mrf.mxu0
        %v688 = vadd.f32 0.0, %v687
        %v689 = vpop.f32.mrf.mxu0
        %v690 = vadd.f32 0.0, %v689
        %691 = vmatmul.bf16.gmra.mxu0 %v595
        %v692 = vpop.f32.mrf.mxu0
        %v693 = vadd.f32 0.0, %v692
        %v694 = vpop.f32.mrf.mxu0
        %v695 = vadd.f32 0.0, %v694
        %696 = vmatmul.bf16.gmra.mxu0 %v596
        %v697 = vpop.f32.mrf.mxu0
        %v698 = vadd.f32 0.0, %v697
        %v699 = vpop.f32.mrf.mxu0
        %v700 = vadd.f32 0.0, %v699
        %701 = vdwg.mxu0
        %v702 = vld [vmem:[%s5] sm:$0x1]
        %v704 = vperm.slane %v702, 0
        %v706 = vmul.f32 %v663, %v704
        %v707 = vmul.f32 %v665, %v704
        %v708 = vmul.f32 %v668, %v704
        %v709 = vmul.f32 %v670, %v704
        %v710 = vmul.f32 %v673, %v704
        %v711 = vmul.f32 %v675, %v704
        %v712 = vmul.f32 %v678, %v704
        %v713 = vmul.f32 %v680, %v704
        %v714 = vmul.f32 %v683, %v704
        %v715 = vmul.f32 %v685, %v704
        %v716 = vmul.f32 %v688, %v704
        %v717 = vmul.f32 %v690, %v704
        %v718 = vmul.f32 %v693, %v704
        %v719 = vmul.f32 %v695, %v704
        %v720 = vmul.f32 %v698, %v704
        %v721 = vmul.f32 %v700, %v704
        %v722 = vld [vmem:[%s6] sm:$0x1]
        %v724 = vperm.slane %v722, 0
        %v726 = vadd.f32 %v706, %v724
        %v727 = vadd.f32 %v707, %v724
        %v728 = vadd.f32 %v708, %v724
        %v729 = vadd.f32 %v709, %v724
        %v730 = vadd.f32 %v710, %v724
        %v731 = vadd.f32 %v711, %v724
        %v732 = vadd.f32 %v712, %v724
        %v733 = vadd.f32 %v713, %v724
        %v734 = vadd.f32 %v714, %v724
        %v735 = vadd.f32 %v715, %v724
        %v736 = vadd.f32 %v716, %v724
        %v737 = vadd.f32 %v717, %v724
        %v738 = vadd.f32 %v718, %v724
        %v739 = vadd.f32 %v719, %v724
        %v740 = vadd.f32 %v720, %v724
        %v741 = vadd.f32 %v721, %v724
        %v742 = vmax.f32 %v726, 0.0
        %v743 = vmax.f32 %v727, 0.0
        %v744 = vmax.f32 %v728, 0.0
        %v745 = vmax.f32 %v729, 0.0
        %v746 = vmax.f32 %v730, 0.0
        %v747 = vmax.f32 %v731, 0.0
        %v748 = vmax.f32 %v732, 0.0
        %v749 = vmax.f32 %v733, 0.0
        %v750 = vmax.f32 %v734, 0.0
        %v751 = vmax.f32 %v735, 0.0
        %v752 = vmax.f32 %v736, 0.0
        %v753 = vmax.f32 %v737, 0.0
        %v754 = vmax.f32 %v738, 0.0
        %v755 = vmax.f32 %v739, 0.0
        %v756 = vmax.f32 %v740, 0.0
        %v757 = vmax.f32 %v741, 0.0
        %v758 = vpack.c.bf16 %v742, %v742
        %v759 = vpack.c.bf16 %v743, %v743
        %v760 = vpack.c.bf16 %v744, %v744
        %v761 = vpack.c.bf16 %v745, %v745
        %v762 = vpack.c.bf16 %v746, %v746
        %v763 = vpack.c.bf16 %v747, %v747
        %v764 = vpack.c.bf16 %v748, %v748
        %v765 = vpack.c.bf16 %v749, %v749
        %v766 = vpack.c.bf16 %v750, %v750
        %v767 = vpack.c.bf16 %v751, %v751
        %v768 = vpack.c.bf16 %v752, %v752
        %v769 = vpack.c.bf16 %v753, %v753
        %v770 = vpack.c.bf16 %v754, %v754
        %v771 = vpack.c.bf16 %v755, %v755
        %v772 = vpack.c.bf16 %v756, %v756
        %v773 = vpack.c.bf16 %v757, %v757
        %774 = vst [vmem:[#allocation5 + $0xc] sm:$0xf] %v758
        %775 = vst [vmem:[#allocation5 + $0x10] sm:$0xf] %v759
        %776 = vst [vmem:[#allocation5 + $0x14] sm:$0xf] %v760
        %777 = vst [vmem:[#allocation5 + $0x18] sm:$0xf] %v761
        %778 = vst [vmem:[#allocation5 + $0x1c] sm:$0xf] %v762
        %779 = vst [vmem:[#allocation5 + $0x20] sm:$0xf] %v763
        %780 = vst [vmem:[#allocation5 + $0x24] sm:$0xf] %v764
        %781 = vst [vmem:[#allocation5 + $0x28] sm:$0xf] %v765
        %782 = vst [vmem:[#allocation5 + $0x2c] sm:$0xf] %v766
        %783 = vst [vmem:[#allocation5 + $0x30] sm:$0xf] %v767
        %784 = vst [vmem:[#allocation5 + $0x34] sm:$0xf] %v768
        %785 = vst [vmem:[#allocation5 + $0x38] sm:$0xf] %v769
        %786 = vst [vmem:[#allocation5 + $0x3c] sm:$0xf] %v770
        %787 = vst [vmem:[#allocation5 + $0x40] sm:$0xf] %v771
        %788 = vst [vmem:[#allocation5 + $0x44] sm:$0xf] %v772
        %789 = vst [vmem:[#allocation5 + $0x48] sm:$0xf] %v773
        %790 = vst [vmem:[#allocation4] sm:$0xf] %v772
        %791 = vst [vmem:[#allocation4 + $0x4] sm:$0xf] %v773
        %v792 = vlaneseq
        %v793 = vshrl.u32 %v792, 7
        %v794 = vadd.s32 %v793, 8
        %v795 = vadd.s32 %v793, 16
        %v796 = vadd.s32 %v793, 24
        %v797 = vadd.s32 %v793, 32
        %v798 = vadd.s32 %v793, 40
        %v799 = vadd.s32 %v793, 48
        %v800 = vadd.s32 %v793, 56
        %v801 = vadd.s32 %v793, 64
        %v802 = vadd.s32 %v793, 72
        %v803 = vadd.s32 %v793, 80
        %v804 = vadd.s32 %v793, 88
        %v805 = vadd.s32 %v793, 96
        %v806 = vadd.s32 %v793, 104
        %v807 = vadd.s32 %v793, 112
        %v808 = vadd.s32 %v793, 120
        %vm809 = vcmp.lt.s32.totalorder %v793, 0
        %v810 = vsub.s32 0, %v793
        %v811 = vsel %vm809, %v810, %v793
        %v812 = vshrl.u32 %v811, 4
        %v813 = vand.u32 %v811, 15
        %v814 = vsub.s32 0, %v813
        %v815 = vsel %vm809, %v814, %v813
        %vm816 = vcmp.lt.s32.totalorder %v794, 0
        %v817 = vsub.s32 0, %v794
        %v818 = vsel %vm816, %v817, %v794
        %v819 = vshrl.u32 %v818, 4
        %v820 = vand.u32 %v818, 15
        %v821 = vsub.s32 0, %v820
        %v822 = vsel %vm816, %v821, %v820
        %vm823 = vcmp.lt.s32.totalorder %v795, 0
        %v824 = vsub.s32 0, %v795
        %v825 = vsel %vm823, %v824, %v795
        %v826 = vshrl.u32 %v825, 4
        %v827 = vand.u32 %v825, 15
        %v828 = vsub.s32 0, %v827
        %v829 = vsel %vm823, %v828, %v827
        %vm830 = vcmp.lt.s32.totalorder %v796, 0
        %v831 = vsub.s32 0, %v796
        %v832 = vsel %vm830, %v831, %v796
        %v833 = vshrl.u32 %v832, 4
        %v834 = vand.u32 %v832, 15
        %v835 = vsub.s32 0, %v834
        %v836 = vsel %vm830, %v835, %v834
        %vm837 = vcmp.lt.s32.totalorder %v797, 0
        %v838 = vsub.s32 0, %v797
        %v839 = vsel %vm837, %v838, %v797
        %v840 = vshrl.u32 %v839, 4
        %v841 = vand.u32 %v839, 15
        %v842 = vsub.s32 0, %v841
        %v843 = vsel %vm837, %v842, %v841
        %vm844 = vcmp.lt.s32.totalorder %v798, 0
        %v845 = vsub.s32 0, %v798
        %v846 = vsel %vm844, %v845, %v798
        %v847 = vshrl.u32 %v846, 4
        %v848 = vand.u32 %v846, 15
        %v849 = vsub.s32 0, %v848
        %v850 = vsel %vm844, %v849, %v848
        %vm851 = vcmp.lt.s32.totalorder %v799, 0
        %v852 = vsub.s32 0, %v799
        %v853 = vsel %vm851, %v852, %v799
        %v854 = vshrl.u32 %v853, 4
        %v855 = vand.u32 %v853, 15
        %v856 = vsub.s32 0, %v855
        %v857 = vsel %vm851, %v856, %v855
        %vm858 = vcmp.lt.s32.totalorder %v800, 0
        %v859 = vsub.s32 0, %v800
        %v860 = vsel %vm858, %v859, %v800
        %v861 = vshrl.u32 %v860, 4
        %v862 = vand.u32 %v860, 15
        %v863 = vsub.s32 0, %v862
        %v864 = vsel %vm858, %v863, %v862
        %vm865 = vcmp.lt.s32.totalorder %v801, 0
        %v866 = vsub.s32 0, %v801
        %v867 = vsel %vm865, %v866, %v801
        %v868 = vshrl.u32 %v867, 4
        %v869 = vand.u32 %v867, 15
        %v870 = vsub.s32 0, %v869
        %v871 = vsel %vm865, %v870, %v869
        %vm872 = vcmp.lt.s32.totalorder %v802, 0
        %v873 = vsub.s32 0, %v802
        %v874 = vsel %vm872, %v873, %v802
        %v875 = vshrl.u32 %v874, 4
        %v876 = vand.u32 %v874, 15
        %v877 = vsub.s32 0, %v876
        %v878 = vsel %vm872, %v877, %v876
        %vm879 = vcmp.lt.s32.totalorder %v803, 0
        %v880 = vsub.s32 0, %v803
        %v881 = vsel %vm879, %v880, %v803
        %v882 = vshrl.u32 %v881, 4
        %v883 = vand.u32 %v881, 15
        %v884 = vsub.s32 0, %v883
        %v885 = vsel %vm879, %v884, %v883
        %vm886 = vcmp.lt.s32.totalorder %v804, 0
        %v887 = vsub.s32 0, %v804
        %v888 = vsel %vm886, %v887, %v804
        %v889 = vshrl.u32 %v888, 4
        %v890 = vand.u32 %v888, 15
        %v891 = vsub.s32 0, %v890
        %v892 = vsel %vm886, %v891, %v890
        %vm893 = vcmp.lt.s32.totalorder %v805, 0
        %v894 = vsub.s32 0, %v805
        %v895 = vsel %vm893, %v894, %v805
        %v896 = vshrl.u32 %v895, 4
        %v897 = vand.u32 %v895, 15
        %v898 = vsub.s32 0, %v897
        %v899 = vsel %vm893, %v898, %v897
        %vm900 = vcmp.lt.s32.totalorder %v806, 0
        %v901 = vsub.s32 0, %v806
        %v902 = vsel %vm900, %v901, %v806
        %v903 = vshrl.u32 %v902, 4
        %v904 = vand.u32 %v902, 15
        %v905 = vsub.s32 0, %v904
        %v906 = vsel %vm900, %v905, %v904
        %vm907 = vcmp.lt.s32.totalorder %v807, 0
        %v908 = vsub.s32 0, %v807
        %v909 = vsel %vm907, %v908, %v807
        %v910 = vshrl.u32 %v909, 4
        %v911 = vand.u32 %v909, 15
        %v912 = vsub.s32 0, %v911
        %v913 = vsel %vm907, %v912, %v911
        %vm914 = vcmp.lt.s32.totalorder %v808, 0
        %v915 = vsub.s32 0, %v808
        %v916 = vsel %vm914, %v915, %v808
        %v917 = vshrl.u32 %v916, 4
        %v918 = vand.u32 %v916, 15
        %v919 = vsub.s32 0, %v918
        %v920 = vsel %vm914, %v919, %v918
        %vm921 = vcmp.ne.s32.totalorder %v815, 0
        %vm922 = vcmp.ne.s32.totalorder %v822, 0
        %vm923 = vcmp.ne.s32.totalorder %v829, 0
        %vm924 = vcmp.ne.s32.totalorder %v836, 0
        %vm925 = vcmp.ne.s32.totalorder %v843, 0
        %vm926 = vcmp.ne.s32.totalorder %v850, 0
        %vm927 = vcmp.ne.s32.totalorder %v857, 0
        %vm928 = vcmp.ne.s32.totalorder %v864, 0
        %vm929 = vcmp.ne.s32.totalorder %v871, 0
        %vm930 = vcmp.ne.s32.totalorder %v878, 0
        %vm931 = vcmp.ne.s32.totalorder %v885, 0
        %vm932 = vcmp.ne.s32.totalorder %v892, 0
        %vm933 = vcmp.ne.s32.totalorder %v899, 0
        %vm934 = vcmp.ne.s32.totalorder %v906, 0
        %vm935 = vcmp.ne.s32.totalorder %v913, 0
        %vm936 = vcmp.ne.s32.totalorder %v920, 0
        %vm937 = vcmp.lt.s32.totalorder %v815, 0
        %vm938 = vcmp.lt.s32.totalorder %v822, 0
        %vm939 = vcmp.lt.s32.totalorder %v829, 0
        %vm940 = vcmp.lt.s32.totalorder %v836, 0
        %vm941 = vcmp.lt.s32.totalorder %v843, 0
        %vm942 = vcmp.lt.s32.totalorder %v850, 0
        %vm943 = vcmp.lt.s32.totalorder %v857, 0
        %vm944 = vcmp.lt.s32.totalorder %v864, 0
        %vm945 = vcmp.lt.s32.totalorder %v871, 0
        %vm946 = vcmp.lt.s32.totalorder %v878, 0
        %vm947 = vcmp.lt.s32.totalorder %v885, 0
        %vm948 = vcmp.lt.s32.totalorder %v892, 0
        %vm949 = vcmp.lt.s32.totalorder %v899, 0
        %vm950 = vcmp.lt.s32.totalorder %v906, 0
        %vm951 = vcmp.lt.s32.totalorder %v913, 0
        %vm952 = vcmp.lt.s32.totalorder %v920, 0
        %vm953 = vmand %vm937, %vm921
        %vm954 = vmand %vm938, %vm922
        %vm955 = vmand %vm939, %vm923
        %vm956 = vmand %vm940, %vm924
        %vm957 = vmand %vm941, %vm925
        %vm958 = vmand %vm942, %vm926
        %vm959 = vmand %vm943, %vm927
        %vm960 = vmand %vm944, %vm928
        %vm961 = vmand %vm945, %vm929
        %vm962 = vmand %vm946, %vm930
        %vm963 = vmand %vm947, %vm931
        %vm964 = vmand %vm948, %vm932
        %vm965 = vmand %vm949, %vm933
        %vm966 = vmand %vm950, %vm934
        %vm967 = vmand %vm951, %vm935
        %vm968 = vmand %vm952, %vm936
        %v969 = vadd.s32 %v815, 16
        %v970 = vadd.s32 %v822, 16
        %v971 = vadd.s32 %v829, 16
        %v972 = vadd.s32 %v836, 16
        %v973 = vadd.s32 %v843, 16
        %v974 = vadd.s32 %v850, 16
        %v975 = vadd.s32 %v857, 16
        %v976 = vadd.s32 %v864, 16
        %v977 = vadd.s32 %v871, 16
        %v978 = vadd.s32 %v878, 16
        %v979 = vadd.s32 %v885, 16
        %v980 = vadd.s32 %v892, 16
        %v981 = vadd.s32 %v899, 16
        %v982 = vadd.s32 %v906, 16
        %v983 = vadd.s32 %v913, 16
        %v984 = vadd.s32 %v920, 16
        %v985 = vsel %vm953, %v969, %v815
        %v986 = vsel %vm954, %v970, %v822
        %v987 = vsel %vm955, %v971, %v829
        %v988 = vsel %vm956, %v972, %v836
        %v989 = vsel %vm957, %v973, %v843
        %v990 = vsel %vm958, %v974, %v850
        %v991 = vsel %vm959, %v975, %v857
        %v992 = vsel %vm960, %v976, %v864
        %v993 = vsel %vm961, %v977, %v871
        %v994 = vsel %vm962, %v978, %v878
        %v995 = vsel %vm963, %v979, %v885
        %v996 = vsel %vm964, %v980, %v892
        %v997 = vsel %vm965, %v981, %v899
        %v998 = vsel %vm966, %v982, %v906
        %v999 = vsel %vm967, %v983, %v913
        %v1000 = vsel %vm968, %v984, %v920
        %vm1001 = vcmp.eq.s32.totalorder %v985, 0
        %vm1002 = vcmp.eq.s32.totalorder %v986, 0
        %vm1003 = vcmp.eq.s32.totalorder %v987, 0
        %vm1004 = vcmp.eq.s32.totalorder %v988, 0
        %vm1005 = vcmp.eq.s32.totalorder %v989, 0
        %vm1006 = vcmp.eq.s32.totalorder %v990, 0
        %vm1007 = vcmp.eq.s32.totalorder %v991, 0
        %vm1008 = vcmp.eq.s32.totalorder %v992, 0
        %vm1009 = vcmp.eq.s32.totalorder %v993, 0
        %vm1010 = vcmp.eq.s32.totalorder %v994, 0
        %vm1011 = vcmp.eq.s32.totalorder %v995, 0
        %vm1012 = vcmp.eq.s32.totalorder %v996, 0
        %vm1013 = vcmp.eq.s32.totalorder %v997, 0
        %vm1014 = vcmp.eq.s32.totalorder %v998, 0
        %vm1015 = vcmp.eq.s32.totalorder %v999, 0
        %vm1016 = vcmp.eq.s32.totalorder %v1000, 0
        %vm1017 = vcmp.eq.s32.totalorder %v985, 15
        %vm1018 = vcmp.eq.s32.totalorder %v986, 15
        %vm1019 = vcmp.eq.s32.totalorder %v987, 15
        %vm1020 = vcmp.eq.s32.totalorder %v988, 15
        %vm1021 = vcmp.eq.s32.totalorder %v989, 15
        %vm1022 = vcmp.eq.s32.totalorder %v990, 15
        %vm1023 = vcmp.eq.s32.totalorder %v991, 15
        %vm1024 = vcmp.eq.s32.totalorder %v992, 15
        %vm1025 = vcmp.eq.s32.totalorder %v993, 15
        %vm1026 = vcmp.eq.s32.totalorder %v994, 15
        %vm1027 = vcmp.eq.s32.totalorder %v995, 15
        %vm1028 = vcmp.eq.s32.totalorder %v996, 15
        %vm1029 = vcmp.eq.s32.totalorder %v997, 15
        %vm1030 = vcmp.eq.s32.totalorder %v998, 15
        %vm1031 = vcmp.eq.s32.totalorder %v999, 15
        %vm1032 = vcmp.eq.s32.totalorder %v1000, 15
        %v1033 = vld [vmem:[#allocation5] sm:$0x8]
        %v1034 = vld [vmem:[#allocation5 + $0x4] sm:$0xf]
        %v1035 = vld [vmem:[#allocation5 + $0x8] sm:$0xf]
        %v1036 = vld [vmem:[#allocation5 + $0xc] sm:$0xf]
        %v1037 = vld [vmem:[#allocation5 + $0x10] sm:$0xf]
        %v1038 = vld [vmem:[#allocation5 + $0x14] sm:$0xf]
        %v1039 = vld [vmem:[#allocation5 + $0x18] sm:$0xf]
        %v1040 = vld [vmem:[#allocation5 + $0x1c] sm:$0xf]
        %v1041 = vld [vmem:[#allocation5 + $0x20] sm:$0xf]
        %v1042 = vld [vmem:[#allocation5 + $0x24] sm:$0xf]
        %v1043 = vld [vmem:[#allocation5 + $0x28] sm:$0xf]
        %v1044 = vld [vmem:[#allocation5 + $0x2c] sm:$0xf]
        %v1045 = vld [vmem:[#allocation5 + $0x30] sm:$0xf]
        %v1046 = vld [vmem:[#allocation5 + $0x34] sm:$0xf]
        %v1047 = vld [vmem:[#allocation5 + $0x38] sm:$0xf]
        %v1048 = vld [vmem:[#allocation5 + $0x3c] sm:$0xf]
        %v1049 = vld [vmem:[#allocation5 + $0x40] sm:$0xf]
        %v1050 = vsel %vm1001, 1, 0
        %v1051 = vsel %vm1002, 1, 0
        %v1052 = vsel %vm1003, 1, 0
        %v1053 = vsel %vm1004, 1, 0
        %v1054 = vsel %vm1005, 1, 0
        %v1055 = vsel %vm1006, 1, 0
        %v1056 = vsel %vm1007, 1, 0
        %v1057 = vsel %vm1008, 1, 0
        %v1058 = vsel %vm1009, 1, 0
        %v1059 = vsel %vm1010, 1, 0
        %v1060 = vsel %vm1011, 1, 0
        %v1061 = vsel %vm1012, 1, 0
        %v1062 = vsel %vm1013, 1, 0
        %v1063 = vsel %vm1014, 1, 0
        %v1064 = vsel %vm1015, 1, 0
        %v1065 = vsel %vm1016, 1, 0
        %vm1066 = vcmp.eq.s32.totalorder %v1050, 1
        %vm1067 = vcmp.eq.s32.totalorder %v1051, 1
        %vm1068 = vcmp.eq.s32.totalorder %v1052, 1
        %vm1069 = vcmp.eq.s32.totalorder %v1053, 1
        %vm1070 = vcmp.eq.s32.totalorder %v1054, 1
        %vm1071 = vcmp.eq.s32.totalorder %v1055, 1
        %vm1072 = vcmp.eq.s32.totalorder %v1056, 1
        %vm1073 = vcmp.eq.s32.totalorder %v1057, 1
        %vm1074 = vcmp.eq.s32.totalorder %v1058, 1
        %vm1075 = vcmp.eq.s32.totalorder %v1059, 1
        %vm1076 = vcmp.eq.s32.totalorder %v1060, 1
        %vm1077 = vcmp.eq.s32.totalorder %v1061, 1
        %vm1078 = vcmp.eq.s32.totalorder %v1062, 1
        %vm1079 = vcmp.eq.s32.totalorder %v1063, 1
        %vm1080 = vcmp.eq.s32.totalorder %v1064, 1
        %vm1081 = vcmp.eq.s32.totalorder %v1065, 1
        %vm1082 = vmpackc.low %vm1066, %vm1066
        %vm1083 = vmpackc.low %vm1067, %vm1067
        %vm1084 = vmpackc.low %vm1068, %vm1068
        %vm1085 = vmpackc.low %vm1069, %vm1069
        %vm1086 = vmpackc.low %vm1070, %vm1070
        %vm1087 = vmpackc.low %vm1071, %vm1071
        %vm1088 = vmpackc.low %vm1072, %vm1072
        %vm1089 = vmpackc.low %vm1073, %vm1073
        %vm1090 = vmpackc.low %vm1074, %vm1074
        %vm1091 = vmpackc.low %vm1075, %vm1075
        %vm1092 = vmpackc.low %vm1076, %vm1076
        %vm1093 = vmpackc.low %vm1077, %vm1077
        %vm1094 = vmpackc.low %vm1078, %vm1078
        %vm1095 = vmpackc.low %vm1079, %vm1079
        %vm1096 = vmpackc.low %vm1080, %vm1080
        %vm1097 = vmpackc.low %vm1081, %vm1081
        %v1098 = vsel %vm1082, 65537, 0
        %v1099 = vsel %vm1083, 65537, 0
        %v1100 = vsel %vm1084, 65537, 0
        %v1101 = vsel %vm1085, 65537, 0
        %v1102 = vsel %vm1086, 65537, 0
        %v1103 = vsel %vm1087, 65537, 0
        %v1104 = vsel %vm1088, 65537, 0
        %v1105 = vsel %vm1089, 65537, 0
        %v1106 = vsel %vm1090, 65537, 0
        %v1107 = vsel %vm1091, 65537, 0
        %v1108 = vsel %vm1092, 65537, 0
        %v1109 = vsel %vm1093, 65537, 0
        %v1110 = vsel %vm1094, 65537, 0
        %v1111 = vsel %vm1095, 65537, 0
        %v1112 = vsel %vm1096, 65537, 0
        %v1113 = vsel %vm1097, 65537, 0
        %vm1114 = vsmask.f32 3328
        %vm1115 = vsmask.f32 7440
        %vm1116 = vmor %vm1114, %vm1115
        %v1118 = vshll.u32 %v1098, 16
        %v1120 = vrot.slane %v1118, 5
        %v1121 = vshrl.u32 %v1098, 16
        %v1123 = vrot.slane %v1121, 4
        %v1124 = vor.u32 %v1123, %v1120
        %v1125 = vrot.slane %v1124, 4
        %v1127 = vshll.u32 %v1099, 16
        %v1129 = vrot.slane %v1127, 5
        %v1130 = vsel %vm1116, %v1125, %v1129
        %v1131 = vshrl.u32 %v1099, 16
        %v1133 = vrot.slane %v1131, 4
        %v1134 = vor.u32 %v1133, %v1129
        %v1135 = vrot.slane %v1134, 4
        %v1137 = vshll.u32 %v1100, 16
        %v1139 = vrot.slane %v1137, 5
        %v1140 = vsel %vm1116, %v1135, %v1139
        %v1141 = vshrl.u32 %v1100, 16
        %v1143 = vrot.slane %v1141, 4
        %v1144 = vor.u32 %v1143, %v1139
        %v1145 = vrot.slane %v1144, 4
        %v1147 = vshll.u32 %v1101, 16
        %v1149 = vrot.slane %v1147, 5
        %v1150 = vsel %vm1116, %v1145, %v1149
        %v1151 = vshrl.u32 %v1101, 16
        %v1153 = vrot.slane %v1151, 4
        %v1154 = vor.u32 %v1153, %v1149
        %v1155 = vrot.slane %v1154, 4
        %v1157 = vshll.u32 %v1102, 16
        %v1159 = vrot.slane %v1157, 5
        %v1160 = vsel %vm1116, %v1155, %v1159
        %v1161 = vshrl.u32 %v1102, 16
        %v1163 = vrot.slane %v1161, 4
        %v1164 = vor.u32 %v1163, %v1159
        %v1165 = vrot.slane %v1164, 4
        %v1167 = vshll.u32 %v1103, 16
        %v1169 = vrot.slane %v1167, 5
        %v1170 = vsel %vm1116, %v1165, %v1169
        %v1171 = vshrl.u32 %v1103, 16
        %v1173 = vrot.slane %v1171, 4
        %v1174 = vor.u32 %v1173, %v1169
        %v1175 = vrot.slane %v1174, 4
        %v1177 = vshll.u32 %v1104, 16
        %v1179 = vrot.slane %v1177, 5
        %v1180 = vsel %vm1116, %v1175, %v1179
        %v1181 = vshrl.u32 %v1104, 16
        %v1183 = vrot.slane %v1181, 4
        %v1184 = vor.u32 %v1183, %v1179
        %v1185 = vrot.slane %v1184, 4
        %v1187 = vshll.u32 %v1105, 16
        %v1189 = vrot.slane %v1187, 5
        %v1190 = vsel %vm1116, %v1185, %v1189
        %v1191 = vshrl.u32 %v1105, 16
        %v1193 = vrot.slane %v1191, 4
        %v1194 = vor.u32 %v1193, %v1189
        %v1195 = vrot.slane %v1194, 4
        %v1197 = vshll.u32 %v1106, 16
        %v1199 = vrot.slane %v1197, 5
        %v1200 = vsel %vm1116, %v1195, %v1199
        %v1201 = vshrl.u32 %v1106, 16
        %v1203 = vrot.slane %v1201, 4
        %v1204 = vor.u32 %v1203, %v1199
        %v1205 = vrot.slane %v1204, 4
        %v1207 = vshll.u32 %v1107, 16
        %v1209 = vrot.slane %v1207, 5
        %v1210 = vsel %vm1116, %v1205, %v1209
        %v1211 = vshrl.u32 %v1107, 16
        %v1213 = vrot.slane %v1211, 4
        %v1214 = vor.u32 %v1213, %v1209
        %v1215 = vrot.slane %v1214, 4
        %v1217 = vshll.u32 %v1108, 16
        %v1219 = vrot.slane %v1217, 5
        %v1220 = vsel %vm1116, %v1215, %v1219
        %v1221 = vshrl.u32 %v1108, 16
        %v1223 = vrot.slane %v1221, 4
        %v1224 = vor.u32 %v1223, %v1219
        %v1225 = vrot.slane %v1224, 4
        %v1227 = vshll.u32 %v1109, 16
        %v1229 = vrot.slane %v1227, 5
        %v1230 = vsel %vm1116, %v1225, %v1229
        %v1231 = vshrl.u32 %v1109, 16
        %v1233 = vrot.slane %v1231, 4
        %v1234 = vor.u32 %v1233, %v1229
        %v1235 = vrot.slane %v1234, 4
        %v1237 = vshll.u32 %v1110, 16
        %v1239 = vrot.slane %v1237, 5
        %v1240 = vsel %vm1116, %v1235, %v1239
        %v1241 = vshrl.u32 %v1110, 16
        %v1243 = vrot.slane %v1241, 4
        %v1244 = vor.u32 %v1243, %v1239
        %v1245 = vrot.slane %v1244, 4
        %v1247 = vshll.u32 %v1111, 16
        %v1249 = vrot.slane %v1247, 5
        %v1250 = vsel %vm1116, %v1245, %v1249
        %v1251 = vshrl.u32 %v1111, 16
        %v1253 = vrot.slane %v1251, 4
        %v1254 = vor.u32 %v1253, %v1249
        %v1255 = vrot.slane %v1254, 4
        %v1257 = vshll.u32 %v1112, 16
        %v1259 = vrot.slane %v1257, 5
        %v1260 = vsel %vm1116, %v1255, %v1259
        %v1261 = vshrl.u32 %v1112, 16
        %v1263 = vrot.slane %v1261, 4
        %v1264 = vor.u32 %v1263, %v1259
        %v1265 = vrot.slane %v1264, 4
        %v1267 = vshll.u32 %v1113, 16
        %v1269 = vrot.slane %v1267, 5
        %v1270 = vsel %vm1116, %v1265, %v1269
        %v1271 = vshrl.u32 %v1113, 16
        %v1273 = vrot.slane %v1271, 4
        %v1274 = vor.u32 %v1273, %v1269
        %v1275 = vrot.slane %v1274, 4
        %v1276 = vunpack.c.l.b16 %v1120
        %v1277 = vunpack.c.h.b16 %v1120
        %v1278 = vunpack.c.l.b16 0
        %v1279 = vunpack.c.h.b16 0
        %vm1280 = vcmp.ne.s32.totalorder %v1276, %v1278
        %vm1281 = vcmp.ne.s32.totalorder %v1277, %v1279
        %vm1282 = vmpackc.low %vm1281, %vm1280
        %v1283 = vunpack.c.l.b16 %v1130
        %v1284 = vunpack.c.h.b16 %v1130
        %v1285 = vunpack.c.l.b16 0
        %v1286 = vunpack.c.h.b16 0
        %vm1287 = vcmp.ne.s32.totalorder %v1283, %v1285
        %vm1288 = vcmp.ne.s32.totalorder %v1284, %v1286
        %vm1289 = vmpackc.low %vm1288, %vm1287
        %v1290 = vunpack.c.l.b16 %v1140
        %v1291 = vunpack.c.h.b16 %v1140
        %v1292 = vunpack.c.l.b16 0
        %v1293 = vunpack.c.h.b16 0
        %vm1294 = vcmp.ne.s32.totalorder %v1290, %v1292
        %vm1295 = vcmp.ne.s32.totalorder %v1291, %v1293
        %vm1296 = vmpackc.low %vm1295, %vm1294
        %v1297 = vunpack.c.l.b16 %v1150
        %v1298 = vunpack.c.h.b16 %v1150
        %v1299 = vunpack.c.l.b16 0
        %v1300 = vunpack.c.h.b16 0
        %vm1301 = vcmp.ne.s32.totalorder %v1297, %v1299
        %vm1302 = vcmp.ne.s32.totalorder %v1298, %v1300
        %vm1303 = vmpackc.low %vm1302, %vm1301
        %v1304 = vunpack.c.l.b16 %v1160
        %v1305 = vunpack.c.h.b16 %v1160
        %v1306 = vunpack.c.l.b16 0
        %v1307 = vunpack.c.h.b16 0
        %vm1308 = vcmp.ne.s32.totalorder %v1304, %v1306
        %vm1309 = vcmp.ne.s32.totalorder %v1305, %v1307
        %vm1310 = vmpackc.low %vm1309, %vm1308
        %v1311 = vunpack.c.l.b16 %v1170
        %v1312 = vunpack.c.h.b16 %v1170
        %v1313 = vunpack.c.l.b16 0
        %v1314 = vunpack.c.h.b16 0
        %vm1315 = vcmp.ne.s32.totalorder %v1311, %v1313
        %vm1316 = vcmp.ne.s32.totalorder %v1312, %v1314
        %vm1317 = vmpackc.low %vm1316, %vm1315
        %v1318 = vunpack.c.l.b16 %v1180
        %v1319 = vunpack.c.h.b16 %v1180
        %v1320 = vunpack.c.l.b16 0
        %v1321 = vunpack.c.h.b16 0
        %vm1322 = vcmp.ne.s32.totalorder %v1318, %v1320
        %vm1323 = vcmp.ne.s32.totalorder %v1319, %v1321
        %vm1324 = vmpackc.low %vm1323, %vm1322
        %v1325 = vunpack.c.l.b16 %v1190
        %v1326 = vunpack.c.h.b16 %v1190
        %v1327 = vunpack.c.l.b16 0
        %v1328 = vunpack.c.h.b16 0
        %vm1329 = vcmp.ne.s32.totalorder %v1325, %v1327
        %vm1330 = vcmp.ne.s32.totalorder %v1326, %v1328
        %vm1331 = vmpackc.low %vm1330, %vm1329
        %v1332 = vunpack.c.l.b16 %v1200
        %v1333 = vunpack.c.h.b16 %v1200
        %v1334 = vunpack.c.l.b16 0
        %v1335 = vunpack.c.h.b16 0
        %vm1336 = vcmp.ne.s32.totalorder %v1332, %v1334
        %vm1337 = vcmp.ne.s32.totalorder %v1333, %v1335
        %vm1338 = vmpackc.low %vm1337, %vm1336
        %v1339 = vunpack.c.l.b16 %v1210
        %v1340 = vunpack.c.h.b16 %v1210
        %v1341 = vunpack.c.l.b16 0
        %v1342 = vunpack.c.h.b16 0
        %vm1343 = vcmp.ne.s32.totalorder %v1339, %v1341
        %vm1344 = vcmp.ne.s32.totalorder %v1340, %v1342
        %vm1345 = vmpackc.low %vm1344, %vm1343
        %v1346 = vunpack.c.l.b16 %v1220
        %v1347 = vunpack.c.h.b16 %v1220
        %v1348 = vunpack.c.l.b16 0
        %v1349 = vunpack.c.h.b16 0
        %vm1350 = vcmp.ne.s32.totalorder %v1346, %v1348
        %vm1351 = vcmp.ne.s32.totalorder %v1347, %v1349
        %vm1352 = vmpackc.low %vm1351, %vm1350
        %v1353 = vunpack.c.l.b16 %v1230
        %v1354 = vunpack.c.h.b16 %v1230
        %v1355 = vunpack.c.l.b16 0
        %v1356 = vunpack.c.h.b16 0
        %vm1357 = vcmp.ne.s32.totalorder %v1353, %v1355
        %vm1358 = vcmp.ne.s32.totalorder %v1354, %v1356
        %vm1359 = vmpackc.low %vm1358, %vm1357
        %v1360 = vunpack.c.l.b16 %v1240
        %v1361 = vunpack.c.h.b16 %v1240
        %v1362 = vunpack.c.l.b16 0
        %v1363 = vunpack.c.h.b16 0
        %vm1364 = vcmp.ne.s32.totalorder %v1360, %v1362
        %vm1365 = vcmp.ne.s32.totalorder %v1361, %v1363
        %vm1366 = vmpackc.low %vm1365, %vm1364
        %v1367 = vunpack.c.l.b16 %v1250
        %v1368 = vunpack.c.h.b16 %v1250
        %v1369 = vunpack.c.l.b16 0
        %v1370 = vunpack.c.h.b16 0
        %vm1371 = vcmp.ne.s32.totalorder %v1367, %v1369
        %vm1372 = vcmp.ne.s32.totalorder %v1368, %v1370
        %vm1373 = vmpackc.low %vm1372, %vm1371
        %v1374 = vunpack.c.l.b16 %v1260
        %v1375 = vunpack.c.h.b16 %v1260
        %v1376 = vunpack.c.l.b16 0
        %v1377 = vunpack.c.h.b16 0
        %vm1378 = vcmp.ne.s32.totalorder %v1374, %v1376
        %vm1379 = vcmp.ne.s32.totalorder %v1375, %v1377
        %vm1380 = vmpackc.low %vm1379, %vm1378
        %v1381 = vunpack.c.l.b16 %v1270
        %v1382 = vunpack.c.h.b16 %v1270
        %v1383 = vunpack.c.l.b16 0
        %v1384 = vunpack.c.h.b16 0
        %vm1385 = vcmp.ne.s32.totalorder %v1381, %v1383
        %vm1386 = vcmp.ne.s32.totalorder %v1382, %v1384
        %vm1387 = vmpackc.low %vm1386, %vm1385
        %v1388 = vunpack.c.l.b16 %v1275
        %v1389 = vunpack.c.h.b16 %v1275
        %v1390 = vunpack.c.l.b16 0
        %v1391 = vunpack.c.h.b16 0
        %vm1392 = vcmp.ne.s32.totalorder %v1388, %v1390
        %vm1393 = vcmp.ne.s32.totalorder %v1389, %v1391
        %vm1394 = vmpackc.low %vm1393, %vm1392
        %v1395 = vsel %vm1282, 0, %v1033
        %v1396 = vsel %vm1289, 0, %v1034
        %v1397 = vsel %vm1296, 0, %v1035
        %v1398 = vsel %vm1303, 0, %v1036
        %v1399 = vsel %vm1310, 0, %v1037
        %v1400 = vsel %vm1317, 0, %v1038
        %v1401 = vsel %vm1324, 0, %v1039
        %v1402 = vsel %vm1331, 0, %v1040
        %v1403 = vsel %vm1338, 0, %v1041
        %v1404 = vsel %vm1345, 0, %v1042
        %v1405 = vsel %vm1352, 0, %v1043
        %v1406 = vsel %vm1359, 0, %v1044
        %v1407 = vsel %vm1366, 0, %v1045
        %v1408 = vsel %vm1373, 0, %v1046
        %v1409 = vsel %vm1380, 0, %v1047
        %v1410 = vsel %vm1387, 0, %v1048
        %v1411 = vsel %vm1394, 0, %v1049
        %vm1412 = vsmask.f32 256
        %vm1413 = vsmask.f32 4368
        %vm1414 = vmor %vm1412, %vm1413
        %v1416 = vshrl.u32 %v1395, 16
        %v1418 = vrot.slane %v1416, 7
        %v1419 = vrot.slane %v1418, 4
        %v1421 = vshrl.u32 %v1396, 16
        %v1423 = vrot.slane %v1421, 7
        %v1424 = vshll.u32 %v1396, 16
        %v1426 = vor.u32 %v1423, %v1424
        %v1427 = vsel %vm1414, %v1419, %v1426
        %v1428 = vrot.slane %v1423, 4
        %v1430 = vshrl.u32 %v1397, 16
        %v1432 = vrot.slane %v1430, 7
        %v1433 = vshll.u32 %v1397, 16
        %v1435 = vor.u32 %v1432, %v1433
        %v1436 = vsel %vm1414, %v1428, %v1435
        %v1437 = vrot.slane %v1432, 4
        %v1439 = vshrl.u32 %v1398, 16
        %v1441 = vrot.slane %v1439, 7
        %v1442 = vshll.u32 %v1398, 16
        %v1444 = vor.u32 %v1441, %v1442
        %v1445 = vsel %vm1414, %v1437, %v1444
        %v1446 = vrot.slane %v1441, 4
        %v1448 = vshrl.u32 %v1399, 16
        %v1450 = vrot.slane %v1448, 7
        %v1451 = vshll.u32 %v1399, 16
        %v1453 = vor.u32 %v1450, %v1451
        %v1454 = vsel %vm1414, %v1446, %v1453
        %v1455 = vrot.slane %v1450, 4
        %v1457 = vshrl.u32 %v1400, 16
        %v1459 = vrot.slane %v1457, 7
        %v1460 = vshll.u32 %v1400, 16
        %v1462 = vor.u32 %v1459, %v1460
        %v1463 = vsel %vm1414, %v1455, %v1462
        %v1464 = vrot.slane %v1459, 4
        %v1466 = vshrl.u32 %v1401, 16
        %v1468 = vrot.slane %v1466, 7
        %v1469 = vshll.u32 %v1401, 16
        %v1471 = vor.u32 %v1468, %v1469
        %v1472 = vsel %vm1414, %v1464, %v1471
        %v1473 = vrot.slane %v1468, 4
        %v1475 = vshrl.u32 %v1402, 16
        %v1477 = vrot.slane %v1475, 7
        %v1478 = vshll.u32 %v1402, 16
        %v1480 = vor.u32 %v1477, %v1478
        %v1481 = vsel %vm1414, %v1473, %v1480
        %v1482 = vrot.slane %v1477, 4
        %v1484 = vshrl.u32 %v1403, 16
        %v1486 = vrot.slane %v1484, 7
        %v1487 = vshll.u32 %v1403, 16
        %v1489 = vor.u32 %v1486, %v1487
        %v1490 = vsel %vm1414, %v1482, %v1489
        %v1491 = vrot.slane %v1486, 4
        %v1493 = vshrl.u32 %v1404, 16
        %v1495 = vrot.slane %v1493, 7
        %v1496 = vshll.u32 %v1404, 16
        %v1498 = vor.u32 %v1495, %v1496
        %v1499 = vsel %vm1414, %v1491, %v1498
        %v1500 = vrot.slane %v1495, 4
        %v1502 = vshrl.u32 %v1405, 16
        %v1504 = vrot.slane %v1502, 7
        %v1505 = vshll.u32 %v1405, 16
        %v1507 = vor.u32 %v1504, %v1505
        %v1508 = vsel %vm1414, %v1500, %v1507
        %v1509 = vrot.slane %v1504, 4
        %v1511 = vshrl.u32 %v1406, 16
        %v1513 = vrot.slane %v1511, 7
        %v1514 = vshll.u32 %v1406, 16
        %v1516 = vor.u32 %v1513, %v1514
        %v1517 = vsel %vm1414, %v1509, %v1516
        %v1518 = vrot.slane %v1513, 4
        %v1520 = vshrl.u32 %v1407, 16
        %v1522 = vrot.slane %v1520, 7
        %v1523 = vshll.u32 %v1407, 16
        %v1525 = vor.u32 %v1522, %v1523
        %v1526 = vsel %vm1414, %v1518, %v1525
        %v1527 = vrot.slane %v1522, 4
        %v1529 = vshrl.u32 %v1408, 16
        %v1531 = vrot.slane %v1529, 7
        %v1532 = vshll.u32 %v1408, 16
        %v1534 = vor.u32 %v1531, %v1532
        %v1535 = vsel %vm1414, %v1527, %v1534
        %v1536 = vrot.slane %v1531, 4
        %v1538 = vshrl.u32 %v1409, 16
        %v1540 = vrot.slane %v1538, 7
        %v1541 = vshll.u32 %v1409, 16
        %v1543 = vor.u32 %v1540, %v1541
        %v1544 = vsel %vm1414, %v1536, %v1543
        %v1545 = vrot.slane %v1540, 4
        %v1547 = vshrl.u32 %v1410, 16
        %v1549 = vrot.slane %v1547, 7
        %v1550 = vshll.u32 %v1410, 16
        %v1552 = vor.u32 %v1549, %v1550
        %v1553 = vsel %vm1414, %v1545, %v1552
        %v1554 = vrot.slane %v1549, 4
        %v1556 = vshrl.u32 %v1411, 16
        %v1558 = vrot.slane %v1556, 7
        %v1559 = vshll.u32 %v1411, 16
        %v1561 = vor.u32 %v1558, %v1559
        %v1562 = vsel %vm1414, %v1554, %v1561
        %1579 = vst [vmem:[#allocation6] sm:$0xf] %v1427
        %1580 = vst [vmem:[#allocation6 + $0x24] sm:$0xf] %v1436
        %1581 = vst [vmem:[#allocation6 + $0x48] sm:$0xf] %v1445
        %1582 = vst [vmem:[#allocation6 + $0x6c] sm:$0xf] %v1454
        %1583 = vst [vmem:[#allocation6 + $0x90] sm:$0xf] %v1463
        %1584 = vst [vmem:[#allocation6 + $0xb4] sm:$0xf] %v1472
        %1585 = vst [vmem:[#allocation6 + $0xd8] sm:$0xf] %v1481
        %1586 = vst [vmem:[#allocation6 + $0xfc] sm:$0xf] %v1490
        %1587 = vst [vmem:[#allocation6 + $0x120] sm:$0xf] %v1499
        %1588 = vst [vmem:[#allocation6 + $0x144] sm:$0xf] %v1508
        %1589 = vst [vmem:[#allocation6 + $0x168] sm:$0xf] %v1517
        %1590 = vst [vmem:[#allocation6 + $0x18c] sm:$0xf] %v1526
        %1591 = vst [vmem:[#allocation6 + $0x1b0] sm:$0xf] %v1535
        %1592 = vst [vmem:[#allocation6 + $0x1d4] sm:$0xf] %v1544
        %1593 = vst [vmem:[#allocation6 + $0x1f8] sm:$0xf] %v1553
        %1594 = vst [vmem:[#allocation6 + $0x21c] sm:$0xf] %v1562
        %v1595 = vld [vmem:[#allocation5 + $0x4] sm:$0xf]
        %v1596 = vld [vmem:[#allocation5 + $0x8] sm:$0xf]
        %v1597 = vld [vmem:[#allocation5 + $0xc] sm:$0xf]
        %v1598 = vld [vmem:[#allocation5 + $0x10] sm:$0xf]
        %v1599 = vld [vmem:[#allocation5 + $0x14] sm:$0xf]
        %v1600 = vld [vmem:[#allocation5 + $0x18] sm:$0xf]
        %v1601 = vld [vmem:[#allocation5 + $0x1c] sm:$0xf]
        %v1602 = vld [vmem:[#allocation5 + $0x20] sm:$0xf]
        %v1603 = vld [vmem:[#allocation5 + $0x24] sm:$0xf]
        %v1604 = vld [vmem:[#allocation5 + $0x28] sm:$0xf]
        %v1605 = vld [vmem:[#allocation5 + $0x2c] sm:$0xf]
        %v1606 = vld [vmem:[#allocation5 + $0x30] sm:$0xf]
        %v1607 = vld [vmem:[#allocation5 + $0x34] sm:$0xf]
        %v1608 = vld [vmem:[#allocation5 + $0x38] sm:$0xf]
        %v1609 = vld [vmem:[#allocation5 + $0x3c] sm:$0xf]
        %v1610 = vld [vmem:[#allocation5 + $0x40] sm:$0xf]
        %1611 = vst [vmem:[#allocation6 + $0x4] sm:$0xf] %v1595
        %1612 = vst [vmem:[#allocation6 + $0x28] sm:$0xf] %v1596
        %1613 = vst [vmem:[#allocation6 + $0x4c] sm:$0xf] %v1597
        %1614 = vst [vmem:[#allocation6 + $0x70] sm:$0xf] %v1598
        %1615 = vst [vmem:[#allocation6 + $0x94] sm:$0xf] %v1599
        %1616 = vst [vmem:[#allocation6 + $0xb8] sm:$0xf] %v1600
        %1617 = vst [vmem:[#allocation6 + $0xdc] sm:$0xf] %v1601
        %1618 = vst [vmem:[#allocation6 + $0x100] sm:$0xf] %v1602
        %1619 = vst [vmem:[#allocation6 + $0x124] sm:$0xf] %v1603
        %1620 = vst [vmem:[#allocation6 + $0x148] sm:$0xf] %v1604
        %1621 = vst [vmem:[#allocation6 + $0x16c] sm:$0xf] %v1605
        %1622 = vst [vmem:[#allocation6 + $0x190] sm:$0xf] %v1606
        %1623 = vst [vmem:[#allocation6 + $0x1b4] sm:$0xf] %v1607
        %1624 = vst [vmem:[#allocation6 + $0x1d8] sm:$0xf] %v1608
        %1625 = vst [vmem:[#allocation6 + $0x1fc] sm:$0xf] %v1609
        %1626 = vst [vmem:[#allocation6 + $0x220] sm:$0xf] %v1610
        %v1627 = vld [vmem:[#allocation5 + $0x4] sm:$0xf]
        %v1628 = vld [vmem:[#allocation5 + $0x8] sm:$0xf]
        %v1629 = vld [vmem:[#allocation5 + $0xc] sm:$0xf]
        %v1630 = vld [vmem:[#allocation5 + $0x10] sm:$0xf]
        %v1631 = vld [vmem:[#allocation5 + $0x14] sm:$0xf]
        %v1632 = vld [vmem:[#allocation5 + $0x18] sm:$0xf]
        %v1633 = vld [vmem:[#allocation5 + $0x1c] sm:$0xf]
        %v1634 = vld [vmem:[#allocation5 + $0x20] sm:$0xf]
        %v1635 = vld [vmem:[#allocation5 + $0x24] sm:$0xf]
        %v1636 = vld [vmem:[#allocation5 + $0x28] sm:$0xf]
        %v1637 = vld [vmem:[#allocation5 + $0x2c] sm:$0xf]
        %v1638 = vld [vmem:[#allocation5 + $0x30] sm:$0xf]
        %v1639 = vld [vmem:[#allocation5 + $0x34] sm:$0xf]
        %v1640 = vld [vmem:[#allocation5 + $0x38] sm:$0xf]
        %v1641 = vld [vmem:[#allocation5 + $0x3c] sm:$0xf]
        %v1642 = vld [vmem:[#allocation5 + $0x40] sm:$0xf]
        %v1643 = vld [vmem:[#allocation5 + $0x44] sm:$0x1]
        %v1644 = vsel %vm1017, 1, 0
        %v1645 = vsel %vm1018, 1, 0
        %v1646 = vsel %vm1019, 1, 0
        %v1647 = vsel %vm1020, 1, 0
        %v1648 = vsel %vm1021, 1, 0
        %v1649 = vsel %vm1022, 1, 0
        %v1650 = vsel %vm1023, 1, 0
        %v1651 = vsel %vm1024, 1, 0
        %v1652 = vsel %vm1025, 1, 0
        %v1653 = vsel %vm1026, 1, 0
        %v1654 = vsel %vm1027, 1, 0
        %v1655 = vsel %vm1028, 1, 0
        %v1656 = vsel %vm1029, 1, 0
        %v1657 = vsel %vm1030, 1, 0
        %v1658 = vsel %vm1031, 1, 0
        %v1659 = vsel %vm1032, 1, 0
        %vm1660 = vcmp.eq.s32.totalorder %v1644, 1
        %vm1661 = vcmp.eq.s32.totalorder %v1645, 1
        %vm1662 = vcmp.eq.s32.totalorder %v1646, 1
        %vm1663 = vcmp.eq.s32.totalorder %v1647, 1
        %vm1664 = vcmp.eq.s32.totalorder %v1648, 1
        %vm1665 = vcmp.eq.s32.totalorder %v1649, 1
        %vm1666 = vcmp.eq.s32.totalorder %v1650, 1
        %vm1667 = vcmp.eq.s32.totalorder %v1651, 1
        %vm1668 = vcmp.eq.s32.totalorder %v1652, 1
        %vm1669 = vcmp.eq.s32.totalorder %v1653, 1
        %vm1670 = vcmp.eq.s32.totalorder %v1654, 1
        %vm1671 = vcmp.eq.s32.totalorder %v1655, 1
        %vm1672 = vcmp.eq.s32.totalorder %v1656, 1
        %vm1673 = vcmp.eq.s32.totalorder %v1657, 1
        %vm1674 = vcmp.eq.s32.totalorder %v1658, 1
        %vm1675 = vcmp.eq.s32.totalorder %v1659, 1
        %vm1676 = vmpackc.low %vm1660, %vm1660
        %vm1677 = vmpackc.low %vm1661, %vm1661
        %vm1678 = vmpackc.low %vm1662, %vm1662
        %vm1679 = vmpackc.low %vm1663, %vm1663
        %vm1680 = vmpackc.low %vm1664, %vm1664
        %vm1681 = vmpackc.low %vm1665, %vm1665
        %vm1682 = vmpackc.low %vm1666, %vm1666
        %vm1683 = vmpackc.low %vm1667, %vm1667
        %vm1684 = vmpackc.low %vm1668, %vm1668
        %vm1685 = vmpackc.low %vm1669, %vm1669
        %vm1686 = vmpackc.low %vm1670, %vm1670
        %vm1687 = vmpackc.low %vm1671, %vm1671
        %vm1688 = vmpackc.low %vm1672, %vm1672
        %vm1689 = vmpackc.low %vm1673, %vm1673
        %vm1690 = vmpackc.low %vm1674, %vm1674
        %vm1691 = vmpackc.low %vm1675, %vm1675
        %v1692 = vsel %vm1676, 65537, 0
        %v1693 = vsel %vm1677, 65537, 0
        %v1694 = vsel %vm1678, 65537, 0
        %v1695 = vsel %vm1679, 65537, 0
        %v1696 = vsel %vm1680, 65537, 0
        %v1697 = vsel %vm1681, 65537, 0
        %v1698 = vsel %vm1682, 65537, 0
        %v1699 = vsel %vm1683, 65537, 0
        %v1700 = vsel %vm1684, 65537, 0
        %v1701 = vsel %vm1685, 65537, 0
        %v1702 = vsel %vm1686, 65537, 0
        %v1703 = vsel %vm1687, 65537, 0
        %v1704 = vsel %vm1688, 65537, 0
        %v1705 = vsel %vm1689, 65537, 0
        %v1706 = vsel %vm1690, 65537, 0
        %v1707 = vsel %vm1691, 65537, 0
        %v1709 = vshrl.u32 %v1692, 16
        %v1711 = vrot.slane %v1709, 7
        %v1712 = vshll.u32 %v1692, 16
        %v1714 = vor.u32 %v1711, %v1712
        %v1715 = vrot.slane %v1711, 4
        %v1717 = vshrl.u32 %v1693, 16
        %v1719 = vrot.slane %v1717, 7
        %v1720 = vshll.u32 %v1693, 16
        %v1722 = vor.u32 %v1719, %v1720
        %v1723 = vsel %vm1414, %v1715, %v1722
        %v1724 = vrot.slane %v1719, 4
        %v1726 = vshrl.u32 %v1694, 16
        %v1728 = vrot.slane %v1726, 7
        %v1729 = vshll.u32 %v1694, 16
        %v1731 = vor.u32 %v1728, %v1729
        %v1732 = vsel %vm1414, %v1724, %v1731
        %v1733 = vrot.slane %v1728, 4
        %v1735 = vshrl.u32 %v1695, 16
        %v1737 = vrot.slane %v1735, 7
        %v1738 = vshll.u32 %v1695, 16
        %v1740 = vor.u32 %v1737, %v1738
        %v1741 = vsel %vm1414, %v1733, %v1740
        %v1742 = vrot.slane %v1737, 4
        %v1744 = vshrl.u32 %v1696, 16
        %v1746 = vrot.slane %v1744, 7
        %v1747 = vshll.u32 %v1696, 16
        %v1749 = vor.u32 %v1746, %v1747
        %v1750 = vsel %vm1414, %v1742, %v1749
        %v1751 = vrot.slane %v1746, 4
        %v1753 = vshrl.u32 %v1697, 16
        %v1755 = vrot.slane %v1753, 7
        %v1756 = vshll.u32 %v1697, 16
        %v1758 = vor.u32 %v1755, %v1756
        %v1759 = vsel %vm1414, %v1751, %v1758
        %v1760 = vrot.slane %v1755, 4
        %v1762 = vshrl.u32 %v1698, 16
        %v1764 = vrot.slane %v1762, 7
        %v1765 = vshll.u32 %v1698, 16
        %v1767 = vor.u32 %v1764, %v1765
        %v1768 = vsel %vm1414, %v1760, %v1767
        %v1769 = vrot.slane %v1764, 4
        %v1771 = vshrl.u32 %v1699, 16
        %v1773 = vrot.slane %v1771, 7
        %v1774 = vshll.u32 %v1699, 16
        %v1776 = vor.u32 %v1773, %v1774
        %v1777 = vsel %vm1414, %v1769, %v1776
        %v1778 = vrot.slane %v1773, 4
        %v1780 = vshrl.u32 %v1700, 16
        %v1782 = vrot.slane %v1780, 7
        %v1783 = vshll.u32 %v1700, 16
        %v1785 = vor.u32 %v1782, %v1783
        %v1786 = vsel %vm1414, %v1778, %v1785
        %v1787 = vrot.slane %v1782, 4
        %v1789 = vshrl.u32 %v1701, 16
        %v1791 = vrot.slane %v1789, 7
        %v1792 = vshll.u32 %v1701, 16
        %v1794 = vor.u32 %v1791, %v1792
        %v1795 = vsel %vm1414, %v1787, %v1794
        %v1796 = vrot.slane %v1791, 4
        %v1798 = vshrl.u32 %v1702, 16
        %v1800 = vrot.slane %v1798, 7
        %v1801 = vshll.u32 %v1702, 16
        %v1803 = vor.u32 %v1800, %v1801
        %v1804 = vsel %vm1414, %v1796, %v1803
        %v1805 = vrot.slane %v1800, 4
        %v1807 = vshrl.u32 %v1703, 16
        %v1809 = vrot.slane %v1807, 7
        %v1810 = vshll.u32 %v1703, 16
        %v1812 = vor.u32 %v1809, %v1810
        %v1813 = vsel %vm1414, %v1805, %v1812
        %v1814 = vrot.slane %v1809, 4
        %v1816 = vshrl.u32 %v1704, 16
        %v1818 = vrot.slane %v1816, 7
        %v1819 = vshll.u32 %v1704, 16
        %v1821 = vor.u32 %v1818, %v1819
        %v1822 = vsel %vm1414, %v1814, %v1821
        %v1823 = vrot.slane %v1818, 4
        %v1825 = vshrl.u32 %v1705, 16
        %v1827 = vrot.slane %v1825, 7
        %v1828 = vshll.u32 %v1705, 16
        %v1830 = vor.u32 %v1827, %v1828
        %v1831 = vsel %vm1414, %v1823, %v1830
        %v1832 = vrot.slane %v1827, 4
        %v1834 = vshrl.u32 %v1706, 16
        %v1836 = vrot.slane %v1834, 7
        %v1837 = vshll.u32 %v1706, 16
        %v1839 = vor.u32 %v1836, %v1837
        %v1840 = vsel %vm1414, %v1832, %v1839
        %v1841 = vrot.slane %v1836, 4
        %v1843 = vshrl.u32 %v1707, 16
        %v1845 = vrot.slane %v1843, 7
        %v1846 = vshll.u32 %v1707, 16
        %v1848 = vor.u32 %v1845, %v1846
        %v1849 = vsel %vm1414, %v1841, %v1848
        %v1850 = vrot.slane %v1845, 4
        %v1851 = vunpack.c.l.b16 %v1714
        %v1852 = vunpack.c.h.b16 %v1714
        %v1853 = vunpack.c.l.b16 0
        %v1854 = vunpack.c.h.b16 0
        %vm1855 = vcmp.ne.s32.totalorder %v1851, %v1853
        %vm1856 = vcmp.ne.s32.totalorder %v1852, %v1854
        %vm1857 = vmpackc.low %vm1856, %vm1855
        %v1858 = vunpack.c.l.b16 %v1723
        %v1859 = vunpack.c.h.b16 %v1723
        %v1860 = vunpack.c.l.b16 0
        %v1861 = vunpack.c.h.b16 0
        %vm1862 = vcmp.ne.s32.totalorder %v1858, %v1860
        %vm1863 = vcmp.ne.s32.totalorder %v1859, %v1861
        %vm1864 = vmpackc.low %vm1863, %vm1862
        %v1865 = vunpack.c.l.b16 %v1732
        %v1866 = vunpack.c.h.b16 %v1732
        %v1867 = vunpack.c.l.b16 0
        %v1868 = vunpack.c.h.b16 0
        %vm1869 = vcmp.ne.s32.totalorder %v1865, %v1867
        %vm1870 = vcmp.ne.s32.totalorder %v1866, %v1868
        %vm1871 = vmpackc.low %vm1870, %vm1869
        %v1872 = vunpack.c.l.b16 %v1741
        %v1873 = vunpack.c.h.b16 %v1741
        %v1874 = vunpack.c.l.b16 0
        %v1875 = vunpack.c.h.b16 0
        %vm1876 = vcmp.ne.s32.totalorder %v1872, %v1874
        %vm1877 = vcmp.ne.s32.totalorder %v1873, %v1875
        %vm1878 = vmpackc.low %vm1877, %vm1876
        %v1879 = vunpack.c.l.b16 %v1750
        %v1880 = vunpack.c.h.b16 %v1750
        %v1881 = vunpack.c.l.b16 0
        %v1882 = vunpack.c.h.b16 0
        %vm1883 = vcmp.ne.s32.totalorder %v1879, %v1881
        %vm1884 = vcmp.ne.s32.totalorder %v1880, %v1882
        %vm1885 = vmpackc.low %vm1884, %vm1883
        %v1886 = vunpack.c.l.b16 %v1759
        %v1887 = vunpack.c.h.b16 %v1759
        %v1888 = vunpack.c.l.b16 0
        %v1889 = vunpack.c.h.b16 0
        %vm1890 = vcmp.ne.s32.totalorder %v1886, %v1888
        %vm1891 = vcmp.ne.s32.totalorder %v1887, %v1889
        %vm1892 = vmpackc.low %vm1891, %vm1890
        %v1893 = vunpack.c.l.b16 %v1768
        %v1894 = vunpack.c.h.b16 %v1768
        %v1895 = vunpack.c.l.b16 0
        %v1896 = vunpack.c.h.b16 0
        %vm1897 = vcmp.ne.s32.totalorder %v1893, %v1895
        %vm1898 = vcmp.ne.s32.totalorder %v1894, %v1896
        %vm1899 = vmpackc.low %vm1898, %vm1897
        %v1900 = vunpack.c.l.b16 %v1777
        %v1901 = vunpack.c.h.b16 %v1777
        %v1902 = vunpack.c.l.b16 0
        %v1903 = vunpack.c.h.b16 0
        %vm1904 = vcmp.ne.s32.totalorder %v1900, %v1902
        %vm1905 = vcmp.ne.s32.totalorder %v1901, %v1903
        %vm1906 = vmpackc.low %vm1905, %vm1904
        %v1907 = vunpack.c.l.b16 %v1786
        %v1908 = vunpack.c.h.b16 %v1786
        %v1909 = vunpack.c.l.b16 0
        %v1910 = vunpack.c.h.b16 0
        %vm1911 = vcmp.ne.s32.totalorder %v1907, %v1909
        %vm1912 = vcmp.ne.s32.totalorder %v1908, %v1910
        %vm1913 = vmpackc.low %vm1912, %vm1911
        %v1914 = vunpack.c.l.b16 %v1795
        %v1915 = vunpack.c.h.b16 %v1795
        %v1916 = vunpack.c.l.b16 0
        %v1917 = vunpack.c.h.b16 0
        %vm1918 = vcmp.ne.s32.totalorder %v1914, %v1916
        %vm1919 = vcmp.ne.s32.totalorder %v1915, %v1917
        %vm1920 = vmpackc.low %vm1919, %vm1918
        %v1921 = vunpack.c.l.b16 %v1804
        %v1922 = vunpack.c.h.b16 %v1804
        %v1923 = vunpack.c.l.b16 0
        %v1924 = vunpack.c.h.b16 0
        %vm1925 = vcmp.ne.s32.totalorder %v1921, %v1923
        %vm1926 = vcmp.ne.s32.totalorder %v1922, %v1924
        %vm1927 = vmpackc.low %vm1926, %vm1925
        %v1928 = vunpack.c.l.b16 %v1813
        %v1929 = vunpack.c.h.b16 %v1813
        %v1930 = vunpack.c.l.b16 0
        %v1931 = vunpack.c.h.b16 0
        %vm1932 = vcmp.ne.s32.totalorder %v1928, %v1930
        %vm1933 = vcmp.ne.s32.totalorder %v1929, %v1931
        %vm1934 = vmpackc.low %vm1933, %vm1932
        %v1935 = vunpack.c.l.b16 %v1822
        %v1936 = vunpack.c.h.b16 %v1822
        %v1937 = vunpack.c.l.b16 0
        %v1938 = vunpack.c.h.b16 0
        %vm1939 = vcmp.ne.s32.totalorder %v1935, %v1937
        %vm1940 = vcmp.ne.s32.totalorder %v1936, %v1938
        %vm1941 = vmpackc.low %vm1940, %vm1939
        %v1942 = vunpack.c.l.b16 %v1831
        %v1943 = vunpack.c.h.b16 %v1831
        %v1944 = vunpack.c.l.b16 0
        %v1945 = vunpack.c.h.b16 0
        %vm1946 = vcmp.ne.s32.totalorder %v1942, %v1944
        %vm1947 = vcmp.ne.s32.totalorder %v1943, %v1945
        %vm1948 = vmpackc.low %vm1947, %vm1946
        %v1949 = vunpack.c.l.b16 %v1840
        %v1950 = vunpack.c.h.b16 %v1840
        %v1951 = vunpack.c.l.b16 0
        %v1952 = vunpack.c.h.b16 0
        %vm1953 = vcmp.ne.s32.totalorder %v1949, %v1951
        %vm1954 = vcmp.ne.s32.totalorder %v1950, %v1952
        %vm1955 = vmpackc.low %vm1954, %vm1953
        %v1956 = vunpack.c.l.b16 %v1849
        %v1957 = vunpack.c.h.b16 %v1849
        %v1958 = vunpack.c.l.b16 0
        %v1959 = vunpack.c.h.b16 0
        %vm1960 = vcmp.ne.s32.totalorder %v1956, %v1958
        %vm1961 = vcmp.ne.s32.totalorder %v1957, %v1959
        %vm1962 = vmpackc.low %vm1961, %vm1960
        %v1963 = vunpack.c.l.b16 %v1850
        %v1964 = vunpack.c.h.b16 %v1850
        %v1965 = vunpack.c.l.b16 0
        %v1966 = vunpack.c.h.b16 0
        %vm1967 = vcmp.ne.s32.totalorder %v1963, %v1965
        %vm1968 = vcmp.ne.s32.totalorder %v1964, %v1966
        %vm1969 = vmpackc.low %vm1968, %vm1967
        %v1970 = vsel %vm1857, 0, %v1627
        %v1971 = vsel %vm1864, 0, %v1628
        %v1972 = vsel %vm1871, 0, %v1629
        %v1973 = vsel %vm1878, 0, %v1630
        %v1974 = vsel %vm1885, 0, %v1631
        %v1975 = vsel %vm1892, 0, %v1632
        %v1976 = vsel %vm1899, 0, %v1633
        %v1977 = vsel %vm1906, 0, %v1634
        %v1978 = vsel %vm1913, 0, %v1635
        %v1979 = vsel %vm1920, 0, %v1636
        %v1980 = vsel %vm1927, 0, %v1637
        %v1981 = vsel %vm1934, 0, %v1638
        %v1982 = vsel %vm1941, 0, %v1639
        %v1983 = vsel %vm1948, 0, %v1640
        %v1984 = vsel %vm1955, 0, %v1641
        %v1985 = vsel %vm1962, 0, %v1642
        %v1986 = vsel %vm1969, 0, %v1643
        %v1988 = vshrl.u32 %v1970, 16
        %v1990 = vrot.slane %v1988, 4
        %v1991 = vshll.u32 %v1970, 16
        %v1993 = vrot.slane %v1991, 5
        %v1994 = vor.u32 %v1990, %v1993
        %v1995 = vrot.slane %v1994, 4
        %v1997 = vshll.u32 %v1971, 16
        %v1999 = vrot.slane %v1997, 5
        %v2000 = vsel %vm1116, %v1995, %v1999
        %v2001 = vshrl.u32 %v1971, 16
        %v2003 = vrot.slane %v2001, 4
        %v2004 = vor.u32 %v2003, %v1999
        %v2005 = vrot.slane %v2004, 4
        %v2007 = vshll.u32 %v1972, 16
        %v2009 = vrot.slane %v2007, 5
        %v2010 = vsel %vm1116, %v2005, %v2009
        %v2011 = vshrl.u32 %v1972, 16
        %v2013 = vrot.slane %v2011, 4
        %v2014 = vor.u32 %v2013, %v2009
        %v2015 = vrot.slane %v2014, 4
        %v2017 = vshll.u32 %v1973, 16
        %v2019 = vrot.slane %v2017, 5
        %v2020 = vsel %vm1116, %v2015, %v2019
        %v2021 = vshrl.u32 %v1973, 16
        %v2023 = vrot.slane %v2021, 4
        %v2024 = vor.u32 %v2023, %v2019
        %v2025 = vrot.slane %v2024, 4
        %v2027 = vshll.u32 %v1974, 16
        %v2029 = vrot.slane %v2027, 5
        %v2030 = vsel %vm1116, %v2025, %v2029
        %v2031 = vshrl.u32 %v1974, 16
        %v2033 = vrot.slane %v2031, 4
        %v2034 = vor.u32 %v2033, %v2029
        %v2035 = vrot.slane %v2034, 4
        %v2037 = vshll.u32 %v1975, 16
        %v2039 = vrot.slane %v2037, 5
        %v2040 = vsel %vm1116, %v2035, %v2039
        %v2041 = vshrl.u32 %v1975, 16
        %v2043 = vrot.slane %v2041, 4
        %v2044 = vor.u32 %v2043, %v2039
        %v2045 = vrot.slane %v2044, 4
        %v2047 = vshll.u32 %v1976, 16
        %v2049 = vrot.slane %v2047, 5
        %v2050 = vsel %vm1116, %v2045, %v2049
        %v2051 = vshrl.u32 %v1976, 16
        %v2053 = vrot.slane %v2051, 4
        %v2054 = vor.u32 %v2053, %v2049
        %v2055 = vrot.slane %v2054, 4
        %v2057 = vshll.u32 %v1977, 16
        %v2059 = vrot.slane %v2057, 5
        %v2060 = vsel %vm1116, %v2055, %v2059
        %v2061 = vshrl.u32 %v1977, 16
        %v2063 = vrot.slane %v2061, 4
        %v2064 = vor.u32 %v2063, %v2059
        %v2065 = vrot.slane %v2064, 4
        %v2067 = vshll.u32 %v1978, 16
        %v2069 = vrot.slane %v2067, 5
        %v2070 = vsel %vm1116, %v2065, %v2069
        %v2071 = vshrl.u32 %v1978, 16
        %v2073 = vrot.slane %v2071, 4
        %v2074 = vor.u32 %v2073, %v2069
        %v2075 = vrot.slane %v2074, 4
        %v2077 = vshll.u32 %v1979, 16
        %v2079 = vrot.slane %v2077, 5
        %v2080 = vsel %vm1116, %v2075, %v2079
        %v2081 = vshrl.u32 %v1979, 16
        %v2083 = vrot.slane %v2081, 4
        %v2084 = vor.u32 %v2083, %v2079
        %v2085 = vrot.slane %v2084, 4
        %v2087 = vshll.u32 %v1980, 16
        %v2089 = vrot.slane %v2087, 5
        %v2090 = vsel %vm1116, %v2085, %v2089
        %v2091 = vshrl.u32 %v1980, 16
        %v2093 = vrot.slane %v2091, 4
        %v2094 = vor.u32 %v2093, %v2089
        %v2095 = vrot.slane %v2094, 4
        %v2097 = vshll.u32 %v1981, 16
        %v2099 = vrot.slane %v2097, 5
        %v2100 = vsel %vm1116, %v2095, %v2099
        %v2101 = vshrl.u32 %v1981, 16
        %v2103 = vrot.slane %v2101, 4
        %v2104 = vor.u32 %v2103, %v2099
        %v2105 = vrot.slane %v2104, 4
        %v2107 = vshll.u32 %v1982, 16
        %v2109 = vrot.slane %v2107, 5
        %v2110 = vsel %vm1116, %v2105, %v2109
        %v2111 = vshrl.u32 %v1982, 16
        %v2113 = vrot.slane %v2111, 4
        %v2114 = vor.u32 %v2113, %v2109
        %v2115 = vrot.slane %v2114, 4
        %v2117 = vshll.u32 %v1983, 16
        %v2119 = vrot.slane %v2117, 5
        %v2120 = vsel %vm1116, %v2115, %v2119
        %v2121 = vshrl.u32 %v1983, 16
        %v2123 = vrot.slane %v2121, 4
        %v2124 = vor.u32 %v2123, %v2119
        %v2125 = vrot.slane %v2124, 4
        %v2127 = vshll.u32 %v1984, 16
        %v2129 = vrot.slane %v2127, 5
        %v2130 = vsel %vm1116, %v2125, %v2129
        %v2131 = vshrl.u32 %v1984, 16
        %v2133 = vrot.slane %v2131, 4
        %v2134 = vor.u32 %v2133, %v2129
        %v2135 = vrot.slane %v2134, 4
        %v2137 = vshll.u32 %v1985, 16
        %v2139 = vrot.slane %v2137, 5
        %v2140 = vsel %vm1116, %v2135, %v2139
        %v2141 = vshrl.u32 %v1985, 16
        %v2143 = vrot.slane %v2141, 4
        %v2144 = vor.u32 %v2143, %v2139
        %v2145 = vrot.slane %v2144, 4
        %v2147 = vshll.u32 %v1986, 16
        %v2149 = vrot.slane %v2147, 5
        %v2150 = vsel %vm1116, %v2145, %v2149
        %2167 = vst [vmem:[#allocation6 + $0x8] sm:$0xf] %v2000
        %2168 = vst [vmem:[#allocation6 + $0x2c] sm:$0xf] %v2010
        %2169 = vst [vmem:[#allocation6 + $0x50] sm:$0xf] %v2020
        %2170 = vst [vmem:[#allocation6 + $0x74] sm:$0xf] %v2030
        %2171 = vst [vmem:[#allocation6 + $0x98] sm:$0xf] %v2040
        %2172 = vst [vmem:[#allocation6 + $0xbc] sm:$0xf] %v2050
        %2173 = vst [vmem:[#allocation6 + $0xe0] sm:$0xf] %v2060
        %2174 = vst [vmem:[#allocation6 + $0x104] sm:$0xf] %v2070
        %2175 = vst [vmem:[#allocation6 + $0x128] sm:$0xf] %v2080
        %2176 = vst [vmem:[#allocation6 + $0x14c] sm:$0xf] %v2090
        %2177 = vst [vmem:[#allocation6 + $0x170] sm:$0xf] %v2100
        %2178 = vst [vmem:[#allocation6 + $0x194] sm:$0xf] %v2110
        %2179 = vst [vmem:[#allocation6 + $0x1b8] sm:$0xf] %v2120
        %2180 = vst [vmem:[#allocation6 + $0x1dc] sm:$0xf] %v2130
        %2181 = vst [vmem:[#allocation6 + $0x200] sm:$0xf] %v2140
        %2182 = vst [vmem:[#allocation6 + $0x224] sm:$0xf] %v2150
        %v2183 = vld [vmem:[#allocation5 + $0x8] sm:$0x8]
        %v2184 = vld [vmem:[#allocation5 + $0xc] sm:$0xf]
        %v2185 = vld [vmem:[#allocation5 + $0x10] sm:$0xf]
        %v2186 = vld [vmem:[#allocation5 + $0x14] sm:$0xf]
        %v2187 = vld [vmem:[#allocation5 + $0x18] sm:$0xf]
        %v2188 = vld [vmem:[#allocation5 + $0x1c] sm:$0xf]
        %v2189 = vld [vmem:[#allocation5 + $0x20] sm:$0xf]
        %v2190 = vld [vmem:[#allocation5 + $0x24] sm:$0xf]
        %v2191 = vld [vmem:[#allocation5 + $0x28] sm:$0xf]
        %v2192 = vld [vmem:[#allocation5 + $0x2c] sm:$0xf]
        %v2193 = vld [vmem:[#allocation5 + $0x30] sm:$0xf]
        %v2194 = vld [vmem:[#allocation5 + $0x34] sm:$0xf]
        %v2195 = vld [vmem:[#allocation5 + $0x38] sm:$0xf]
        %v2196 = vld [vmem:[#allocation5 + $0x3c] sm:$0xf]
        %v2197 = vld [vmem:[#allocation5 + $0x40] sm:$0xf]
        %v2198 = vld [vmem:[#allocation5 + $0x44] sm:$0xf]
        %v2199 = vld [vmem:[#allocation5 + $0x48] sm:$0xf]
        %v2200 = vsel %vm1282, 0, %v2183
        %v2201 = vsel %vm1289, 0, %v2184
        %v2202 = vsel %vm1296, 0, %v2185
        %v2203 = vsel %vm1303, 0, %v2186
        %v2204 = vsel %vm1310, 0, %v2187
        %v2205 = vsel %vm1317, 0, %v2188
        %v2206 = vsel %vm1324, 0, %v2189
        %v2207 = vsel %vm1331, 0, %v2190
        %v2208 = vsel %vm1338, 0, %v2191
        %v2209 = vsel %vm1345, 0, %v2192
        %v2210 = vsel %vm1352, 0, %v2193
        %v2211 = vsel %vm1359, 0, %v2194
        %v2212 = vsel %vm1366, 0, %v2195
        %v2213 = vsel %vm1373, 0, %v2196
        %v2214 = vsel %vm1380, 0, %v2197
        %v2215 = vsel %vm1387, 0, %v2198
        %v2216 = vsel %vm1394, 0, %v2199
        %v2218 = vshrl.u32 %v2200, 16
        %v2220 = vrot.slane %v2218, 7
        %v2221 = vrot.slane %v2220, 4
        %v2223 = vshrl.u32 %v2201, 16
        %v2225 = vrot.slane %v2223, 7
        %v2226 = vshll.u32 %v2201, 16
        %v2228 = vor.u32 %v2225, %v2226
        %v2229 = vsel %vm1414, %v2221, %v2228
        %v2230 = vrot.slane %v2225, 4
        %v2232 = vshrl.u32 %v2202, 16
        %v2234 = vrot.slane %v2232, 7
        %v2235 = vshll.u32 %v2202, 16
        %v2237 = vor.u32 %v2234, %v2235
        %v2238 = vsel %vm1414, %v2230, %v2237
        %v2239 = vrot.slane %v2234, 4
        %v2241 = vshrl.u32 %v2203, 16
        %v2243 = vrot.slane %v2241, 7
        %v2244 = vshll.u32 %v2203, 16
        %v2246 = vor.u32 %v2243, %v2244
        %v2247 = vsel %vm1414, %v2239, %v2246
        %v2248 = vrot.slane %v2243, 4
        %v2250 = vshrl.u32 %v2204, 16
        %v2252 = vrot.slane %v2250, 7
        %v2253 = vshll.u32 %v2204, 16
        %v2255 = vor.u32 %v2252, %v2253
        %v2256 = vsel %vm1414, %v2248, %v2255
        %v2257 = vrot.slane %v2252, 4
        %v2259 = vshrl.u32 %v2205, 16
        %v2261 = vrot.slane %v2259, 7
        %v2262 = vshll.u32 %v2205, 16
        %v2264 = vor.u32 %v2261, %v2262
        %v2265 = vsel %vm1414, %v2257, %v2264
        %v2266 = vrot.slane %v2261, 4
        %v2268 = vshrl.u32 %v2206, 16
        %v2270 = vrot.slane %v2268, 7
        %v2271 = vshll.u32 %v2206, 16
        %v2273 = vor.u32 %v2270, %v2271
        %v2274 = vsel %vm1414, %v2266, %v2273
        %v2275 = vrot.slane %v2270, 4
        %v2277 = vshrl.u32 %v2207, 16
        %v2279 = vrot.slane %v2277, 7
        %v2280 = vshll.u32 %v2207, 16
        %v2282 = vor.u32 %v2279, %v2280
        %v2283 = vsel %vm1414, %v2275, %v2282
        %v2284 = vrot.slane %v2279, 4
        %v2286 = vshrl.u32 %v2208, 16
        %v2288 = vrot.slane %v2286, 7
        %v2289 = vshll.u32 %v2208, 16
        %v2291 = vor.u32 %v2288, %v2289
        %v2292 = vsel %vm1414, %v2284, %v2291
        %v2293 = vrot.slane %v2288, 4
        %v2295 = vshrl.u32 %v2209, 16
        %v2297 = vrot.slane %v2295, 7
        %v2298 = vshll.u32 %v2209, 16
        %v2300 = vor.u32 %v2297, %v2298
        %v2301 = vsel %vm1414, %v2293, %v2300
        %v2302 = vrot.slane %v2297, 4
        %v2304 = vshrl.u32 %v2210, 16
        %v2306 = vrot.slane %v2304, 7
        %v2307 = vshll.u32 %v2210, 16
        %v2309 = vor.u32 %v2306, %v2307
        %v2310 = vsel %vm1414, %v2302, %v2309
        %v2311 = vrot.slane %v2306, 4
        %v2313 = vshrl.u32 %v2211, 16
        %v2315 = vrot.slane %v2313, 7
        %v2316 = vshll.u32 %v2211, 16
        %v2318 = vor.u32 %v2315, %v2316
        %v2319 = vsel %vm1414, %v2311, %v2318
        %v2320 = vrot.slane %v2315, 4
        %v2322 = vshrl.u32 %v2212, 16
        %v2324 = vrot.slane %v2322, 7
        %v2325 = vshll.u32 %v2212, 16
        %v2327 = vor.u32 %v2324, %v2325
        %v2328 = vsel %vm1414, %v2320, %v2327
        %v2329 = vrot.slane %v2324, 4
        %v2331 = vshrl.u32 %v2213, 16
        %v2333 = vrot.slane %v2331, 7
        %v2334 = vshll.u32 %v2213, 16
        %v2336 = vor.u32 %v2333, %v2334
        %v2337 = vsel %vm1414, %v2329, %v2336
        %v2338 = vrot.slane %v2333, 4
        %v2340 = vshrl.u32 %v2214, 16
        %v2342 = vrot.slane %v2340, 7
        %v2343 = vshll.u32 %v2214, 16
        %v2345 = vor.u32 %v2342, %v2343
        %v2346 = vsel %vm1414, %v2338, %v2345
        %v2347 = vrot.slane %v2342, 4
        %v2349 = vshrl.u32 %v2215, 16
        %v2351 = vrot.slane %v2349, 7
        %v2352 = vshll.u32 %v2215, 16
        %v2354 = vor.u32 %v2351, %v2352
        %v2355 = vsel %vm1414, %v2347, %v2354
        %v2356 = vrot.slane %v2351, 4
        %v2358 = vshrl.u32 %v2216, 16
        %v2360 = vrot.slane %v2358, 7
        %v2361 = vshll.u32 %v2216, 16
        %v2363 = vor.u32 %v2360, %v2361
        %v2364 = vsel %vm1414, %v2356, %v2363
        %2381 = vst [vmem:[#allocation6 + $0xc] sm:$0xf] %v2229
        %2382 = vst [vmem:[#allocation6 + $0x30] sm:$0xf] %v2238
        %2383 = vst [vmem:[#allocation6 + $0x54] sm:$0xf] %v2247
        %2384 = vst [vmem:[#allocation6 + $0x78] sm:$0xf] %v2256
        %2385 = vst [vmem:[#allocation6 + $0x9c] sm:$0xf] %v2265
        %2386 = vst [vmem:[#allocation6 + $0xc0] sm:$0xf] %v2274
        %2387 = vst [vmem:[#allocation6 + $0xe4] sm:$0xf] %v2283
        %2388 = vst [vmem:[#allocation6 + $0x108] sm:$0xf] %v2292
        %2389 = vst [vmem:[#allocation6 + $0x12c] sm:$0xf] %v2301
        %2390 = vst [vmem:[#allocation6 + $0x150] sm:$0xf] %v2310
        %2391 = vst [vmem:[#allocation6 + $0x174] sm:$0xf] %v2319
        %2392 = vst [vmem:[#allocation6 + $0x198] sm:$0xf] %v2328
        %2393 = vst [vmem:[#allocation6 + $0x1bc] sm:$0xf] %v2337
        %2394 = vst [vmem:[#allocation6 + $0x1e0] sm:$0xf] %v2346
        %2395 = vst [vmem:[#allocation6 + $0x204] sm:$0xf] %v2355
        %2396 = vst [vmem:[#allocation6 + $0x228] sm:$0xf] %v2364
        %v2397 = vld [vmem:[#allocation5 + $0xc] sm:$0xf]
        %v2398 = vld [vmem:[#allocation5 + $0x10] sm:$0xf]
        %v2399 = vld [vmem:[#allocation5 + $0x14] sm:$0xf]
        %v2400 = vld [vmem:[#allocation5 + $0x18] sm:$0xf]
        %v2401 = vld [vmem:[#allocation5 + $0x1c] sm:$0xf]
        %v2402 = vld [vmem:[#allocation5 + $0x20] sm:$0xf]
        %v2403 = vld [vmem:[#allocation5 + $0x24] sm:$0xf]
        %v2404 = vld [vmem:[#allocation5 + $0x28] sm:$0xf]
        %v2405 = vld [vmem:[#allocation5 + $0x2c] sm:$0xf]
        %v2406 = vld [vmem:[#allocation5 + $0x30] sm:$0xf]
        %v2407 = vld [vmem:[#allocation5 + $0x34] sm:$0xf]
        %v2408 = vld [vmem:[#allocation5 + $0x38] sm:$0xf]
        %v2409 = vld [vmem:[#allocation5 + $0x3c] sm:$0xf]
        %v2410 = vld [vmem:[#allocation5 + $0x40] sm:$0xf]
        %v2411 = vld [vmem:[#allocation5 + $0x44] sm:$0xf]
        %v2412 = vld [vmem:[#allocation5 + $0x48] sm:$0xf]
        %2413 = vst [vmem:[#allocation6 + $0x10] sm:$0xf] %v2397
        %2414 = vst [vmem:[#allocation6 + $0x34] sm:$0xf] %v2398
        %2415 = vst [vmem:[#allocation6 + $0x58] sm:$0xf] %v2399
        %2416 = vst [vmem:[#allocation6 + $0x7c] sm:$0xf] %v2400
        %2417 = vst [vmem:[#allocation6 + $0xa0] sm:$0xf] %v2401
        %2418 = vst [vmem:[#allocation6 + $0xc4] sm:$0xf] %v2402
        %2419 = vst [vmem:[#allocation6 + $0xe8] sm:$0xf] %v2403
        %2420 = vst [vmem:[#allocation6 + $0x10c] sm:$0xf] %v2404
        %2421 = vst [vmem:[#allocation6 + $0x130] sm:$0xf] %v2405
        %2422 = vst [vmem:[#allocation6 + $0x154] sm:$0xf] %v2406
        %2423 = vst [vmem:[#allocation6 + $0x178] sm:$0xf] %v2407
        %2424 = vst [vmem:[#allocation6 + $0x19c] sm:$0xf] %v2408
        %2425 = vst [vmem:[#allocation6 + $0x1c0] sm:$0xf] %v2409
        %2426 = vst [vmem:[#allocation6 + $0x1e4] sm:$0xf] %v2410
        %2427 = vst [vmem:[#allocation6 + $0x208] sm:$0xf] %v2411
        %2428 = vst [vmem:[#allocation6 + $0x22c] sm:$0xf] %v2412
        %p2429 = scmp.lt.s32.totalorder %s35, 2
        // Predicated region
        $region101: #{tpu_custom_call.1} parent=59 // pred_check
          %p2430 = pneg %p2429
        $region102: #{tpu_custom_call.1} parent=59 // pred_check_branch
          %2432 = sbr.rel (%p2430) target = $region104
        $region103: #{tpu_custom_call.1} parent=59 // pred_region
          %s2433 = smul.u32 %s455, 2
          %s2434 = smul.addr %s2433, 4
          %s2435 = scalar_lea.vmem [#allocation2], %s2434
          %s2436 = scalar_lea.sflag [#allocation3], %s455
          %s2437 = smul.u32 4, 2
          %s2438 = smul.u32 %s2437, 1
          %s2439 = sshll.u32 %s2438, 4
          %2440 = dma.done %s2436, %s2439
          %v2441 = vld [vmem:[%s2435] sm:$0xf]
          %v2442 = vld [vmem:[%s2435 + $0x4] sm:$0xf]
          %v2443 = vld [vmem:[#allocation10] sm:$0xf]
          %v2444 = vld [vmem:[#allocation10 + $0x4] sm:$0xf]
          %v2445 = vld [vmem:[#allocation10 + $0x8] sm:$0xf]
          %v2446 = vld [vmem:[#allocation10 + $0xc] sm:$0xf]
          %v2447 = vld [vmem:[#allocation10 + $0x10] sm:$0xf]
          %v2448 = vld [vmem:[#allocation10 + $0x14] sm:$0xf]
          %v2449 = vld [vmem:[#allocation10 + $0x18] sm:$0xf]
          %v2450 = vld [vmem:[#allocation10 + $0x1c] sm:$0xf]
          %v2451 = vld [vmem:[#allocation10 + $0x20] sm:$0xf]
          %v2452 = vld [vmem:[#allocation10 + $0x24] sm:$0xf]
          %v2453 = vld [vmem:[#allocation10 + $0x28] sm:$0xf]
          %v2454 = vld [vmem:[#allocation10 + $0x2c] sm:$0xf]
          %v2455 = vld [vmem:[#allocation10 + $0x30] sm:$0xf]
          %v2456 = vld [vmem:[#allocation10 + $0x34] sm:$0xf]
          %v2457 = vld [vmem:[#allocation10 + $0x38] sm:$0xf]
          %v2458 = vld [vmem:[#allocation10 + $0x3c] sm:$0xf]
          %v2461 = vunpack.c.l.b16 %v2441
          %v2462 = vunpack.c.l.b16 %v2442
          %v2463 = vpack.c.b16 %v2462, %v2461
          %v2481 = vunpack.c.l.b16 %v2443
          %v2482 = vunpack.c.l.b16 %v2444
          %v2483 = vunpack.c.l.b16 %v2445
          %v2484 = vunpack.c.l.b16 %v2446
          %v2485 = vunpack.c.l.b16 %v2447
          %v2486 = vunpack.c.l.b16 %v2448
          %v2487 = vunpack.c.l.b16 %v2449
          %v2488 = vunpack.c.l.b16 %v2450
          %v2489 = vunpack.c.l.b16 %v2451
          %v2490 = vunpack.c.l.b16 %v2452
          %v2491 = vunpack.c.l.b16 %v2453
          %v2492 = vunpack.c.l.b16 %v2454
          %v2493 = vunpack.c.l.b16 %v2455
          %v2494 = vunpack.c.l.b16 %v2456
          %v2495 = vunpack.c.l.b16 %v2457
          %v2496 = vunpack.c.l.b16 %v2458
          %v2497 = vpack.c.b16 %v2482, %v2481
          %v2498 = vpack.c.b16 %v2484, %v2483
          %v2499 = vpack.c.b16 %v2486, %v2485
          %v2500 = vpack.c.b16 %v2488, %v2487
          %v2501 = vpack.c.b16 %v2490, %v2489
          %v2502 = vpack.c.b16 %v2492, %v2491
          %v2503 = vpack.c.b16 %v2494, %v2493
          %v2504 = vpack.c.b16 %v2496, %v2495
          %2513 = vmatpush.bf16.msra.mxu0 %v2504
          %2514 = vmatpush.bf16.msra.mxu0 %v2503
          %2515 = vmatpush.bf16.msra.mxu0 %v2502
          %2516 = vmatpush.bf16.msra.mxu0 %v2501
          %2517 = vmatpush.bf16.msra.mxu0 %v2500
          %2518 = vmatpush.bf16.msra.mxu0 %v2499
          %2519 = vmatpush.bf16.msra.mxu0 %v2498
          %2520 = vmatpush.bf16.msra.mxu0 %v2497
          %2521 = vmatmul.bf16.gmra.mxu0 %v2463
          %v2522 = vpop.f32.mrf.mxu0
          %v2523 = vadd.f32 0.0, %v2522
          %v2524 = vpop.f32.mrf.mxu0
          %v2525 = vadd.f32 0.0, %v2524
          %2526 = vdwg.mxu0
          %v2527 = vld [vmem:[%s5] sm:$0x1]
          %v2529 = vperm.slane %v2527, 0
          %v2531 = vmul.f32 %v2523, %v2529
          %v2532 = vmul.f32 %v2525, %v2529
          %v2533 = vld [vmem:[%s6] sm:$0x1]
          %v2535 = vperm.slane %v2533, 0
          %v2537 = vadd.f32 %v2531, %v2535
          %v2538 = vadd.f32 %v2532, %v2535
          %v2539 = vmax.f32 %v2537, 0.0
          %v2540 = vmax.f32 %v2538, 0.0
          %v2541 = vpack.c.bf16 %v2539, %v2539
          %v2542 = vpack.c.bf16 %v2540, %v2540
          %2543 = vst [vmem:[#allocation5 + $0x4c] sm:$0xf] %v2541
          %2544 = vst [vmem:[#allocation5 + $0x50] sm:$0xf] %v2542
        $region104: #{tpu_custom_call.1} parent=59 // pred_fallthru
          _
        %p2545 = scmp.eq.s32.totalorder %s35, 2
        // Predicated region
        $region105: #{tpu_custom_call.1} parent=59 // pred_check
          %p2546 = pneg %p2545
        $region106: #{tpu_custom_call.1} parent=59 // pred_check_branch
          %2548 = sbr.rel (%p2546) target = $region108
        $region107: #{tpu_custom_call.1} parent=59 // pred_region
          %2549 = vst [vmem:[#allocation5 + $0x4c] sm:$0xf] 0
          %2550 = vst [vmem:[#allocation5 + $0x50] sm:$0xf] 0
        $region108: #{tpu_custom_call.1} parent=59 // pred_fallthru
          _
        %v2551 = vld [vmem:[#allocation5 + $0xc] sm:$0xf]
        %v2552 = vld [vmem:[#allocation5 + $0x10] sm:$0xf]
        %v2553 = vld [vmem:[#allocation5 + $0x14] sm:$0xf]
        %v2554 = vld [vmem:[#allocation5 + $0x18] sm:$0xf]
        %v2555 = vld [vmem:[#allocation5 + $0x1c] sm:$0xf]
        %v2556 = vld [vmem:[#allocation5 + $0x20] sm:$0xf]
        %v2557 = vld [vmem:[#allocation5 + $0x24] sm:$0xf]
        %v2558 = vld [vmem:[#allocation5 + $0x28] sm:$0xf]
        %v2559 = vld [vmem:[#allocation5 + $0x2c] sm:$0xf]
        %v2560 = vld [vmem:[#allocation5 + $0x30] sm:$0xf]
        %v2561 = vld [vmem:[#allocation5 + $0x34] sm:$0xf]
        %v2562 = vld [vmem:[#allocation5 + $0x38] sm:$0xf]
        %v2563 = vld [vmem:[#allocation5 + $0x3c] sm:$0xf]
        %v2564 = vld [vmem:[#allocation5 + $0x40] sm:$0xf]
        %v2565 = vld [vmem:[#allocation5 + $0x44] sm:$0xf]
        %v2566 = vld [vmem:[#allocation5 + $0x48] sm:$0xf]
        %v2567 = vld [vmem:[#allocation5 + $0x4c] sm:$0x1]
        %v2568 = vsel %vm1857, 0, %v2551
        %v2569 = vsel %vm1864, 0, %v2552
        %v2570 = vsel %vm1871, 0, %v2553
        %v2571 = vsel %vm1878, 0, %v2554
        %v2572 = vsel %vm1885, 0, %v2555
        %v2573 = vsel %vm1892, 0, %v2556
        %v2574 = vsel %vm1899, 0, %v2557
        %v2575 = vsel %vm1906, 0, %v2558
        %v2576 = vsel %vm1913, 0, %v2559
        %v2577 = vsel %vm1920, 0, %v2560
        %v2578 = vsel %vm1927, 0, %v2561
        %v2579 = vsel %vm1934, 0, %v2562
        %v2580 = vsel %vm1941, 0, %v2563
        %v2581 = vsel %vm1948, 0, %v2564
        %v2582 = vsel %vm1955, 0, %v2565
        %v2583 = vsel %vm1962, 0, %v2566
        %v2584 = vsel %vm1969, 0, %v2567
        %v2586 = vshrl.u32 %v2568, 16
        %v2588 = vrot.slane %v2586, 4
        %v2589 = vshll.u32 %v2568, 16
        %v2591 = vrot.slane %v2589, 5
        %v2592 = vor.u32 %v2588, %v2591
        %v2593 = vrot.slane %v2592, 4
        %v2595 = vshll.u32 %v2569, 16
        %v2597 = vrot.slane %v2595, 5
        %v2598 = vsel %vm1116, %v2593, %v2597
        %v2599 = vshrl.u32 %v2569, 16
        %v2601 = vrot.slane %v2599, 4
        %v2602 = vor.u32 %v2601, %v2597
        %v2603 = vrot.slane %v2602, 4
        %v2605 = vshll.u32 %v2570, 16
        %v2607 = vrot.slane %v2605, 5
        %v2608 = vsel %vm1116, %v2603, %v2607
        %v2609 = vshrl.u32 %v2570, 16
        %v2611 = vrot.slane %v2609, 4
        %v2612 = vor.u32 %v2611, %v2607
        %v2613 = vrot.slane %v2612, 4
        %v2615 = vshll.u32 %v2571, 16
        %v2617 = vrot.slane %v2615, 5
        %v2618 = vsel %vm1116, %v2613, %v2617
        %v2619 = vshrl.u32 %v2571, 16
        %v2621 = vrot.slane %v2619, 4
        %v2622 = vor.u32 %v2621, %v2617
        %v2623 = vrot.slane %v2622, 4
        %v2625 = vshll.u32 %v2572, 16
        %v2627 = vrot.slane %v2625, 5
        %v2628 = vsel %vm1116, %v2623, %v2627
        %v2629 = vshrl.u32 %v2572, 16
        %v2631 = vrot.slane %v2629, 4
        %v2632 = vor.u32 %v2631, %v2627
        %v2633 = vrot.slane %v2632, 4
        %v2635 = vshll.u32 %v2573, 16
        %v2637 = vrot.slane %v2635, 5
        %v2638 = vsel %vm1116, %v2633, %v2637
        %v2639 = vshrl.u32 %v2573, 16
        %v2641 = vrot.slane %v2639, 4
        %v2642 = vor.u32 %v2641, %v2637
        %v2643 = vrot.slane %v2642, 4
        %v2645 = vshll.u32 %v2574, 16
        %v2647 = vrot.slane %v2645, 5
        %v2648 = vsel %vm1116, %v2643, %v2647
        %v2649 = vshrl.u32 %v2574, 16
        %v2651 = vrot.slane %v2649, 4
        %v2652 = vor.u32 %v2651, %v2647
        %v2653 = vrot.slane %v2652, 4
        %v2655 = vshll.u32 %v2575, 16
        %v2657 = vrot.slane %v2655, 5
        %v2658 = vsel %vm1116, %v2653, %v2657
        %v2659 = vshrl.u32 %v2575, 16
        %v2661 = vrot.slane %v2659, 4
        %v2662 = vor.u32 %v2661, %v2657
        %v2663 = vrot.slane %v2662, 4
        %v2665 = vshll.u32 %v2576, 16
        %v2667 = vrot.slane %v2665, 5
        %v2668 = vsel %vm1116, %v2663, %v2667
        %v2669 = vshrl.u32 %v2576, 16
        %v2671 = vrot.slane %v2669, 4
        %v2672 = vor.u32 %v2671, %v2667
        %v2673 = vrot.slane %v2672, 4
        %v2675 = vshll.u32 %v2577, 16
        %v2677 = vrot.slane %v2675, 5
        %v2678 = vsel %vm1116, %v2673, %v2677
        %v2679 = vshrl.u32 %v2577, 16
        %v2681 = vrot.slane %v2679, 4
        %v2682 = vor.u32 %v2681, %v2677
        %v2683 = vrot.slane %v2682, 4
        %v2685 = vshll.u32 %v2578, 16
        %v2687 = vrot.slane %v2685, 5
        %v2688 = vsel %vm1116, %v2683, %v2687
        %v2689 = vshrl.u32 %v2578, 16
        %v2691 = vrot.slane %v2689, 4
        %v2692 = vor.u32 %v2691, %v2687
        %v2693 = vrot.slane %v2692, 4
        %v2695 = vshll.u32 %v2579, 16
        %v2697 = vrot.slane %v2695, 5
        %v2698 = vsel %vm1116, %v2693, %v2697
        %v2699 = vshrl.u32 %v2579, 16
        %v2701 = vrot.slane %v2699, 4
        %v2702 = vor.u32 %v2701, %v2697
        %v2703 = vrot.slane %v2702, 4
        %v2705 = vshll.u32 %v2580, 16
        %v2707 = vrot.slane %v2705, 5
        %v2708 = vsel %vm1116, %v2703, %v2707
        %v2709 = vshrl.u32 %v2580, 16
        %v2711 = vrot.slane %v2709, 4
        %v2712 = vor.u32 %v2711, %v2707
        %v2713 = vrot.slane %v2712, 4
        %v2715 = vshll.u32 %v2581, 16
        %v2717 = vrot.slane %v2715, 5
        %v2718 = vsel %vm1116, %v2713, %v2717
        %v2719 = vshrl.u32 %v2581, 16
        %v2721 = vrot.slane %v2719, 4
        %v2722 = vor.u32 %v2721, %v2717
        %v2723 = vrot.slane %v2722, 4
        %v2725 = vshll.u32 %v2582, 16
        %v2727 = vrot.slane %v2725, 5
        %v2728 = vsel %vm1116, %v2723, %v2727
        %v2729 = vshrl.u32 %v2582, 16
        %v2731 = vrot.slane %v2729, 4
        %v2732 = vor.u32 %v2731, %v2727
        %v2733 = vrot.slane %v2732, 4
        %v2735 = vshll.u32 %v2583, 16
        %v2737 = vrot.slane %v2735, 5
        %v2738 = vsel %vm1116, %v2733, %v2737
        %v2739 = vshrl.u32 %v2583, 16
        %v2741 = vrot.slane %v2739, 4
        %v2742 = vor.u32 %v2741, %v2737
        %v2743 = vrot.slane %v2742, 4
        %v2745 = vshll.u32 %v2584, 16
        %v2747 = vrot.slane %v2745, 5
        %v2748 = vsel %vm1116, %v2743, %v2747
        %2765 = vst [vmem:[#allocation6 + $0x14] sm:$0xf] %v2598
        %2766 = vst [vmem:[#allocation6 + $0x38] sm:$0xf] %v2608
        %2767 = vst [vmem:[#allocation6 + $0x5c] sm:$0xf] %v2618
        %2768 = vst [vmem:[#allocation6 + $0x80] sm:$0xf] %v2628
        %2769 = vst [vmem:[#allocation6 + $0xa4] sm:$0xf] %v2638
        %2770 = vst [vmem:[#allocation6 + $0xc8] sm:$0xf] %v2648
        %2771 = vst [vmem:[#allocation6 + $0xec] sm:$0xf] %v2658
        %2772 = vst [vmem:[#allocation6 + $0x110] sm:$0xf] %v2668
        %2773 = vst [vmem:[#allocation6 + $0x134] sm:$0xf] %v2678
        %2774 = vst [vmem:[#allocation6 + $0x158] sm:$0xf] %v2688
        %2775 = vst [vmem:[#allocation6 + $0x17c] sm:$0xf] %v2698
        %2776 = vst [vmem:[#allocation6 + $0x1a0] sm:$0xf] %v2708
        %2777 = vst [vmem:[#allocation6 + $0x1c4] sm:$0xf] %v2718
        %2778 = vst [vmem:[#allocation6 + $0x1e8] sm:$0xf] %v2728
        %2779 = vst [vmem:[#allocation6 + $0x20c] sm:$0xf] %v2738
        %2780 = vst [vmem:[#allocation6 + $0x230] sm:$0xf] %v2748
        %v2781 = vld [vmem:[#allocation5 + $0x10] sm:$0x8]
        %v2782 = vld [vmem:[#allocation5 + $0x14] sm:$0xf]
        %v2783 = vld [vmem:[#allocation5 + $0x18] sm:$0xf]
        %v2784 = vld [vmem:[#allocation5 + $0x1c] sm:$0xf]
        %v2785 = vld [vmem:[#allocation5 + $0x20] sm:$0xf]
        %v2786 = vld [vmem:[#allocation5 + $0x24] sm:$0xf]
        %v2787 = vld [vmem:[#allocation5 + $0x28] sm:$0xf]
        %v2788 = vld [vmem:[#allocation5 + $0x2c] sm:$0xf]
        %v2789 = vld [vmem:[#allocation5 + $0x30] sm:$0xf]
        %v2790 = vld [vmem:[#allocation5 + $0x34] sm:$0xf]
        %v2791 = vld [vmem:[#allocation5 + $0x38] sm:$0xf]
        %v2792 = vld [vmem:[#allocation5 + $0x3c] sm:$0xf]
        %v2793 = vld [vmem:[#allocation5 + $0x40] sm:$0xf]
        %v2794 = vld [vmem:[#allocation5 + $0x44] sm:$0xf]
        %v2795 = vld [vmem:[#allocation5 + $0x48] sm:$0xf]
        %v2796 = vld [vmem:[#allocation5 + $0x4c] sm:$0xf]
        %v2797 = vld [vmem:[#allocation5 + $0x50] sm:$0xf]
        %v2798 = vsel %vm1282, 0, %v2781
        %v2799 = vsel %vm1289, 0, %v2782
        %v2800 = vsel %vm1296, 0, %v2783
        %v2801 = vsel %vm1303, 0, %v2784
        %v2802 = vsel %vm1310, 0, %v2785
        %v2803 = vsel %vm1317, 0, %v2786
        %v2804 = vsel %vm1324, 0, %v2787
        %v2805 = vsel %vm1331, 0, %v2788
        %v2806 = vsel %vm1338, 0, %v2789
        %v2807 = vsel %vm1345, 0, %v2790
        %v2808 = vsel %vm1352, 0, %v2791
        %v2809 = vsel %vm1359, 0, %v2792
        %v2810 = vsel %vm1366, 0, %v2793
        %v2811 = vsel %vm1373, 0, %v2794
        %v2812 = vsel %vm1380, 0, %v2795
        %v2813 = vsel %vm1387, 0, %v2796
        %v2814 = vsel %vm1394, 0, %v2797
        %v2816 = vshrl.u32 %v2798, 16
        %v2818 = vrot.slane %v2816, 7
        %v2819 = vrot.slane %v2818, 4
        %v2821 = vshrl.u32 %v2799, 16
        %v2823 = vrot.slane %v2821, 7
        %v2824 = vshll.u32 %v2799, 16
        %v2826 = vor.u32 %v2823, %v2824
        %v2827 = vsel %vm1414, %v2819, %v2826
        %v2828 = vrot.slane %v2823, 4
        %v2830 = vshrl.u32 %v2800, 16
        %v2832 = vrot.slane %v2830, 7
        %v2833 = vshll.u32 %v2800, 16
        %v2835 = vor.u32 %v2832, %v2833
        %v2836 = vsel %vm1414, %v2828, %v2835
        %v2837 = vrot.slane %v2832, 4
        %v2839 = vshrl.u32 %v2801, 16
        %v2841 = vrot.slane %v2839, 7
        %v2842 = vshll.u32 %v2801, 16
        %v2844 = vor.u32 %v2841, %v2842
        %v2845 = vsel %vm1414, %v2837, %v2844
        %v2846 = vrot.slane %v2841, 4
        %v2848 = vshrl.u32 %v2802, 16
        %v2850 = vrot.slane %v2848, 7
        %v2851 = vshll.u32 %v2802, 16
        %v2853 = vor.u32 %v2850, %v2851
        %v2854 = vsel %vm1414, %v2846, %v2853
        %v2855 = vrot.slane %v2850, 4
        %v2857 = vshrl.u32 %v2803, 16
        %v2859 = vrot.slane %v2857, 7
        %v2860 = vshll.u32 %v2803, 16
        %v2862 = vor.u32 %v2859, %v2860
        %v2863 = vsel %vm1414, %v2855, %v2862
        %v2864 = vrot.slane %v2859, 4
        %v2866 = vshrl.u32 %v2804, 16
        %v2868 = vrot.slane %v2866, 7
        %v2869 = vshll.u32 %v2804, 16
        %v2871 = vor.u32 %v2868, %v2869
        %v2872 = vsel %vm1414, %v2864, %v2871
        %v2873 = vrot.slane %v2868, 4
        %v2875 = vshrl.u32 %v2805, 16
        %v2877 = vrot.slane %v2875, 7
        %v2878 = vshll.u32 %v2805, 16
        %v2880 = vor.u32 %v2877, %v2878
        %v2881 = vsel %vm1414, %v2873, %v2880
        %v2882 = vrot.slane %v2877, 4
        %v2884 = vshrl.u32 %v2806, 16
        %v2886 = vrot.slane %v2884, 7
        %v2887 = vshll.u32 %v2806, 16
        %v2889 = vor.u32 %v2886, %v2887
        %v2890 = vsel %vm1414, %v2882, %v2889
        %v2891 = vrot.slane %v2886, 4
        %v2893 = vshrl.u32 %v2807, 16
        %v2895 = vrot.slane %v2893, 7
        %v2896 = vshll.u32 %v2807, 16
        %v2898 = vor.u32 %v2895, %v2896
        %v2899 = vsel %vm1414, %v2891, %v2898
        %v2900 = vrot.slane %v2895, 4
        %v2902 = vshrl.u32 %v2808, 16
        %v2904 = vrot.slane %v2902, 7
        %v2905 = vshll.u32 %v2808, 16
        %v2907 = vor.u32 %v2904, %v2905
        %v2908 = vsel %vm1414, %v2900, %v2907
        %v2909 = vrot.slane %v2904, 4
        %v2911 = vshrl.u32 %v2809, 16
        %v2913 = vrot.slane %v2911, 7
        %v2914 = vshll.u32 %v2809, 16
        %v2916 = vor.u32 %v2913, %v2914
        %v2917 = vsel %vm1414, %v2909, %v2916
        %v2918 = vrot.slane %v2913, 4
        %v2920 = vshrl.u32 %v2810, 16
        %v2922 = vrot.slane %v2920, 7
        %v2923 = vshll.u32 %v2810, 16
        %v2925 = vor.u32 %v2922, %v2923
        %v2926 = vsel %vm1414, %v2918, %v2925
        %v2927 = vrot.slane %v2922, 4
        %v2929 = vshrl.u32 %v2811, 16
        %v2931 = vrot.slane %v2929, 7
        %v2932 = vshll.u32 %v2811, 16
        %v2934 = vor.u32 %v2931, %v2932
        %v2935 = vsel %vm1414, %v2927, %v2934
        %v2936 = vrot.slane %v2931, 4
        %v2938 = vshrl.u32 %v2812, 16
        %v2940 = vrot.slane %v2938, 7
        %v2941 = vshll.u32 %v2812, 16
        %v2943 = vor.u32 %v2940, %v2941
        %v2944 = vsel %vm1414, %v2936, %v2943
        %v2945 = vrot.slane %v2940, 4
        %v2947 = vshrl.u32 %v2813, 16
        %v2949 = vrot.slane %v2947, 7
        %v2950 = vshll.u32 %v2813, 16
        %v2952 = vor.u32 %v2949, %v2950
        %v2953 = vsel %vm1414, %v2945, %v2952
        %v2954 = vrot.slane %v2949, 4
        %v2956 = vshrl.u32 %v2814, 16
        %v2958 = vrot.slane %v2956, 7
        %v2959 = vshll.u32 %v2814, 16
        %v2961 = vor.u32 %v2958, %v2959
        %v2962 = vsel %vm1414, %v2954, %v2961
        %2979 = vst [vmem:[#allocation6 + $0x18] sm:$0xf] %v2827
        %2980 = vst [vmem:[#allocation6 + $0x3c] sm:$0xf] %v2836
        %2981 = vst [vmem:[#allocation6 + $0x60] sm:$0xf] %v2845
        %2982 = vst [vmem:[#allocation6 + $0x84] sm:$0xf] %v2854
        %2983 = vst [vmem:[#allocation6 + $0xa8] sm:$0xf] %v2863
        %2984 = vst [vmem:[#allocation6 + $0xcc] sm:$0xf] %v2872
        %2985 = vst [vmem:[#allocation6 + $0xf0] sm:$0xf] %v2881
        %2986 = vst [vmem:[#allocation6 + $0x114] sm:$0xf] %v2890
        %2987 = vst [vmem:[#allocation6 + $0x138] sm:$0xf] %v2899
        %2988 = vst [vmem:[#allocation6 + $0x15c] sm:$0xf] %v2908
        %2989 = vst [vmem:[#allocation6 + $0x180] sm:$0xf] %v2917
        %2990 = vst [vmem:[#allocation6 + $0x1a4] sm:$0xf] %v2926
        %2991 = vst [vmem:[#allocation6 + $0x1c8] sm:$0xf] %v2935
        %2992 = vst [vmem:[#allocation6 + $0x1ec] sm:$0xf] %v2944
        %2993 = vst [vmem:[#allocation6 + $0x210] sm:$0xf] %v2953
        %2994 = vst [vmem:[#allocation6 + $0x234] sm:$0xf] %v2962
        %v2995 = vld [vmem:[#allocation5 + $0x14] sm:$0xf]
        %v2996 = vld [vmem:[#allocation5 + $0x18] sm:$0xf]
        %v2997 = vld [vmem:[#allocation5 + $0x1c] sm:$0xf]
        %v2998 = vld [vmem:[#allocation5 + $0x20] sm:$0xf]
        %v2999 = vld [vmem:[#allocation5 + $0x24] sm:$0xf]
        %v3000 = vld [vmem:[#allocation5 + $0x28] sm:$0xf]
        %v3001 = vld [vmem:[#allocation5 + $0x2c] sm:$0xf]
        %v3002 = vld [vmem:[#allocation5 + $0x30] sm:$0xf]
        %v3003 = vld [vmem:[#allocation5 + $0x34] sm:$0xf]
        %v3004 = vld [vmem:[#allocation5 + $0x38] sm:$0xf]
        %v3005 = vld [vmem:[#allocation5 + $0x3c] sm:$0xf]
        %v3006 = vld [vmem:[#allocation5 + $0x40] sm:$0xf]
        %v3007 = vld [vmem:[#allocation5 + $0x44] sm:$0xf]
        %v3008 = vld [vmem:[#allocation5 + $0x48] sm:$0xf]
        %v3009 = vld [vmem:[#allocation5 + $0x4c] sm:$0xf]
        %v3010 = vld [vmem:[#allocation5 + $0x50] sm:$0xf]
        %3011 = vst [vmem:[#allocation6 + $0x1c] sm:$0xf] %v2995
        %3012 = vst [vmem:[#allocation6 + $0x40] sm:$0xf] %v2996
        %3013 = vst [vmem:[#allocation6 + $0x64] sm:$0xf] %v2997
        %3014 = vst [vmem:[#allocation6 + $0x88] sm:$0xf] %v2998
        %3015 = vst [vmem:[#allocation6 + $0xac] sm:$0xf] %v2999
        %3016 = vst [vmem:[#allocation6 + $0xd0] sm:$0xf] %v3000
        %3017 = vst [vmem:[#allocation6 + $0xf4] sm:$0xf] %v3001
        %3018 = vst [vmem:[#allocation6 + $0x118] sm:$0xf] %v3002
        %3019 = vst [vmem:[#allocation6 + $0x13c] sm:$0xf] %v3003
        %3020 = vst [vmem:[#allocation6 + $0x160] sm:$0xf] %v3004
        %3021 = vst [vmem:[#allocation6 + $0x184] sm:$0xf] %v3005
        %3022 = vst [vmem:[#allocation6 + $0x1a8] sm:$0xf] %v3006
        %3023 = vst [vmem:[#allocation6 + $0x1cc] sm:$0xf] %v3007
        %3024 = vst [vmem:[#allocation6 + $0x1f0] sm:$0xf] %v3008
        %3025 = vst [vmem:[#allocation6 + $0x214] sm:$0xf] %v3009
        %3026 = vst [vmem:[#allocation6 + $0x238] sm:$0xf] %v3010
        %v3027 = vld [vmem:[#allocation5 + $0x14] sm:$0xf]
        %v3028 = vld [vmem:[#allocation5 + $0x18] sm:$0xf]
        %v3029 = vld [vmem:[#allocation5 + $0x1c] sm:$0xf]
        %v3030 = vld [vmem:[#allocation5 + $0x20] sm:$0xf]
        %v3031 = vld [vmem:[#allocation5 + $0x24] sm:$0xf]
        %v3032 = vld [vmem:[#allocation5 + $0x28] sm:$0xf]
        %v3033 = vld [vmem:[#allocation5 + $0x2c] sm:$0xf]
        %v3034 = vld [vmem:[#allocation5 + $0x30] sm:$0xf]
        %v3035 = vld [vmem:[#allocation5 + $0x34] sm:$0xf]
        %v3036 = vld [vmem:[#allocation5 + $0x38] sm:$0xf]
        %v3037 = vld [vmem:[#allocation5 + $0x3c] sm:$0xf]
        %v3038 = vld [vmem:[#allocation5 + $0x40] sm:$0xf]
        %v3039 = vld [vmem:[#allocation5 + $0x44] sm:$0xf]
        %v3040 = vld [vmem:[#allocation5 + $0x48] sm:$0xf]
        %v3041 = vld [vmem:[#allocation5 + $0x4c] sm:$0xf]
        %v3042 = vld [vmem:[#allocation5 + $0x50] sm:$0xf]
        %v3043 = vld [vmem:[#allocation5 + $0x54] sm:$0x1]
        %v3044 = vsel %vm1857, 0, %v3027
        %v3045 = vsel %vm1864, 0, %v3028
        %v3046 = vsel %vm1871, 0, %v3029
        %v3047 = vsel %vm1878, 0, %v3030
        %v3048 = vsel %vm1885, 0, %v3031
        %v3049 = vsel %vm1892, 0, %v3032
        %v3050 = vsel %vm1899, 0, %v3033
        %v3051 = vsel %vm1906, 0, %v3034
        %v3052 = vsel %vm1913, 0, %v3035
        %v3053 = vsel %vm1920, 0, %v3036
        %v3054 = vsel %vm1927, 0, %v3037
        %v3055 = vsel %vm1934, 0, %v3038
        %v3056 = vsel %vm1941, 0, %v3039
        %v3057 = vsel %vm1948, 0, %v3040
        %v3058 = vsel %vm1955, 0, %v3041
        %v3059 = vsel %vm1962, 0, %v3042
        %v3060 = vsel %vm1969, 0, %v3043
        %v3062 = vshrl.u32 %v3044, 16
        %v3064 = vrot.slane %v3062, 4
        %v3065 = vshll.u32 %v3044, 16
        %v3067 = vrot.slane %v3065, 5
        %v3068 = vor.u32 %v3064, %v3067
        %v3069 = vrot.slane %v3068, 4
        %v3071 = vshll.u32 %v3045, 16
        %v3073 = vrot.slane %v3071, 5
        %v3074 = vsel %vm1116, %v3069, %v3073
        %v3075 = vshrl.u32 %v3045, 16
        %v3077 = vrot.slane %v3075, 4
        %v3078 = vor.u32 %v3077, %v3073
        %v3079 = vrot.slane %v3078, 4
        %v3081 = vshll.u32 %v3046, 16
        %v3083 = vrot.slane %v3081, 5
        %v3084 = vsel %vm1116, %v3079, %v3083
        %v3085 = vshrl.u32 %v3046, 16
        %v3087 = vrot.slane %v3085, 4
        %v3088 = vor.u32 %v3087, %v3083
        %v3089 = vrot.slane %v3088, 4
        %v3091 = vshll.u32 %v3047, 16
        %v3093 = vrot.slane %v3091, 5
        %v3094 = vsel %vm1116, %v3089, %v3093
        %v3095 = vshrl.u32 %v3047, 16
        %v3097 = vrot.slane %v3095, 4
        %v3098 = vor.u32 %v3097, %v3093
        %v3099 = vrot.slane %v3098, 4
        %v3101 = vshll.u32 %v3048, 16
        %v3103 = vrot.slane %v3101, 5
        %v3104 = vsel %vm1116, %v3099, %v3103
        %v3105 = vshrl.u32 %v3048, 16
        %v3107 = vrot.slane %v3105, 4
        %v3108 = vor.u32 %v3107, %v3103
        %v3109 = vrot.slane %v3108, 4
        %v3111 = vshll.u32 %v3049, 16
        %v3113 = vrot.slane %v3111, 5
        %v3114 = vsel %vm1116, %v3109, %v3113
        %v3115 = vshrl.u32 %v3049, 16
        %v3117 = vrot.slane %v3115, 4
        %v3118 = vor.u32 %v3117, %v3113
        %v3119 = vrot.slane %v3118, 4
        %v3121 = vshll.u32 %v3050, 16
        %v3123 = vrot.slane %v3121, 5
        %v3124 = vsel %vm1116, %v3119, %v3123
        %v3125 = vshrl.u32 %v3050, 16
        %v3127 = vrot.slane %v3125, 4
        %v3128 = vor.u32 %v3127, %v3123
        %v3129 = vrot.slane %v3128, 4
        %v3131 = vshll.u32 %v3051, 16
        %v3133 = vrot.slane %v3131, 5
        %v3134 = vsel %vm1116, %v3129, %v3133
        %v3135 = vshrl.u32 %v3051, 16
        %v3137 = vrot.slane %v3135, 4
        %v3138 = vor.u32 %v3137, %v3133
        %v3139 = vrot.slane %v3138, 4
        %v3141 = vshll.u32 %v3052, 16
        %v3143 = vrot.slane %v3141, 5
        %v3144 = vsel %vm1116, %v3139, %v3143
        %v3145 = vshrl.u32 %v3052, 16
        %v3147 = vrot.slane %v3145, 4
        %v3148 = vor.u32 %v3147, %v3143
        %v3149 = vrot.slane %v3148, 4
        %v3151 = vshll.u32 %v3053, 16
        %v3153 = vrot.slane %v3151, 5
        %v3154 = vsel %vm1116, %v3149, %v3153
        %v3155 = vshrl.u32 %v3053, 16
        %v3157 = vrot.slane %v3155, 4
        %v3158 = vor.u32 %v3157, %v3153
        %v3159 = vrot.slane %v3158, 4
        %v3161 = vshll.u32 %v3054, 16
        %v3163 = vrot.slane %v3161, 5
        %v3164 = vsel %vm1116, %v3159, %v3163
        %v3165 = vshrl.u32 %v3054, 16
        %v3167 = vrot.slane %v3165, 4
        %v3168 = vor.u32 %v3167, %v3163
        %v3169 = vrot.slane %v3168, 4
        %v3171 = vshll.u32 %v3055, 16
        %v3173 = vrot.slane %v3171, 5
        %v3174 = vsel %vm1116, %v3169, %v3173
        %v3175 = vshrl.u32 %v3055, 16
        %v3177 = vrot.slane %v3175, 4
        %v3178 = vor.u32 %v3177, %v3173
        %v3179 = vrot.slane %v3178, 4
        %v3181 = vshll.u32 %v3056, 16
        %v3183 = vrot.slane %v3181, 5
        %v3184 = vsel %vm1116, %v3179, %v3183
        %v3185 = vshrl.u32 %v3056, 16
        %v3187 = vrot.slane %v3185, 4
        %v3188 = vor.u32 %v3187, %v3183
        %v3189 = vrot.slane %v3188, 4
        %v3191 = vshll.u32 %v3057, 16
        %v3193 = vrot.slane %v3191, 5
        %v3194 = vsel %vm1116, %v3189, %v3193
        %v3195 = vshrl.u32 %v3057, 16
        %v3197 = vrot.slane %v3195, 4
        %v3198 = vor.u32 %v3197, %v3193
        %v3199 = vrot.slane %v3198, 4
        %v3201 = vshll.u32 %v3058, 16
        %v3203 = vrot.slane %v3201, 5
        %v3204 = vsel %vm1116, %v3199, %v3203
        %v3205 = vshrl.u32 %v3058, 16
        %v3207 = vrot.slane %v3205, 4
        %v3208 = vor.u32 %v3207, %v3203
        %v3209 = vrot.slane %v3208, 4
        %v3211 = vshll.u32 %v3059, 16
        %v3213 = vrot.slane %v3211, 5
        %v3214 = vsel %vm1116, %v3209, %v3213
        %v3215 = vshrl.u32 %v3059, 16
        %v3217 = vrot.slane %v3215, 4
        %v3218 = vor.u32 %v3217, %v3213
        %v3219 = vrot.slane %v3218, 4
        %v3221 = vshll.u32 %v3060, 16
        %v3223 = vrot.slane %v3221, 5
        %v3224 = vsel %vm1116, %v3219, %v3223
        %3241 = vst [vmem:[#allocation6 + $0x20] sm:$0xf] %v3074
        %3242 = vst [vmem:[#allocation6 + $0x44] sm:$0xf] %v3084
        %3243 = vst [vmem:[#allocation6 + $0x68] sm:$0xf] %v3094
        %3244 = vst [vmem:[#allocation6 + $0x8c] sm:$0xf] %v3104
        %3245 = vst [vmem:[#allocation6 + $0xb0] sm:$0xf] %v3114
        %3246 = vst [vmem:[#allocation6 + $0xd4] sm:$0xf] %v3124
        %3247 = vst [vmem:[#allocation6 + $0xf8] sm:$0xf] %v3134
        %3248 = vst [vmem:[#allocation6 + $0x11c] sm:$0xf] %v3144
        %3249 = vst [vmem:[#allocation6 + $0x140] sm:$0xf] %v3154
        %3250 = vst [vmem:[#allocation6 + $0x164] sm:$0xf] %v3164
        %3251 = vst [vmem:[#allocation6 + $0x188] sm:$0xf] %v3174
        %3252 = vst [vmem:[#allocation6 + $0x1ac] sm:$0xf] %v3184
        %3253 = vst [vmem:[#allocation6 + $0x1d0] sm:$0xf] %v3194
        %3254 = vst [vmem:[#allocation6 + $0x1f4] sm:$0xf] %v3204
        %3255 = vst [vmem:[#allocation6 + $0x218] sm:$0xf] %v3214
        %3256 = vst [vmem:[#allocation6 + $0x23c] sm:$0xf] %v3224
        %v3257 = vld [vmem:[#allocation6] sm:$0xff]
        %v3258 = vld [vmem:[#allocation6 + $0x8] sm:$0xff]
        %v3259 = vld [vmem:[#allocation6 + $0x10] sm:$0xff]
        %v3260 = vld [vmem:[#allocation6 + $0x18] sm:$0xff]
        %v3261 = vld [vmem:[#allocation6 + $0x20] sm:$0xf]
        %v3262 = vld [vmem:[#allocation6 + $0x24] sm:$0xff]
        %v3263 = vld [vmem:[#allocation6 + $0x2c] sm:$0xff]
        %v3264 = vld [vmem:[#allocation6 + $0x34] sm:$0xff]
        %v3265 = vld [vmem:[#allocation6 + $0x3c] sm:$0xff]
        %v3266 = vld [vmem:[#allocation6 + $0x44] sm:$0xf]
        %v3267 = vld [vmem:[#allocation6 + $0x48] sm:$0xff]
        %v3268 = vld [vmem:[#allocation6 + $0x50] sm:$0xff]
        %v3269 = vld [vmem:[#allocation6 + $0x58] sm:$0xff]
        %v3270 = vld [vmem:[#allocation6 + $0x60] sm:$0xff]
        %v3271 = vld [vmem:[#allocation6 + $0x68] sm:$0xf]
        %v3272 = vld [vmem:[#allocation6 + $0x6c] sm:$0xff]
        %v3273 = vld [vmem:[#allocation6 + $0x74] sm:$0xff]
        %v3274 = vld [vmem:[#allocation6 + $0x7c] sm:$0xff]
        %v3275 = vld [vmem:[#allocation6 + $0x84] sm:$0xff]
        %v3276 = vld [vmem:[#allocation6 + $0x8c] sm:$0xf]
        %v3277 = vld [vmem:[#allocation6 + $0x90] sm:$0xff]
        %v3278 = vld [vmem:[#allocation6 + $0x98] sm:$0xff]
        %v3279 = vld [vmem:[#allocation6 + $0xa0] sm:$0xff]
        %v3280 = vld [vmem:[#allocation6 + $0xa8] sm:$0xff]
        %v3281 = vld [vmem:[#allocation6 + $0xb0] sm:$0xf]
        %v3282 = vld [vmem:[#allocation6 + $0xb4] sm:$0xff]
        %v3283 = vld [vmem:[#allocation6 + $0xbc] sm:$0xff]
        %v3284 = vld [vmem:[#allocation6 + $0xc4] sm:$0xff]
        %v3285 = vld [vmem:[#allocation6 + $0xcc] sm:$0xff]
        %v3286 = vld [vmem:[#allocation6 + $0xd4] sm:$0xf]
        %v3287 = vld [vmem:[#allocation6 + $0xd8] sm:$0xff]
        %v3288 = vld [vmem:[#allocation6 + $0xe0] sm:$0xff]
        %v3289 = vld [vmem:[#allocation6 + $0xe8] sm:$0xff]
        %v3290 = vld [vmem:[#allocation6 + $0xf0] sm:$0xff]
        %v3291 = vld [vmem:[#allocation6 + $0xf8] sm:$0xf]
        %v3292 = vld [vmem:[#allocation6 + $0xfc] sm:$0xff]
        %v3293 = vld [vmem:[#allocation6 + $0x104] sm:$0xff]
        %v3294 = vld [vmem:[#allocation6 + $0x10c] sm:$0xff]
        %v3295 = vld [vmem:[#allocation6 + $0x114] sm:$0xff]
        %v3296 = vld [vmem:[#allocation6 + $0x11c] sm:$0xf]
        %v3297 = vld [vmem:[#allocation6 + $0x120] sm:$0xff]
        %v3298 = vld [vmem:[#allocation6 + $0x128] sm:$0xff]
        %v3299 = vld [vmem:[#allocation6 + $0x130] sm:$0xff]
        %v3300 = vld [vmem:[#allocation6 + $0x138] sm:$0xff]
        %v3301 = vld [vmem:[#allocation6 + $0x140] sm:$0xf]
        %v3302 = vld [vmem:[#allocation6 + $0x144] sm:$0xff]
        %v3303 = vld [vmem:[#allocation6 + $0x14c] sm:$0xff]
        %v3304 = vld [vmem:[#allocation6 + $0x154] sm:$0xff]
        %v3305 = vld [vmem:[#allocation6 + $0x15c] sm:$0xff]
        %v3306 = vld [vmem:[#allocation6 + $0x164] sm:$0xf]
        %v3307 = vld [vmem:[#allocation6 + $0x168] sm:$0xff]
        %v3308 = vld [vmem:[#allocation6 + $0x170] sm:$0xff]
        %v3309 = vld [vmem:[#allocation6 + $0x178] sm:$0xff]
        %v3310 = vld [vmem:[#allocation6 + $0x180] sm:$0xff]
        %v3311 = vld [vmem:[#allocation6 + $0x188] sm:$0xf]
        %v3312 = vld [vmem:[#allocation6 + $0x18c] sm:$0xff]
        %v3313 = vld [vmem:[#allocation6 + $0x194] sm:$0xff]
        %v3314 = vld [vmem:[#allocation6 + $0x19c] sm:$0xff]
        %v3315 = vld [vmem:[#allocation6 + $0x1a4] sm:$0xff]
        %v3316 = vld [vmem:[#allocation6 + $0x1ac] sm:$0xf]
        %v3317 = vld [vmem:[#allocation6 + $0x1b0] sm:$0xff]
        %v3318 = vld [vmem:[#allocation6 + $0x1b8] sm:$0xff]
        %v3319 = vld [vmem:[#allocation6 + $0x1c0] sm:$0xff]
        %v3320 = vld [vmem:[#allocation6 + $0x1c8] sm:$0xff]
        %v3321 = vld [vmem:[#allocation6 + $0x1d0] sm:$0xf]
        %v3322 = vld [vmem:[#allocation6 + $0x1d4] sm:$0xff]
        %v3323 = vld [vmem:[#allocation6 + $0x1dc] sm:$0xff]
        %v3324 = vld [vmem:[#allocation6 + $0x1e4] sm:$0xff]
        %v3325 = vld [vmem:[#allocation6 + $0x1ec] sm:$0xff]
        %v3326 = vld [vmem:[#allocation6 + $0x1f4] sm:$0xf]
        %v3327 = vld [vmem:[#allocation6 + $0x1f8] sm:$0xff]
        %v3328 = vld [vmem:[#allocation6 + $0x200] sm:$0xff]
        %v3329 = vld [vmem:[#allocation6 + $0x208] sm:$0xff]
        %v3330 = vld [vmem:[#allocation6 + $0x210] sm:$0xff]
        %v3331 = vld [vmem:[#allocation6 + $0x218] sm:$0xf]
        %v3332 = vld [vmem:[#allocation6 + $0x21c] sm:$0xff]
        %v3333 = vld [vmem:[#allocation6 + $0x224] sm:$0xff]
        %v3334 = vld [vmem:[#allocation6 + $0x22c] sm:$0xff]
        %v3335 = vld [vmem:[#allocation6 + $0x234] sm:$0xff]
        %v3336 = vld [vmem:[#allocation6 + $0x23c] sm:$0xf]
        %v3337 = vld [vmem:[#allocation12] sm:$0xf]
        %v3338 = vld [vmem:[#allocation12 + $0x4] sm:$0xf]
        %v3339 = vld [vmem:[#allocation12 + $0x8] sm:$0xf]
        %v3340 = vld [vmem:[#allocation12 + $0xc] sm:$0xf]
        %v3341 = vld [vmem:[#allocation12 + $0x10] sm:$0xf]
        %v3342 = vld [vmem:[#allocation12 + $0x14] sm:$0xf]
        %v3343 = vld [vmem:[#allocation12 + $0x18] sm:$0xf]
        %v3344 = vld [vmem:[#allocation12 + $0x1c] sm:$0xf]
        %v3345 = vld [vmem:[#allocation12 + $0x20] sm:$0xf]
        %v3346 = vld [vmem:[#allocation12 + $0x24] sm:$0xf]
        %v3347 = vld [vmem:[#allocation12 + $0x28] sm:$0xf]
        %v3348 = vld [vmem:[#allocation12 + $0x2c] sm:$0xf]
        %v3349 = vld [vmem:[#allocation12 + $0x30] sm:$0xf]
        %v3350 = vld [vmem:[#allocation12 + $0x34] sm:$0xf]
        %v3351 = vld [vmem:[#allocation12 + $0x38] sm:$0xf]
        %v3352 = vld [vmem:[#allocation12 + $0x3c] sm:$0xf]
        %v3353 = vld [vmem:[#allocation12 + $0x40] sm:$0xf]
        %v3354 = vld [vmem:[#allocation12 + $0x44] sm:$0xf]
        %v3355 = vld [vmem:[#allocation12 + $0x48] sm:$0xf]
        %v3356 = vld [vmem:[#allocation12 + $0x4c] sm:$0xf]
        %v3357 = vld [vmem:[#allocation12 + $0x50] sm:$0xf]
        %v3358 = vld [vmem:[#allocation12 + $0x54] sm:$0xf]
        %v3359 = vld [vmem:[#allocation12 + $0x58] sm:$0xf]
        %v3360 = vld [vmem:[#allocation12 + $0x5c] sm:$0xf]
        %v3361 = vld [vmem:[#allocation12 + $0x60] sm:$0xf]
        %v3362 = vld [vmem:[#allocation12 + $0x64] sm:$0xf]
        %v3363 = vld [vmem:[#allocation12 + $0x68] sm:$0xf]
        %v3364 = vld [vmem:[#allocation12 + $0x6c] sm:$0xf]
        %v3365 = vld [vmem:[#allocation12 + $0x70] sm:$0xf]
        %v3366 = vld [vmem:[#allocation12 + $0x74] sm:$0xf]
        %v3367 = vld [vmem:[#allocation12 + $0x78] sm:$0xf]
        %v3368 = vld [vmem:[#allocation12 + $0x7c] sm:$0xf]
        %v3369 = vld [vmem:[#allocation12 + $0x80] sm:$0xf]
        %v3370 = vld [vmem:[#allocation12 + $0x84] sm:$0xf]
        %v3371 = vld [vmem:[#allocation12 + $0x88] sm:$0xf]
        %v3372 = vld [vmem:[#allocation12 + $0x8c] sm:$0xf]
        %v3373 = vld [vmem:[#allocation12 + $0x90] sm:$0xf]
        %v3374 = vld [vmem:[#allocation12 + $0x94] sm:$0xf]
        %v3375 = vld [vmem:[#allocation12 + $0x98] sm:$0xf]
        %v3376 = vld [vmem:[#allocation12 + $0x9c] sm:$0xf]
        %v3377 = vld [vmem:[#allocation12 + $0xa0] sm:$0xf]
        %v3378 = vld [vmem:[#allocation12 + $0xa4] sm:$0xf]
        %v3379 = vld [vmem:[#allocation12 + $0xa8] sm:$0xf]
        %v3380 = vld [vmem:[#allocation12 + $0xac] sm:$0xf]
        %v3381 = vld [vmem:[#allocation12 + $0xb0] sm:$0xf]
        %v3382 = vld [vmem:[#allocation12 + $0xb4] sm:$0xf]
        %v3383 = vld [vmem:[#allocation12 + $0xb8] sm:$0xf]
        %v3384 = vld [vmem:[#allocation12 + $0xbc] sm:$0xf]
        %v3385 = vld [vmem:[#allocation12 + $0xc0] sm:$0xf]
        %v3386 = vld [vmem:[#allocation12 + $0xc4] sm:$0xf]
        %v3387 = vld [vmem:[#allocation12 + $0xc8] sm:$0xf]
        %v3388 = vld [vmem:[#allocation12 + $0xcc] sm:$0xf]
        %v3389 = vld [vmem:[#allocation12 + $0xd0] sm:$0xf]
        %v3390 = vld [vmem:[#allocation12 + $0xd4] sm:$0xf]
        %v3391 = vld [vmem:[#allocation12 + $0xd8] sm:$0xf]
        %v3392 = vld [vmem:[#allocation12 + $0xdc] sm:$0xf]
        %v3393 = vld [vmem:[#allocation12 + $0xe0] sm:$0xf]
        %v3394 = vld [vmem:[#allocation12 + $0xe4] sm:$0xf]
        %v3395 = vld [vmem:[#allocation12 + $0xe8] sm:$0xf]
        %v3396 = vld [vmem:[#allocation12 + $0xec] sm:$0xf]
        %v3397 = vld [vmem:[#allocation12 + $0xf0] sm:$0xf]
        %v3398 = vld [vmem:[#allocation12 + $0xf4] sm:$0xf]
        %v3399 = vld [vmem:[#allocation12 + $0xf8] sm:$0xf]
        %v3400 = vld [vmem:[#allocation12 + $0xfc] sm:$0xf]
        %v3401 = vld [vmem:[#allocation12 + $0x100] sm:$0xf]
        %v3402 = vld [vmem:[#allocation12 + $0x104] sm:$0xf]
        %v3403 = vld [vmem:[#allocation12 + $0x108] sm:$0xf]
        %v3404 = vld [vmem:[#allocation12 + $0x10c] sm:$0xf]
        %v3405 = vld [vmem:[#allocation12 + $0x110] sm:$0xf]
        %v3406 = vld [vmem:[#allocation12 + $0x114] sm:$0xf]
        %v3407 = vld [vmem:[#allocation12 + $0x118] sm:$0xf]
        %v3408 = vld [vmem:[#allocation12 + $0x11c] sm:$0xf]
        %v3409 = vld [vmem:[#allocation12 + $0x120] sm:$0xf]
        %v3410 = vld [vmem:[#allocation12 + $0x124] sm:$0xf]
        %v3411 = vld [vmem:[#allocation12 + $0x128] sm:$0xf]
        %v3412 = vld [vmem:[#allocation12 + $0x12c] sm:$0xf]
        %v3413 = vld [vmem:[#allocation12 + $0x130] sm:$0xf]
        %v3414 = vld [vmem:[#allocation12 + $0x134] sm:$0xf]
        %v3415 = vld [vmem:[#allocation12 + $0x138] sm:$0xf]
        %v3416 = vld [vmem:[#allocation12 + $0x13c] sm:$0xf]
        %v3417 = vld [vmem:[#allocation12 + $0x140] sm:$0xf]
        %v3418 = vld [vmem:[#allocation12 + $0x144] sm:$0xf]
        %v3419 = vld [vmem:[#allocation12 + $0x148] sm:$0xf]
        %v3420 = vld [vmem:[#allocation12 + $0x14c] sm:$0xf]
        %v3421 = vld [vmem:[#allocation12 + $0x150] sm:$0xf]
        %v3422 = vld [vmem:[#allocation12 + $0x154] sm:$0xf]
        %v3423 = vld [vmem:[#allocation12 + $0x158] sm:$0xf]
        %v3424 = vld [vmem:[#allocation12 + $0x15c] sm:$0xf]
        %v3425 = vld [vmem:[#allocation12 + $0x160] sm:$0xf]
        %v3426 = vld [vmem:[#allocation12 + $0x164] sm:$0xf]
        %v3427 = vld [vmem:[#allocation12 + $0x168] sm:$0xf]
        %v3428 = vld [vmem:[#allocation12 + $0x16c] sm:$0xf]
        %v3429 = vld [vmem:[#allocation12 + $0x170] sm:$0xf]
        %v3430 = vld [vmem:[#allocation12 + $0x174] sm:$0xf]
        %v3431 = vld [vmem:[#allocation12 + $0x178] sm:$0xf]
        %v3432 = vld [vmem:[#allocation12 + $0x17c] sm:$0xf]
        %v3433 = vld [vmem:[#allocation12 + $0x180] sm:$0xf]
        %v3434 = vld [vmem:[#allocation12 + $0x184] sm:$0xf]
        %v3435 = vld [vmem:[#allocation12 + $0x188] sm:$0xf]
        %v3436 = vld [vmem:[#allocation12 + $0x18c] sm:$0xf]
        %v3437 = vld [vmem:[#allocation12 + $0x190] sm:$0xf]
        %v3438 = vld [vmem:[#allocation12 + $0x194] sm:$0xf]
        %v3439 = vld [vmem:[#allocation12 + $0x198] sm:$0xf]
        %v3440 = vld [vmem:[#allocation12 + $0x19c] sm:$0xf]
        %v3441 = vld [vmem:[#allocation12 + $0x1a0] sm:$0xf]
        %v3442 = vld [vmem:[#allocation12 + $0x1a4] sm:$0xf]
        %v3443 = vld [vmem:[#allocation12 + $0x1a8] sm:$0xf]
        %v3444 = vld [vmem:[#allocation12 + $0x1ac] sm:$0xf]
        %v3445 = vld [vmem:[#allocation12 + $0x1b0] sm:$0xf]
        %v3446 = vld [vmem:[#allocation12 + $0x1b4] sm:$0xf]
        %v3447 = vld [vmem:[#allocation12 + $0x1b8] sm:$0xf]
        %v3448 = vld [vmem:[#allocation12 + $0x1bc] sm:$0xf]
        %v3449 = vld [vmem:[#allocation12 + $0x1c0] sm:$0xf]
        %v3450 = vld [vmem:[#allocation12 + $0x1c4] sm:$0xf]
        %v3451 = vld [vmem:[#allocation12 + $0x1c8] sm:$0xf]
        %v3452 = vld [vmem:[#allocation12 + $0x1cc] sm:$0xf]
        %v3453 = vld [vmem:[#allocation12 + $0x1d0] sm:$0xf]
        %v3454 = vld [vmem:[#allocation12 + $0x1d4] sm:$0xf]
        %v3455 = vld [vmem:[#allocation12 + $0x1d8] sm:$0xf]
        %v3456 = vld [vmem:[#allocation12 + $0x1dc] sm:$0xf]
        %v3457 = vld [vmem:[#allocation12 + $0x1e0] sm:$0xf]
        %v3458 = vld [vmem:[#allocation12 + $0x1e4] sm:$0xf]
        %v3459 = vld [vmem:[#allocation12 + $0x1e8] sm:$0xf]
        %v3460 = vld [vmem:[#allocation12 + $0x1ec] sm:$0xf]
        %v3461 = vld [vmem:[#allocation12 + $0x1f0] sm:$0xf]
        %v3462 = vld [vmem:[#allocation12 + $0x1f4] sm:$0xf]
        %v3463 = vld [vmem:[#allocation12 + $0x1f8] sm:$0xf]
        %v3464 = vld [vmem:[#allocation12 + $0x1fc] sm:$0xf]
        %v3465 = vld [vmem:[#allocation12 + $0x200] sm:$0xf]
        %v3466 = vld [vmem:[#allocation12 + $0x204] sm:$0xf]
        %v3467 = vld [vmem:[#allocation12 + $0x208] sm:$0xf]
        %v3468 = vld [vmem:[#allocation12 + $0x20c] sm:$0xf]
        %v3469 = vld [vmem:[#allocation12 + $0x210] sm:$0xf]
        %v3470 = vld [vmem:[#allocation12 + $0x214] sm:$0xf]
        %v3471 = vld [vmem:[#allocation12 + $0x218] sm:$0xf]
        %v3472 = vld [vmem:[#allocation12 + $0x21c] sm:$0xf]
        %v3473 = vld [vmem:[#allocation12 + $0x220] sm:$0xf]
        %v3474 = vld [vmem:[#allocation12 + $0x224] sm:$0xf]
        %v3475 = vld [vmem:[#allocation12 + $0x228] sm:$0xf]
        %v3476 = vld [vmem:[#allocation12 + $0x22c] sm:$0xf]
        %v3477 = vld [vmem:[#allocation12 + $0x230] sm:$0xf]
        %v3478 = vld [vmem:[#allocation12 + $0x234] sm:$0xf]
        %v3479 = vld [vmem:[#allocation12 + $0x238] sm:$0xf]
        %v3480 = vld [vmem:[#allocation12 + $0x23c] sm:$0xf]
        %v3561 = vunpack.c.l.b16 %v3257
        %v3562 = vunpack.c.h.b16 %v3257
        %v3563 = vunpack.c.l.b16 %v3258
        %v3564 = vunpack.c.h.b16 %v3258
        %v3565 = vunpack.c.l.b16 %v3259
        %v3566 = vunpack.c.h.b16 %v3259
        %v3567 = vunpack.c.l.b16 %v3260
        %v3568 = vunpack.c.h.b16 %v3260
        %v3569 = vunpack.c.l.b16 %v3261
        %v3570 = vunpack.c.l.b16 %v3262
        %v3571 = vunpack.c.h.b16 %v3262
        %v3572 = vunpack.c.l.b16 %v3263
        %v3573 = vunpack.c.h.b16 %v3263
        %v3574 = vunpack.c.l.b16 %v3264
        %v3575 = vunpack.c.h.b16 %v3264
        %v3576 = vunpack.c.l.b16 %v3265
        %v3577 = vunpack.c.h.b16 %v3265
        %v3578 = vunpack.c.l.b16 %v3266
        %v3579 = vunpack.c.l.b16 %v3267
        %v3580 = vunpack.c.h.b16 %v3267
        %v3581 = vunpack.c.l.b16 %v3268
        %v3582 = vunpack.c.h.b16 %v3268
        %v3583 = vunpack.c.l.b16 %v3269
        %v3584 = vunpack.c.h.b16 %v3269
        %v3585 = vunpack.c.l.b16 %v3270
        %v3586 = vunpack.c.h.b16 %v3270
        %v3587 = vunpack.c.l.b16 %v3271
        %v3588 = vunpack.c.l.b16 %v3272
        %v3589 = vunpack.c.h.b16 %v3272
        %v3590 = vunpack.c.l.b16 %v3273
        %v3591 = vunpack.c.h.b16 %v3273
        %v3592 = vunpack.c.l.b16 %v3274
        %v3593 = vunpack.c.h.b16 %v3274
        %v3594 = vunpack.c.l.b16 %v3275
        %v3595 = vunpack.c.h.b16 %v3275
        %v3596 = vunpack.c.l.b16 %v3276
        %v3597 = vunpack.c.l.b16 %v3277
        %v3598 = vunpack.c.h.b16 %v3277
        %v3599 = vunpack.c.l.b16 %v3278
        %v3600 = vunpack.c.h.b16 %v3278
        %v3601 = vunpack.c.l.b16 %v3279
        %v3602 = vunpack.c.h.b16 %v3279
        %v3603 = vunpack.c.l.b16 %v3280
        %v3604 = vunpack.c.h.b16 %v3280
        %v3605 = vunpack.c.l.b16 %v3281
        %v3606 = vunpack.c.l.b16 %v3282
        %v3607 = vunpack.c.h.b16 %v3282
        %v3608 = vunpack.c.l.b16 %v3283
        %v3609 = vunpack.c.h.b16 %v3283
        %v3610 = vunpack.c.l.b16 %v3284
        %v3611 = vunpack.c.h.b16 %v3284
        %v3612 = vunpack.c.l.b16 %v3285
        %v3613 = vunpack.c.h.b16 %v3285
        %v3614 = vunpack.c.l.b16 %v3286
        %v3615 = vunpack.c.l.b16 %v3287
        %v3616 = vunpack.c.h.b16 %v3287
        %v3617 = vunpack.c.l.b16 %v3288
        %v3618 = vunpack.c.h.b16 %v3288
        %v3619 = vunpack.c.l.b16 %v3289
        %v3620 = vunpack.c.h.b16 %v3289
        %v3621 = vunpack.c.l.b16 %v3290
        %v3622 = vunpack.c.h.b16 %v3290
        %v3623 = vunpack.c.l.b16 %v3291
        %v3624 = vunpack.c.l.b16 %v3292
        %v3625 = vunpack.c.h.b16 %v3292
        %v3626 = vunpack.c.l.b16 %v3293
        %v3627 = vunpack.c.h.b16 %v3293
        %v3628 = vunpack.c.l.b16 %v3294
        %v3629 = vunpack.c.h.b16 %v3294
        %v3630 = vunpack.c.l.b16 %v3295
        %v3631 = vunpack.c.h.b16 %v3295
        %v3632 = vunpack.c.l.b16 %v3296
        %v3633 = vunpack.c.l.b16 %v3297
        %v3634 = vunpack.c.h.b16 %v3297
        %v3635 = vunpack.c.l.b16 %v3298
        %v3636 = vunpack.c.h.b16 %v3298
        %v3637 = vunpack.c.l.b16 %v3299
        %v3638 = vunpack.c.h.b16 %v3299
        %v3639 = vunpack.c.l.b16 %v3300
        %v3640 = vunpack.c.h.b16 %v3300
        %v3641 = vunpack.c.l.b16 %v3301
        %v3642 = vunpack.c.l.b16 %v3302
        %v3643 = vunpack.c.h.b16 %v3302
        %v3644 = vunpack.c.l.b16 %v3303
        %v3645 = vunpack.c.h.b16 %v3303
        %v3646 = vunpack.c.l.b16 %v3304
        %v3647 = vunpack.c.h.b16 %v3304
        %v3648 = vunpack.c.l.b16 %v3305
        %v3649 = vunpack.c.h.b16 %v3305
        %v3650 = vunpack.c.l.b16 %v3306
        %v3651 = vunpack.c.l.b16 %v3307
        %v3652 = vunpack.c.h.b16 %v3307
        %v3653 = vunpack.c.l.b16 %v3308
        %v3654 = vunpack.c.h.b16 %v3308
        %v3655 = vunpack.c.l.b16 %v3309
        %v3656 = vunpack.c.h.b16 %v3309
        %v3657 = vunpack.c.l.b16 %v3310
        %v3658 = vunpack.c.h.b16 %v3310
        %v3659 = vunpack.c.l.b16 %v3311
        %v3660 = vunpack.c.l.b16 %v3312
        %v3661 = vunpack.c.h.b16 %v3312
        %v3662 = vunpack.c.l.b16 %v3313
        %v3663 = vunpack.c.h.b16 %v3313
        %v3664 = vunpack.c.l.b16 %v3314
        %v3665 = vunpack.c.h.b16 %v3314
        %v3666 = vunpack.c.l.b16 %v3315
        %v3667 = vunpack.c.h.b16 %v3315
        %v3668 = vunpack.c.l.b16 %v3316
        %v3669 = vunpack.c.l.b16 %v3317
        %v3670 = vunpack.c.h.b16 %v3317
        %v3671 = vunpack.c.l.b16 %v3318
        %v3672 = vunpack.c.h.b16 %v3318
        %v3673 = vunpack.c.l.b16 %v3319
        %v3674 = vunpack.c.h.b16 %v3319
        %v3675 = vunpack.c.l.b16 %v3320
        %v3676 = vunpack.c.h.b16 %v3320
        %v3677 = vunpack.c.l.b16 %v3321
        %v3678 = vunpack.c.l.b16 %v3322
        %v3679 = vunpack.c.h.b16 %v3322
        %v3680 = vunpack.c.l.b16 %v3323
        %v3681 = vunpack.c.h.b16 %v3323
        %v3682 = vunpack.c.l.b16 %v3324
        %v3683 = vunpack.c.h.b16 %v3324
        %v3684 = vunpack.c.l.b16 %v3325
        %v3685 = vunpack.c.h.b16 %v3325
        %v3686 = vunpack.c.l.b16 %v3326
        %v3687 = vunpack.c.l.b16 %v3327
        %v3688 = vunpack.c.h.b16 %v3327
        %v3689 = vunpack.c.l.b16 %v3328
        %v3690 = vunpack.c.h.b16 %v3328
        %v3691 = vunpack.c.l.b16 %v3329
        %v3692 = vunpack.c.h.b16 %v3329
        %v3693 = vunpack.c.l.b16 %v3330
        %v3694 = vunpack.c.h.b16 %v3330
        %v3695 = vunpack.c.l.b16 %v3331
        %v3696 = vunpack.c.l.b16 %v3332
        %v3697 = vunpack.c.h.b16 %v3332
        %v3698 = vunpack.c.l.b16 %v3333
        %v3699 = vunpack.c.h.b16 %v3333
        %v3700 = vunpack.c.l.b16 %v3334
        %v3701 = vunpack.c.h.b16 %v3334
        %v3702 = vunpack.c.l.b16 %v3335
        %v3703 = vunpack.c.h.b16 %v3335
        %v3704 = vunpack.c.l.b16 %v3336
        %v3705 = vpack.c.b16 %v3570, %v3561
        %v3706 = vpack.c.b16 %v3571, %v3562
        %v3707 = vpack.c.b16 %v3572, %v3563
        %v3708 = vpack.c.b16 %v3573, %v3564
        %v3709 = vpack.c.b16 %v3574, %v3565
        %v3710 = vpack.c.b16 %v3575, %v3566
        %v3711 = vpack.c.b16 %v3576, %v3567
        %v3712 = vpack.c.b16 %v3577, %v3568
        %v3713 = vpack.c.b16 %v3578, %v3569
        %v3714 = vpack.c.b16 %v3588, %v3579
        %v3715 = vpack.c.b16 %v3589, %v3580
        %v3716 = vpack.c.b16 %v3590, %v3581
        %v3717 = vpack.c.b16 %v3591, %v3582
        %v3718 = vpack.c.b16 %v3592, %v3583
        %v3719 = vpack.c.b16 %v3593, %v3584
        %v3720 = vpack.c.b16 %v3594, %v3585
        %v3721 = vpack.c.b16 %v3595, %v3586
        %v3722 = vpack.c.b16 %v3596, %v3587
        %v3723 = vpack.c.b16 %v3606, %v3597
        %v3724 = vpack.c.b16 %v3607, %v3598
        %v3725 = vpack.c.b16 %v3608, %v3599
        %v3726 = vpack.c.b16 %v3609, %v3600
        %v3727 = vpack.c.b16 %v3610, %v3601
        %v3728 = vpack.c.b16 %v3611, %v3602
        %v3729 = vpack.c.b16 %v3612, %v3603
        %v3730 = vpack.c.b16 %v3613, %v3604
        %v3731 = vpack.c.b16 %v3614, %v3605
        %v3732 = vpack.c.b16 %v3624, %v3615
        %v3733 = vpack.c.b16 %v3625, %v3616
        %v3734 = vpack.c.b16 %v3626, %v3617
        %v3735 = vpack.c.b16 %v3627, %v3618
        %v3736 = vpack.c.b16 %v3628, %v3619
        %v3737 = vpack.c.b16 %v3629, %v3620
        %v3738 = vpack.c.b16 %v3630, %v3621
        %v3739 = vpack.c.b16 %v3631, %v3622
        %v3740 = vpack.c.b16 %v3632, %v3623
        %v3741 = vpack.c.b16 %v3642, %v3633
        %v3742 = vpack.c.b16 %v3643, %v3634
        %v3743 = vpack.c.b16 %v3644, %v3635
        %v3744 = vpack.c.b16 %v3645, %v3636
        %v3745 = vpack.c.b16 %v3646, %v3637
        %v3746 = vpack.c.b16 %v3647, %v3638
        %v3747 = vpack.c.b16 %v3648, %v3639
        %v3748 = vpack.c.b16 %v3649, %v3640
        %v3749 = vpack.c.b16 %v3650, %v3641
        %v3750 = vpack.c.b16 %v3660, %v3651
        %v3751 = vpack.c.b16 %v3661, %v3652
        %v3752 = vpack.c.b16 %v3662, %v3653
        %v3753 = vpack.c.b16 %v3663, %v3654
        %v3754 = vpack.c.b16 %v3664, %v3655
        %v3755 = vpack.c.b16 %v3665, %v3656
        %v3756 = vpack.c.b16 %v3666, %v3657
        %v3757 = vpack.c.b16 %v3667, %v3658
        %v3758 = vpack.c.b16 %v3668, %v3659
        %v3759 = vpack.c.b16 %v3678, %v3669
        %v3760 = vpack.c.b16 %v3679, %v3670
        %v3761 = vpack.c.b16 %v3680, %v3671
        %v3762 = vpack.c.b16 %v3681, %v3672
        %v3763 = vpack.c.b16 %v3682, %v3673
        %v3764 = vpack.c.b16 %v3683, %v3674
        %v3765 = vpack.c.b16 %v3684, %v3675
        %v3766 = vpack.c.b16 %v3685, %v3676
        %v3767 = vpack.c.b16 %v3686, %v3677
        %v3768 = vpack.c.b16 %v3696, %v3687
        %v3769 = vpack.c.b16 %v3697, %v3688
        %v3770 = vpack.c.b16 %v3698, %v3689
        %v3771 = vpack.c.b16 %v3699, %v3690
        %v3772 = vpack.c.b16 %v3700, %v3691
        %v3773 = vpack.c.b16 %v3701, %v3692
        %v3774 = vpack.c.b16 %v3702, %v3693
        %v3775 = vpack.c.b16 %v3703, %v3694
        %v3776 = vpack.c.b16 %v3704, %v3695
        %v3993 = vunpack.c.l.b16 %v3337
        %v3994 = vunpack.c.l.b16 %v3338
        %v3995 = vunpack.c.l.b16 %v3339
        %v3996 = vunpack.c.l.b16 %v3340
        %v3997 = vunpack.c.l.b16 %v3341
        %v3998 = vunpack.c.l.b16 %v3342
        %v3999 = vunpack.c.l.b16 %v3343
        %v4000 = vunpack.c.l.b16 %v3344
        %v4001 = vunpack.c.l.b16 %v3345
        %v4002 = vunpack.c.l.b16 %v3346
        %v4003 = vunpack.c.l.b16 %v3347
        %v4004 = vunpack.c.l.b16 %v3348
        %v4005 = vunpack.c.l.b16 %v3349
        %v4006 = vunpack.c.l.b16 %v3350
        %v4007 = vunpack.c.l.b16 %v3351
        %v4008 = vunpack.c.l.b16 %v3352
        %v4009 = vunpack.c.l.b16 %v3353
        %v4010 = vunpack.c.l.b16 %v3354
        %v4011 = vunpack.c.l.b16 %v3355
        %v4012 = vunpack.c.l.b16 %v3356
        %v4013 = vunpack.c.l.b16 %v3357
        %v4014 = vunpack.c.l.b16 %v3358
        %v4015 = vunpack.c.l.b16 %v3359
        %v4016 = vunpack.c.l.b16 %v3360
        %v4017 = vunpack.c.l.b16 %v3361
        %v4018 = vunpack.c.l.b16 %v3362
        %v4019 = vunpack.c.l.b16 %v3363
        %v4020 = vunpack.c.l.b16 %v3364
        %v4021 = vunpack.c.l.b16 %v3365
        %v4022 = vunpack.c.l.b16 %v3366
        %v4023 = vunpack.c.l.b16 %v3367
        %v4024 = vunpack.c.l.b16 %v3368
        %v4025 = vunpack.c.l.b16 %v3369
        %v4026 = vunpack.c.l.b16 %v3370
        %v4027 = vunpack.c.l.b16 %v3371
        %v4028 = vunpack.c.l.b16 %v3372
        %v4029 = vunpack.c.l.b16 %v3373
        %v4030 = vunpack.c.l.b16 %v3374
        %v4031 = vunpack.c.l.b16 %v3375
        %v4032 = vunpack.c.l.b16 %v3376
        %v4033 = vunpack.c.l.b16 %v3377
        %v4034 = vunpack.c.l.b16 %v3378
        %v4035 = vunpack.c.l.b16 %v3379
        %v4036 = vunpack.c.l.b16 %v3380
        %v4037 = vunpack.c.l.b16 %v3381
        %v4038 = vunpack.c.l.b16 %v3382
        %v4039 = vunpack.c.l.b16 %v3383
        %v4040 = vunpack.c.l.b16 %v3384
        %v4041 = vunpack.c.l.b16 %v3385
        %v4042 = vunpack.c.l.b16 %v3386
        %v4043 = vunpack.c.l.b16 %v3387
        %v4044 = vunpack.c.l.b16 %v3388
        %v4045 = vunpack.c.l.b16 %v3389
        %v4046 = vunpack.c.l.b16 %v3390
        %v4047 = vunpack.c.l.b16 %v3391
        %v4048 = vunpack.c.l.b16 %v3392
        %v4049 = vunpack.c.l.b16 %v3393
        %v4050 = vunpack.c.l.b16 %v3394
        %v4051 = vunpack.c.l.b16 %v3395
        %v4052 = vunpack.c.l.b16 %v3396
        %v4053 = vunpack.c.l.b16 %v3397
        %v4054 = vunpack.c.l.b16 %v3398
        %v4055 = vunpack.c.l.b16 %v3399
        %v4056 = vunpack.c.l.b16 %v3400
        %v4057 = vunpack.c.l.b16 %v3401
        %v4058 = vunpack.c.l.b16 %v3402
        %v4059 = vunpack.c.l.b16 %v3403
        %v4060 = vunpack.c.l.b16 %v3404
        %v4061 = vunpack.c.l.b16 %v3405
        %v4062 = vunpack.c.l.b16 %v3406
        %v4063 = vunpack.c.l.b16 %v3407
        %v4064 = vunpack.c.l.b16 %v3408
        %v4065 = vunpack.c.l.b16 %v3409
        %v4066 = vunpack.c.l.b16 %v3410
        %v4067 = vunpack.c.l.b16 %v3411
        %v4068 = vunpack.c.l.b16 %v3412
        %v4069 = vunpack.c.l.b16 %v3413
        %v4070 = vunpack.c.l.b16 %v3414
        %v4071 = vunpack.c.l.b16 %v3415
        %v4072 = vunpack.c.l.b16 %v3416
        %v4073 = vunpack.c.l.b16 %v3417
        %v4074 = vunpack.c.l.b16 %v3418
        %v4075 = vunpack.c.l.b16 %v3419
        %v4076 = vunpack.c.l.b16 %v3420
        %v4077 = vunpack.c.l.b16 %v3421
        %v4078 = vunpack.c.l.b16 %v3422
        %v4079 = vunpack.c.l.b16 %v3423
        %v4080 = vunpack.c.l.b16 %v3424
        %v4081 = vunpack.c.l.b16 %v3425
        %v4082 = vunpack.c.l.b16 %v3426
        %v4083 = vunpack.c.l.b16 %v3427
        %v4084 = vunpack.c.l.b16 %v3428
        %v4085 = vunpack.c.l.b16 %v3429
        %v4086 = vunpack.c.l.b16 %v3430
        %v4087 = vunpack.c.l.b16 %v3431
        %v4088 = vunpack.c.l.b16 %v3432
        %v4089 = vunpack.c.l.b16 %v3433
        %v4090 = vunpack.c.l.b16 %v3434
        %v4091 = vunpack.c.l.b16 %v3435
        %v4092 = vunpack.c.l.b16 %v3436
        %v4093 = vunpack.c.l.b16 %v3437
        %v4094 = vunpack.c.l.b16 %v3438
        %v4095 = vunpack.c.l.b16 %v3439
        %v4096 = vunpack.c.l.b16 %v3440
        %v4097 = vunpack.c.l.b16 %v3441
        %v4098 = vunpack.c.l.b16 %v3442
        %v4099 = vunpack.c.l.b16 %v3443
        %v4100 = vunpack.c.l.b16 %v3444
        %v4101 = vunpack.c.l.b16 %v3445
        %v4102 = vunpack.c.l.b16 %v3446
        %v4103 = vunpack.c.l.b16 %v3447
        %v4104 = vunpack.c.l.b16 %v3448
        %v4105 = vunpack.c.l.b16 %v3449
        %v4106 = vunpack.c.l.b16 %v3450
        %v4107 = vunpack.c.l.b16 %v3451
        %v4108 = vunpack.c.l.b16 %v3452
        %v4109 = vunpack.c.l.b16 %v3453
        %v4110 = vunpack.c.l.b16 %v3454
        %v4111 = vunpack.c.l.b16 %v3455
        %v4112 = vunpack.c.l.b16 %v3456
        %v4113 = vunpack.c.l.b16 %v3457
        %v4114 = vunpack.c.l.b16 %v3458
        %v4115 = vunpack.c.l.b16 %v3459
        %v4116 = vunpack.c.l.b16 %v3460
        %v4117 = vunpack.c.l.b16 %v3461
        %v4118 = vunpack.c.l.b16 %v3462
        %v4119 = vunpack.c.l.b16 %v3463
        %v4120 = vunpack.c.l.b16 %v3464
        %v4121 = vunpack.c.l.b16 %v3465
        %v4122 = vunpack.c.l.b16 %v3466
        %v4123 = vunpack.c.l.b16 %v3467
        %v4124 = vunpack.c.l.b16 %v3468
        %v4125 = vunpack.c.l.b16 %v3469
        %v4126 = vunpack.c.l.b16 %v3470
        %v4127 = vunpack.c.l.b16 %v3471
        %v4128 = vunpack.c.l.b16 %v3472
        %v4129 = vunpack.c.l.b16 %v3473
        %v4130 = vunpack.c.l.b16 %v3474
        %v4131 = vunpack.c.l.b16 %v3475
        %v4132 = vunpack.c.l.b16 %v3476
        %v4133 = vunpack.c.l.b16 %v3477
        %v4134 = vunpack.c.l.b16 %v3478
        %v4135 = vunpack.c.l.b16 %v3479
        %v4136 = vunpack.c.l.b16 %v3480
        %v4137 = vpack.c.b16 %v3994, %v3993
        %v4138 = vpack.c.b16 %v3996, %v3995
        %v4139 = vpack.c.b16 %v3998, %v3997
        %v4140 = vpack.c.b16 %v4000, %v3999
        %v4141 = vpack.c.b16 %v4002, %v4001
        %v4142 = vpack.c.b16 %v4004, %v4003
        %v4143 = vpack.c.b16 %v4006, %v4005
        %v4144 = vpack.c.b16 %v4008, %v4007
        %v4145 = vpack.c.b16 %v4010, %v4009
        %v4146 = vpack.c.b16 %v4012, %v4011
        %v4147 = vpack.c.b16 %v4014, %v4013
        %v4148 = vpack.c.b16 %v4016, %v4015
        %v4149 = vpack.c.b16 %v4018, %v4017
        %v4150 = vpack.c.b16 %v4020, %v4019
        %v4151 = vpack.c.b16 %v4022, %v4021
        %v4152 = vpack.c.b16 %v4024, %v4023
        %v4153 = vpack.c.b16 %v4026, %v4025
        %v4154 = vpack.c.b16 %v4028, %v4027
        %v4155 = vpack.c.b16 %v4030, %v4029
        %v4156 = vpack.c.b16 %v4032, %v4031
        %v4157 = vpack.c.b16 %v4034, %v4033
        %v4158 = vpack.c.b16 %v4036, %v4035
        %v4159 = vpack.c.b16 %v4038, %v4037
        %v4160 = vpack.c.b16 %v4040, %v4039
        %v4161 = vpack.c.b16 %v4042, %v4041
        %v4162 = vpack.c.b16 %v4044, %v4043
        %v4163 = vpack.c.b16 %v4046, %v4045
        %v4164 = vpack.c.b16 %v4048, %v4047
        %v4165 = vpack.c.b16 %v4050, %v4049
        %v4166 = vpack.c.b16 %v4052, %v4051
        %v4167 = vpack.c.b16 %v4054, %v4053
        %v4168 = vpack.c.b16 %v4056, %v4055
        %v4169 = vpack.c.b16 %v4058, %v4057
        %v4170 = vpack.c.b16 %v4060, %v4059
        %v4171 = vpack.c.b16 %v4062, %v4061
        %v4172 = vpack.c.b16 %v4064, %v4063
        %v4173 = vpack.c.b16 %v4066, %v4065
        %v4174 = vpack.c.b16 %v4068, %v4067
        %v4175 = vpack.c.b16 %v4070, %v4069
        %v4176 = vpack.c.b16 %v4072, %v4071
        %v4177 = vpack.c.b16 %v4074, %v4073
        %v4178 = vpack.c.b16 %v4076, %v4075
        %v4179 = vpack.c.b16 %v4078, %v4077
        %v4180 = vpack.c.b16 %v4080, %v4079
        %v4181 = vpack.c.b16 %v4082, %v4081
        %v4182 = vpack.c.b16 %v4084, %v4083
        %v4183 = vpack.c.b16 %v4086, %v4085
        %v4184 = vpack.c.b16 %v4088, %v4087
        %v4185 = vpack.c.b16 %v4090, %v4089
        %v4186 = vpack.c.b16 %v4092, %v4091
        %v4187 = vpack.c.b16 %v4094, %v4093
        %v4188 = vpack.c.b16 %v4096, %v4095
        %v4189 = vpack.c.b16 %v4098, %v4097
        %v4190 = vpack.c.b16 %v4100, %v4099
        %v4191 = vpack.c.b16 %v4102, %v4101
        %v4192 = vpack.c.b16 %v4104, %v4103
        %v4193 = vpack.c.b16 %v4106, %v4105
        %v4194 = vpack.c.b16 %v4108, %v4107
        %v4195 = vpack.c.b16 %v4110, %v4109
        %v4196 = vpack.c.b16 %v4112, %v4111
        %v4197 = vpack.c.b16 %v4114, %v4113
        %v4198 = vpack.c.b16 %v4116, %v4115
        %v4199 = vpack.c.b16 %v4118, %v4117
        %v4200 = vpack.c.b16 %v4120, %v4119
        %v4201 = vpack.c.b16 %v4122, %v4121
        %v4202 = vpack.c.b16 %v4124, %v4123
        %v4203 = vpack.c.b16 %v4126, %v4125
        %v4204 = vpack.c.b16 %v4128, %v4127
        %v4205 = vpack.c.b16 %v4130, %v4129
        %v4206 = vpack.c.b16 %v4132, %v4131
        %v4207 = vpack.c.b16 %v4134, %v4133
        %v4208 = vpack.c.b16 %v4136, %v4135
        %4281 = vmatpush.bf16.msra.mxu0 %v4144
        %4282 = vmatpush.bf16.msra.mxu0 %v4143
        %4283 = vmatpush.bf16.msra.mxu0 %v4142
        %4284 = vmatpush.bf16.msra.mxu0 %v4141
        %4285 = vmatpush.bf16.msra.mxu0 %v4140
        %4286 = vmatpush.bf16.msra.mxu0 %v4139
        %4287 = vmatpush.bf16.msra.mxu0 %v4138
        %4288 = vmatpush.bf16.msra.mxu0 %v4137
        %4289 = vmatmul.bf16.gmra.mxu0 %v3705
        %v4290 = vpop.f32.mrf.mxu0
        %v4291 = vadd.f32 0.0, %v4290
        %v4292 = vpop.f32.mrf.mxu0
        %v4293 = vadd.f32 0.0, %v4292
        %4294 = vmatmul.bf16.gmra.mxu0 %v3714
        %v4295 = vpop.f32.mrf.mxu0
        %v4296 = vadd.f32 0.0, %v4295
        %v4297 = vpop.f32.mrf.mxu0
        %v4298 = vadd.f32 0.0, %v4297
        %4299 = vmatmul.bf16.gmra.mxu0 %v3723
        %v4300 = vpop.f32.mrf.mxu0
        %v4301 = vadd.f32 0.0, %v4300
        %v4302 = vpop.f32.mrf.mxu0
        %v4303 = vadd.f32 0.0, %v4302
        %4304 = vmatmul.bf16.gmra.mxu0 %v3732
        %v4305 = vpop.f32.mrf.mxu0
        %v4306 = vadd.f32 0.0, %v4305
        %v4307 = vpop.f32.mrf.mxu0
        %v4308 = vadd.f32 0.0, %v4307
        %4309 = vmatmul.bf16.gmra.mxu0 %v3741
        %v4310 = vpop.f32.mrf.mxu0
        %v4311 = vadd.f32 0.0, %v4310
        %v4312 = vpop.f32.mrf.mxu0
        %v4313 = vadd.f32 0.0, %v4312
        %4314 = vmatmul.bf16.gmra.mxu0 %v3750
        %v4315 = vpop.f32.mrf.mxu0
        %v4316 = vadd.f32 0.0, %v4315
        %v4317 = vpop.f32.mrf.mxu0
        %v4318 = vadd.f32 0.0, %v4317
        %4319 = vmatmul.bf16.gmra.mxu0 %v3759
        %v4320 = vpop.f32.mrf.mxu0
        %v4321 = vadd.f32 0.0, %v4320
        %v4322 = vpop.f32.mrf.mxu0
        %v4323 = vadd.f32 0.0, %v4322
        %4324 = vmatmul.bf16.gmra.mxu0 %v3768
        %v4325 = vpop.f32.mrf.mxu0
        %v4326 = vadd.f32 0.0, %v4325
        %v4327 = vpop.f32.mrf.mxu0
        %v4328 = vadd.f32 0.0, %v4327
        %4329 = vdwg.mxu0
        %4330 = vmatpush.bf16.msra.mxu0 %v4152
        %4331 = vmatpush.bf16.msra.mxu0 %v4151
        %4332 = vmatpush.bf16.msra.mxu0 %v4150
        %4333 = vmatpush.bf16.msra.mxu0 %v4149
        %4334 = vmatpush.bf16.msra.mxu0 %v4148
        %4335 = vmatpush.bf16.msra.mxu0 %v4147
        %4336 = vmatpush.bf16.msra.mxu0 %v4146
        %4337 = vmatpush.bf16.msra.mxu0 %v4145
        %4338 = vmatmul.bf16.gmra.mxu0 %v3706
        %v4339 = vpop.f32.mrf.mxu0
        %v4340 = vadd.f32 %v4291, %v4339
        %v4341 = vpop.f32.mrf.mxu0
        %v4342 = vadd.f32 %v4293, %v4341
        %4343 = vmatmul.bf16.gmra.mxu0 %v3715
        %v4344 = vpop.f32.mrf.mxu0
        %v4345 = vadd.f32 %v4296, %v4344
        %v4346 = vpop.f32.mrf.mxu0
        %v4347 = vadd.f32 %v4298, %v4346
        %4348 = vmatmul.bf16.gmra.mxu0 %v3724
        %v4349 = vpop.f32.mrf.mxu0
        %v4350 = vadd.f32 %v4301, %v4349
        %v4351 = vpop.f32.mrf.mxu0
        %v4352 = vadd.f32 %v4303, %v4351
        %4353 = vmatmul.bf16.gmra.mxu0 %v3733
        %v4354 = vpop.f32.mrf.mxu0
        %v4355 = vadd.f32 %v4306, %v4354
        %v4356 = vpop.f32.mrf.mxu0
        %v4357 = vadd.f32 %v4308, %v4356
        %4358 = vmatmul.bf16.gmra.mxu0 %v3742
        %v4359 = vpop.f32.mrf.mxu0
        %v4360 = vadd.f32 %v4311, %v4359
        %v4361 = vpop.f32.mrf.mxu0
        %v4362 = vadd.f32 %v4313, %v4361
        %4363 = vmatmul.bf16.gmra.mxu0 %v3751
        %v4364 = vpop.f32.mrf.mxu0
        %v4365 = vadd.f32 %v4316, %v4364
        %v4366 = vpop.f32.mrf.mxu0
        %v4367 = vadd.f32 %v4318, %v4366
        %4368 = vmatmul.bf16.gmra.mxu0 %v3760
        %v4369 = vpop.f32.mrf.mxu0
        %v4370 = vadd.f32 %v4321, %v4369
        %v4371 = vpop.f32.mrf.mxu0
        %v4372 = vadd.f32 %v4323, %v4371
        %4373 = vmatmul.bf16.gmra.mxu0 %v3769
        %v4374 = vpop.f32.mrf.mxu0
        %v4375 = vadd.f32 %v4326, %v4374
        %v4376 = vpop.f32.mrf.mxu0
        %v4377 = vadd.f32 %v4328, %v4376
        %4378 = vdwg.mxu0
        %4379 = vmatpush.bf16.msra.mxu0 %v4160
        %4380 = vmatpush.bf16.msra.mxu0 %v4159
        %4381 = vmatpush.bf16.msra.mxu0 %v4158
        %4382 = vmatpush.bf16.msra.mxu0 %v4157
        %4383 = vmatpush.bf16.msra.mxu0 %v4156
        %4384 = vmatpush.bf16.msra.mxu0 %v4155
        %4385 = vmatpush.bf16.msra.mxu0 %v4154
        %4386 = vmatpush.bf16.msra.mxu0 %v4153
        %4387 = vmatmul.bf16.gmra.mxu0 %v3707
        %v4388 = vpop.f32.mrf.mxu0
        %v4389 = vadd.f32 %v4340, %v4388
        %v4390 = vpop.f32.mrf.mxu0
        %v4391 = vadd.f32 %v4342, %v4390
        %4392 = vmatmul.bf16.gmra.mxu0 %v3716
        %v4393 = vpop.f32.mrf.mxu0
        %v4394 = vadd.f32 %v4345, %v4393
        %v4395 = vpop.f32.mrf.mxu0
        %v4396 = vadd.f32 %v4347, %v4395
        %4397 = vmatmul.bf16.gmra.mxu0 %v3725
        %v4398 = vpop.f32.mrf.mxu0
        %v4399 = vadd.f32 %v4350, %v4398
        %v4400 = vpop.f32.mrf.mxu0
        %v4401 = vadd.f32 %v4352, %v4400
        %4402 = vmatmul.bf16.gmra.mxu0 %v3734
        %v4403 = vpop.f32.mrf.mxu0
        %v4404 = vadd.f32 %v4355, %v4403
        %v4405 = vpop.f32.mrf.mxu0
        %v4406 = vadd.f32 %v4357, %v4405
        %4407 = vmatmul.bf16.gmra.mxu0 %v3743
        %v4408 = vpop.f32.mrf.mxu0
        %v4409 = vadd.f32 %v4360, %v4408
        %v4410 = vpop.f32.mrf.mxu0
        %v4411 = vadd.f32 %v4362, %v4410
        %4412 = vmatmul.bf16.gmra.mxu0 %v3752
        %v4413 = vpop.f32.mrf.mxu0
        %v4414 = vadd.f32 %v4365, %v4413
        %v4415 = vpop.f32.mrf.mxu0
        %v4416 = vadd.f32 %v4367, %v4415
        %4417 = vmatmul.bf16.gmra.mxu0 %v3761
        %v4418 = vpop.f32.mrf.mxu0
        %v4419 = vadd.f32 %v4370, %v4418
        %v4420 = vpop.f32.mrf.mxu0
        %v4421 = vadd.f32 %v4372, %v4420
        %4422 = vmatmul.bf16.gmra.mxu0 %v3770
        %v4423 = vpop.f32.mrf.mxu0
        %v4424 = vadd.f32 %v4375, %v4423
        %v4425 = vpop.f32.mrf.mxu0
        %v4426 = vadd.f32 %v4377, %v4425
        %4427 = vdwg.mxu0
        %4428 = vmatpush.bf16.msra.mxu0 %v4168
        %4429 = vmatpush.bf16.msra.mxu0 %v4167
        %4430 = vmatpush.bf16.msra.mxu0 %v4166
        %4431 = vmatpush.bf16.msra.mxu0 %v4165
        %4432 = vmatpush.bf16.msra.mxu0 %v4164
        %4433 = vmatpush.bf16.msra.mxu0 %v4163
        %4434 = vmatpush.bf16.msra.mxu0 %v4162
        %4435 = vmatpush.bf16.msra.mxu0 %v4161
        %4436 = vmatmul.bf16.gmra.mxu0 %v3708
        %v4437 = vpop.f32.mrf.mxu0
        %v4438 = vadd.f32 %v4389, %v4437
        %v4439 = vpop.f32.mrf.mxu0
        %v4440 = vadd.f32 %v4391, %v4439
        %4441 = vmatmul.bf16.gmra.mxu0 %v3717
        %v4442 = vpop.f32.mrf.mxu0
        %v4443 = vadd.f32 %v4394, %v4442
        %v4444 = vpop.f32.mrf.mxu0
        %v4445 = vadd.f32 %v4396, %v4444
        %4446 = vmatmul.bf16.gmra.mxu0 %v3726
        %v4447 = vpop.f32.mrf.mxu0
        %v4448 = vadd.f32 %v4399, %v4447
        %v4449 = vpop.f32.mrf.mxu0
        %v4450 = vadd.f32 %v4401, %v4449
        %4451 = vmatmul.bf16.gmra.mxu0 %v3735
        %v4452 = vpop.f32.mrf.mxu0
        %v4453 = vadd.f32 %v4404, %v4452
        %v4454 = vpop.f32.mrf.mxu0
        %v4455 = vadd.f32 %v4406, %v4454
        %4456 = vmatmul.bf16.gmra.mxu0 %v3744
        %v4457 = vpop.f32.mrf.mxu0
        %v4458 = vadd.f32 %v4409, %v4457
        %v4459 = vpop.f32.mrf.mxu0
        %v4460 = vadd.f32 %v4411, %v4459
        %4461 = vmatmul.bf16.gmra.mxu0 %v3753
        %v4462 = vpop.f32.mrf.mxu0
        %v4463 = vadd.f32 %v4414, %v4462
        %v4464 = vpop.f32.mrf.mxu0
        %v4465 = vadd.f32 %v4416, %v4464
        %4466 = vmatmul.bf16.gmra.mxu0 %v3762
        %v4467 = vpop.f32.mrf.mxu0
        %v4468 = vadd.f32 %v4419, %v4467
        %v4469 = vpop.f32.mrf.mxu0
        %v4470 = vadd.f32 %v4421, %v4469
        %4471 = vmatmul.bf16.gmra.mxu0 %v3771
        %v4472 = vpop.f32.mrf.mxu0
        %v4473 = vadd.f32 %v4424, %v4472
        %v4474 = vpop.f32.mrf.mxu0
        %v4475 = vadd.f32 %v4426, %v4474
        %4476 = vdwg.mxu0
        %4477 = vmatpush.bf16.msra.mxu0 %v4176
        %4478 = vmatpush.bf16.msra.mxu0 %v4175
        %4479 = vmatpush.bf16.msra.mxu0 %v4174
        %4480 = vmatpush.bf16.msra.mxu0 %v4173
        %4481 = vmatpush.bf16.msra.mxu0 %v4172
        %4482 = vmatpush.bf16.msra.mxu0 %v4171
        %4483 = vmatpush.bf16.msra.mxu0 %v4170
        %4484 = vmatpush.bf16.msra.mxu0 %v4169
        %4485 = vmatmul.bf16.gmra.mxu0 %v3709
        %v4486 = vpop.f32.mrf.mxu0
        %v4487 = vadd.f32 %v4438, %v4486
        %v4488 = vpop.f32.mrf.mxu0
        %v4489 = vadd.f32 %v4440, %v4488
        %4490 = vmatmul.bf16.gmra.mxu0 %v3718
        %v4491 = vpop.f32.mrf.mxu0
        %v4492 = vadd.f32 %v4443, %v4491
        %v4493 = vpop.f32.mrf.mxu0
        %v4494 = vadd.f32 %v4445, %v4493
        %4495 = vmatmul.bf16.gmra.mxu0 %v3727
        %v4496 = vpop.f32.mrf.mxu0
        %v4497 = vadd.f32 %v4448, %v4496
        %v4498 = vpop.f32.mrf.mxu0
        %v4499 = vadd.f32 %v4450, %v4498
        %4500 = vmatmul.bf16.gmra.mxu0 %v3736
        %v4501 = vpop.f32.mrf.mxu0
        %v4502 = vadd.f32 %v4453, %v4501
        %v4503 = vpop.f32.mrf.mxu0
        %v4504 = vadd.f32 %v4455, %v4503
        %4505 = vmatmul.bf16.gmra.mxu0 %v3745
        %v4506 = vpop.f32.mrf.mxu0
        %v4507 = vadd.f32 %v4458, %v4506
        %v4508 = vpop.f32.mrf.mxu0
        %v4509 = vadd.f32 %v4460, %v4508
        %4510 = vmatmul.bf16.gmra.mxu0 %v3754
        %v4511 = vpop.f32.mrf.mxu0
        %v4512 = vadd.f32 %v4463, %v4511
        %v4513 = vpop.f32.mrf.mxu0
        %v4514 = vadd.f32 %v4465, %v4513
        %4515 = vmatmul.bf16.gmra.mxu0 %v3763
        %v4516 = vpop.f32.mrf.mxu0
        %v4517 = vadd.f32 %v4468, %v4516
        %v4518 = vpop.f32.mrf.mxu0
        %v4519 = vadd.f32 %v4470, %v4518
        %4520 = vmatmul.bf16.gmra.mxu0 %v3772
        %v4521 = vpop.f32.mrf.mxu0
        %v4522 = vadd.f32 %v4473, %v4521
        %v4523 = vpop.f32.mrf.mxu0
        %v4524 = vadd.f32 %v4475, %v4523
        %4525 = vdwg.mxu0
        %4526 = vmatpush.bf16.msra.mxu0 %v4184
        %4527 = vmatpush.bf16.msra.mxu0 %v4183
        %4528 = vmatpush.bf16.msra.mxu0 %v4182
        %4529 = vmatpush.bf16.msra.mxu0 %v4181
        %4530 = vmatpush.bf16.msra.mxu0 %v4180
        %4531 = vmatpush.bf16.msra.mxu0 %v4179
        %4532 = vmatpush.bf16.msra.mxu0 %v4178
        %4533 = vmatpush.bf16.msra.mxu0 %v4177
        %4534 = vmatmul.bf16.gmra.mxu0 %v3710
        %v4535 = vpop.f32.mrf.mxu0
        %v4536 = vadd.f32 %v4487, %v4535
        %v4537 = vpop.f32.mrf.mxu0
        %v4538 = vadd.f32 %v4489, %v4537
        %4539 = vmatmul.bf16.gmra.mxu0 %v3719
        %v4540 = vpop.f32.mrf.mxu0
        %v4541 = vadd.f32 %v4492, %v4540
        %v4542 = vpop.f32.mrf.mxu0
        %v4543 = vadd.f32 %v4494, %v4542
        %4544 = vmatmul.bf16.gmra.mxu0 %v3728
        %v4545 = vpop.f32.mrf.mxu0
        %v4546 = vadd.f32 %v4497, %v4545
        %v4547 = vpop.f32.mrf.mxu0
        %v4548 = vadd.f32 %v4499, %v4547
        %4549 = vmatmul.bf16.gmra.mxu0 %v3737
        %v4550 = vpop.f32.mrf.mxu0
        %v4551 = vadd.f32 %v4502, %v4550
        %v4552 = vpop.f32.mrf.mxu0
        %v4553 = vadd.f32 %v4504, %v4552
        %4554 = vmatmul.bf16.gmra.mxu0 %v3746
        %v4555 = vpop.f32.mrf.mxu0
        %v4556 = vadd.f32 %v4507, %v4555
        %v4557 = vpop.f32.mrf.mxu0
        %v4558 = vadd.f32 %v4509, %v4557
        %4559 = vmatmul.bf16.gmra.mxu0 %v3755
        %v4560 = vpop.f32.mrf.mxu0
        %v4561 = vadd.f32 %v4512, %v4560
        %v4562 = vpop.f32.mrf.mxu0
        %v4563 = vadd.f32 %v4514, %v4562
        %4564 = vmatmul.bf16.gmra.mxu0 %v3764
        %v4565 = vpop.f32.mrf.mxu0
        %v4566 = vadd.f32 %v4517, %v4565
        %v4567 = vpop.f32.mrf.mxu0
        %v4568 = vadd.f32 %v4519, %v4567
        %4569 = vmatmul.bf16.gmra.mxu0 %v3773
        %v4570 = vpop.f32.mrf.mxu0
        %v4571 = vadd.f32 %v4522, %v4570
        %v4572 = vpop.f32.mrf.mxu0
        %v4573 = vadd.f32 %v4524, %v4572
        %4574 = vdwg.mxu0
        %4575 = vmatpush.bf16.msra.mxu0 %v4192
        %4576 = vmatpush.bf16.msra.mxu0 %v4191
        %4577 = vmatpush.bf16.msra.mxu0 %v4190
        %4578 = vmatpush.bf16.msra.mxu0 %v4189
        %4579 = vmatpush.bf16.msra.mxu0 %v4188
        %4580 = vmatpush.bf16.msra.mxu0 %v4187
        %4581 = vmatpush.bf16.msra.mxu0 %v4186
        %4582 = vmatpush.bf16.msra.mxu0 %v4185
        %4583 = vmatmul.bf16.gmra.mxu0 %v3711
        %v4584 = vpop.f32.mrf.mxu0
        %v4585 = vadd.f32 %v4536, %v4584
        %v4586 = vpop.f32.mrf.mxu0
        %v4587 = vadd.f32 %v4538, %v4586
        %4588 = vmatmul.bf16.gmra.mxu0 %v3720
        %v4589 = vpop.f32.mrf.mxu0
        %v4590 = vadd.f32 %v4541, %v4589
        %v4591 = vpop.f32.mrf.mxu0
        %v4592 = vadd.f32 %v4543, %v4591
        %4593 = vmatmul.bf16.gmra.mxu0 %v3729
        %v4594 = vpop.f32.mrf.mxu0
        %v4595 = vadd.f32 %v4546, %v4594
        %v4596 = vpop.f32.mrf.mxu0
        %v4597 = vadd.f32 %v4548, %v4596
        %4598 = vmatmul.bf16.gmra.mxu0 %v3738
        %v4599 = vpop.f32.mrf.mxu0
        %v4600 = vadd.f32 %v4551, %v4599
        %v4601 = vpop.f32.mrf.mxu0
        %v4602 = vadd.f32 %v4553, %v4601
        %4603 = vmatmul.bf16.gmra.mxu0 %v3747
        %v4604 = vpop.f32.mrf.mxu0
        %v4605 = vadd.f32 %v4556, %v4604
        %v4606 = vpop.f32.mrf.mxu0
        %v4607 = vadd.f32 %v4558, %v4606
        %4608 = vmatmul.bf16.gmra.mxu0 %v3756
        %v4609 = vpop.f32.mrf.mxu0
        %v4610 = vadd.f32 %v4561, %v4609
        %v4611 = vpop.f32.mrf.mxu0
        %v4612 = vadd.f32 %v4563, %v4611
        %4613 = vmatmul.bf16.gmra.mxu0 %v3765
        %v4614 = vpop.f32.mrf.mxu0
        %v4615 = vadd.f32 %v4566, %v4614
        %v4616 = vpop.f32.mrf.mxu0
        %v4617 = vadd.f32 %v4568, %v4616
        %4618 = vmatmul.bf16.gmra.mxu0 %v3774
        %v4619 = vpop.f32.mrf.mxu0
        %v4620 = vadd.f32 %v4571, %v4619
        %v4621 = vpop.f32.mrf.mxu0
        %v4622 = vadd.f32 %v4573, %v4621
        %4623 = vdwg.mxu0
        %4624 = vmatpush.bf16.msra.mxu0 %v4200
        %4625 = vmatpush.bf16.msra.mxu0 %v4199
        %4626 = vmatpush.bf16.msra.mxu0 %v4198
        %4627 = vmatpush.bf16.msra.mxu0 %v4197
        %4628 = vmatpush.bf16.msra.mxu0 %v4196
        %4629 = vmatpush.bf16.msra.mxu0 %v4195
        %4630 = vmatpush.bf16.msra.mxu0 %v4194
        %4631 = vmatpush.bf16.msra.mxu0 %v4193
        %4632 = vmatmul.bf16.gmra.mxu0 %v3712
        %v4633 = vpop.f32.mrf.mxu0
        %v4634 = vadd.f32 %v4585, %v4633
        %v4635 = vpop.f32.mrf.mxu0
        %v4636 = vadd.f32 %v4587, %v4635
        %4637 = vmatmul.bf16.gmra.mxu0 %v3721
        %v4638 = vpop.f32.mrf.mxu0
        %v4639 = vadd.f32 %v4590, %v4638
        %v4640 = vpop.f32.mrf.mxu0
        %v4641 = vadd.f32 %v4592, %v4640
        %4642 = vmatmul.bf16.gmra.mxu0 %v3730
        %v4643 = vpop.f32.mrf.mxu0
        %v4644 = vadd.f32 %v4595, %v4643
        %v4645 = vpop.f32.mrf.mxu0
        %v4646 = vadd.f32 %v4597, %v4645
        %4647 = vmatmul.bf16.gmra.mxu0 %v3739
        %v4648 = vpop.f32.mrf.mxu0
        %v4649 = vadd.f32 %v4600, %v4648
        %v4650 = vpop.f32.mrf.mxu0
        %v4651 = vadd.f32 %v4602, %v4650
        %4652 = vmatmul.bf16.gmra.mxu0 %v3748
        %v4653 = vpop.f32.mrf.mxu0
        %v4654 = vadd.f32 %v4605, %v4653
        %v4655 = vpop.f32.mrf.mxu0
        %v4656 = vadd.f32 %v4607, %v4655
        %4657 = vmatmul.bf16.gmra.mxu0 %v3757
        %v4658 = vpop.f32.mrf.mxu0
        %v4659 = vadd.f32 %v4610, %v4658
        %v4660 = vpop.f32.mrf.mxu0
        %v4661 = vadd.f32 %v4612, %v4660
        %4662 = vmatmul.bf16.gmra.mxu0 %v3766
        %v4663 = vpop.f32.mrf.mxu0
        %v4664 = vadd.f32 %v4615, %v4663
        %v4665 = vpop.f32.mrf.mxu0
        %v4666 = vadd.f32 %v4617, %v4665
        %4667 = vmatmul.bf16.gmra.mxu0 %v3775
        %v4668 = vpop.f32.mrf.mxu0
        %v4669 = vadd.f32 %v4620, %v4668
        %v4670 = vpop.f32.mrf.mxu0
        %v4671 = vadd.f32 %v4622, %v4670
        %4672 = vdwg.mxu0
        %4673 = vmatpush.bf16.msra.mxu0 %v4208
        %4674 = vmatpush.bf16.msra.mxu0 %v4207
        %4675 = vmatpush.bf16.msra.mxu0 %v4206
        %4676 = vmatpush.bf16.msra.mxu0 %v4205
        %4677 = vmatpush.bf16.msra.mxu0 %v4204
        %4678 = vmatpush.bf16.msra.mxu0 %v4203
        %4679 = vmatpush.bf16.msra.mxu0 %v4202
        %4680 = vmatpush.bf16.msra.mxu0 %v4201
        %4681 = vmatmul.bf16.gmra.mxu0 %v3713
        %v4682 = vpop.f32.mrf.mxu0
        %v4683 = vadd.f32 %v4634, %v4682
        %v4684 = vpop.f32.mrf.mxu0
        %v4685 = vadd.f32 %v4636, %v4684
        %4686 = vmatmul.bf16.gmra.mxu0 %v3722
        %v4687 = vpop.f32.mrf.mxu0
        %v4688 = vadd.f32 %v4639, %v4687
        %v4689 = vpop.f32.mrf.mxu0
        %v4690 = vadd.f32 %v4641, %v4689
        %4691 = vmatmul.bf16.gmra.mxu0 %v3731
        %v4692 = vpop.f32.mrf.mxu0
        %v4693 = vadd.f32 %v4644, %v4692
        %v4694 = vpop.f32.mrf.mxu0
        %v4695 = vadd.f32 %v4646, %v4694
        %4696 = vmatmul.bf16.gmra.mxu0 %v3740
        %v4697 = vpop.f32.mrf.mxu0
        %v4698 = vadd.f32 %v4649, %v4697
        %v4699 = vpop.f32.mrf.mxu0
        %v4700 = vadd.f32 %v4651, %v4699
        %4701 = vmatmul.bf16.gmra.mxu0 %v3749
        %v4702 = vpop.f32.mrf.mxu0
        %v4703 = vadd.f32 %v4654, %v4702
        %v4704 = vpop.f32.mrf.mxu0
        %v4705 = vadd.f32 %v4656, %v4704
        %4706 = vmatmul.bf16.gmra.mxu0 %v3758
        %v4707 = vpop.f32.mrf.mxu0
        %v4708 = vadd.f32 %v4659, %v4707
        %v4709 = vpop.f32.mrf.mxu0
        %v4710 = vadd.f32 %v4661, %v4709
        %4711 = vmatmul.bf16.gmra.mxu0 %v3767
        %v4712 = vpop.f32.mrf.mxu0
        %v4713 = vadd.f32 %v4664, %v4712
        %v4714 = vpop.f32.mrf.mxu0
        %v4715 = vadd.f32 %v4666, %v4714
        %4716 = vmatmul.bf16.gmra.mxu0 %v3776
        %v4717 = vpop.f32.mrf.mxu0
        %v4718 = vadd.f32 %v4669, %v4717
        %v4719 = vpop.f32.mrf.mxu0
        %v4720 = vadd.f32 %v4671, %v4719
        %4721 = vdwg.mxu0
        %v4722 = vld [vmem:[%s7] sm:$0x1]
        %v4724 = vperm.slane %v4722, 0
        %v4726 = vmul.f32 %v4683, %v4724
        %v4727 = vmul.f32 %v4685, %v4724
        %v4728 = vmul.f32 %v4688, %v4724
        %v4729 = vmul.f32 %v4690, %v4724
        %v4730 = vmul.f32 %v4693, %v4724
        %v4731 = vmul.f32 %v4695, %v4724
        %v4732 = vmul.f32 %v4698, %v4724
        %v4733 = vmul.f32 %v4700, %v4724
        %v4734 = vmul.f32 %v4703, %v4724
        %v4735 = vmul.f32 %v4705, %v4724
        %v4736 = vmul.f32 %v4708, %v4724
        %v4737 = vmul.f32 %v4710, %v4724
        %v4738 = vmul.f32 %v4713, %v4724
        %v4739 = vmul.f32 %v4715, %v4724
        %v4740 = vmul.f32 %v4718, %v4724
        %v4741 = vmul.f32 %v4720, %v4724
        %v4742 = vld [vmem:[%s8] sm:$0x1]
        %v4744 = vperm.slane %v4742, 0
        %v4746 = vadd.f32 %v4726, %v4744
        %v4747 = vadd.f32 %v4727, %v4744
        %v4748 = vadd.f32 %v4728, %v4744
        %v4749 = vadd.f32 %v4729, %v4744
        %v4750 = vadd.f32 %v4730, %v4744
        %v4751 = vadd.f32 %v4731, %v4744
        %v4752 = vadd.f32 %v4732, %v4744
        %v4753 = vadd.f32 %v4733, %v4744
        %v4754 = vadd.f32 %v4734, %v4744
        %v4755 = vadd.f32 %v4735, %v4744
        %v4756 = vadd.f32 %v4736, %v4744
        %v4757 = vadd.f32 %v4737, %v4744
        %v4758 = vadd.f32 %v4738, %v4744
        %v4759 = vadd.f32 %v4739, %v4744
        %v4760 = vadd.f32 %v4740, %v4744
        %v4761 = vadd.f32 %v4741, %v4744
        %v4762 = vmax.f32 %v4746, 0.0
        %v4763 = vmax.f32 %v4747, 0.0
        %v4764 = vmax.f32 %v4748, 0.0
        %v4765 = vmax.f32 %v4749, 0.0
        %v4766 = vmax.f32 %v4750, 0.0
        %v4767 = vmax.f32 %v4751, 0.0
        %v4768 = vmax.f32 %v4752, 0.0
        %v4769 = vmax.f32 %v4753, 0.0
        %v4770 = vmax.f32 %v4754, 0.0
        %v4771 = vmax.f32 %v4755, 0.0
        %v4772 = vmax.f32 %v4756, 0.0
        %v4773 = vmax.f32 %v4757, 0.0
        %v4774 = vmax.f32 %v4758, 0.0
        %v4775 = vmax.f32 %v4759, 0.0
        %v4776 = vmax.f32 %v4760, 0.0
        %v4777 = vmax.f32 %v4761, 0.0
        %v4778 = vpack.c.bf16 %v4763, %v4762
        %v4779 = vpack.c.bf16 %v4765, %v4764
        %v4780 = vpack.c.bf16 %v4767, %v4766
        %v4781 = vpack.c.bf16 %v4769, %v4768
        %v4782 = vpack.c.bf16 %v4771, %v4770
        %v4783 = vpack.c.bf16 %v4773, %v4772
        %v4784 = vpack.c.bf16 %v4775, %v4774
        %v4785 = vpack.c.bf16 %v4777, %v4776
        %v4786 = vld [vmem:[#allocation13] sm:$0xf]
        %v4787 = vld [vmem:[#allocation13 + $0x4] sm:$0xf]
        %v4788 = vld [vmem:[#allocation13 + $0x8] sm:$0xf]
        %v4789 = vld [vmem:[#allocation13 + $0xc] sm:$0xf]
        %v4790 = vld [vmem:[#allocation13 + $0x10] sm:$0xf]
        %v4791 = vld [vmem:[#allocation13 + $0x14] sm:$0xf]
        %v4792 = vld [vmem:[#allocation13 + $0x18] sm:$0xf]
        %v4793 = vld [vmem:[#allocation13 + $0x1c] sm:$0xf]
        %v4794 = vld [vmem:[#allocation13 + $0x20] sm:$0xf]
        %v4795 = vld [vmem:[#allocation13 + $0x24] sm:$0xf]
        %v4796 = vld [vmem:[#allocation13 + $0x28] sm:$0xf]
        %v4797 = vld [vmem:[#allocation13 + $0x2c] sm:$0xf]
        %v4798 = vld [vmem:[#allocation13 + $0x30] sm:$0xf]
        %v4799 = vld [vmem:[#allocation13 + $0x34] sm:$0xf]
        %v4800 = vld [vmem:[#allocation13 + $0x38] sm:$0xf]
        %v4801 = vld [vmem:[#allocation13 + $0x3c] sm:$0xf]
        %v4818 = vunpack.c.l.b16 %v4786
        %v4819 = vunpack.c.l.b16 %v4787
        %v4820 = vunpack.c.l.b16 %v4788
        %v4821 = vunpack.c.l.b16 %v4789
        %v4822 = vunpack.c.l.b16 %v4790
        %v4823 = vunpack.c.l.b16 %v4791
        %v4824 = vunpack.c.l.b16 %v4792
        %v4825 = vunpack.c.l.b16 %v4793
        %v4826 = vunpack.c.l.b16 %v4794
        %v4827 = vunpack.c.l.b16 %v4795
        %v4828 = vunpack.c.l.b16 %v4796
        %v4829 = vunpack.c.l.b16 %v4797
        %v4830 = vunpack.c.l.b16 %v4798
        %v4831 = vunpack.c.l.b16 %v4799
        %v4832 = vunpack.c.l.b16 %v4800
        %v4833 = vunpack.c.l.b16 %v4801
        %v4834 = vpack.c.b16 %v4819, %v4818
        %v4835 = vpack.c.b16 %v4821, %v4820
        %v4836 = vpack.c.b16 %v4823, %v4822
        %v4837 = vpack.c.b16 %v4825, %v4824
        %v4838 = vpack.c.b16 %v4827, %v4826
        %v4839 = vpack.c.b16 %v4829, %v4828
        %v4840 = vpack.c.b16 %v4831, %v4830
        %v4841 = vpack.c.b16 %v4833, %v4832
        %4850 = vmatpush.bf16.msra.mxu0 %v4841
        %4851 = vmatpush.bf16.msra.mxu0 %v4840
        %4852 = vmatpush.bf16.msra.mxu0 %v4839
        %4853 = vmatpush.bf16.msra.mxu0 %v4838
        %4854 = vmatpush.bf16.msra.mxu0 %v4837
        %4855 = vmatpush.bf16.msra.mxu0 %v4836
        %4856 = vmatpush.bf16.msra.mxu0 %v4835
        %4857 = vmatpush.bf16.msra.mxu0 %v4834
        %4858 = vmatmul.bf16.gmra.mxu0 %v4778
        %v4859 = vpop.f32.mrf.mxu0
        %v4860 = vadd.f32 0.0, %v4859
        %v4861 = vpop.f32.mrf.mxu0
        %v4862 = vadd.f32 0.0, %v4861
        %4863 = vmatmul.bf16.gmra.mxu0 %v4779
        %v4864 = vpop.f32.mrf.mxu0
        %v4865 = vadd.f32 0.0, %v4864
        %v4866 = vpop.f32.mrf.mxu0
        %v4867 = vadd.f32 0.0, %v4866
        %4868 = vmatmul.bf16.gmra.mxu0 %v4780
        %v4869 = vpop.f32.mrf.mxu0
        %v4870 = vadd.f32 0.0, %v4869
        %v4871 = vpop.f32.mrf.mxu0
        %v4872 = vadd.f32 0.0, %v4871
        %4873 = vmatmul.bf16.gmra.mxu0 %v4781
        %v4874 = vpop.f32.mrf.mxu0
        %v4875 = vadd.f32 0.0, %v4874
        %v4876 = vpop.f32.mrf.mxu0
        %v4877 = vadd.f32 0.0, %v4876
        %4878 = vmatmul.bf16.gmra.mxu0 %v4782
        %v4879 = vpop.f32.mrf.mxu0
        %v4880 = vadd.f32 0.0, %v4879
        %v4881 = vpop.f32.mrf.mxu0
        %v4882 = vadd.f32 0.0, %v4881
        %4883 = vmatmul.bf16.gmra.mxu0 %v4783
        %v4884 = vpop.f32.mrf.mxu0
        %v4885 = vadd.f32 0.0, %v4884
        %v4886 = vpop.f32.mrf.mxu0
        %v4887 = vadd.f32 0.0, %v4886
        %4888 = vmatmul.bf16.gmra.mxu0 %v4784
        %v4889 = vpop.f32.mrf.mxu0
        %v4890 = vadd.f32 0.0, %v4889
        %v4891 = vpop.f32.mrf.mxu0
        %v4892 = vadd.f32 0.0, %v4891
        %4893 = vmatmul.bf16.gmra.mxu0 %v4785
        %v4894 = vpop.f32.mrf.mxu0
        %v4895 = vadd.f32 0.0, %v4894
        %v4896 = vpop.f32.mrf.mxu0
        %v4897 = vadd.f32 0.0, %v4896
        %4898 = vdwg.mxu0
        %v4899 = vld [vmem:[%s9] sm:$0x1]
        %v4901 = vperm.slane %v4899, 0
        %v4903 = vmul.f32 %v4860, %v4901
        %v4904 = vmul.f32 %v4862, %v4901
        %v4905 = vmul.f32 %v4865, %v4901
        %v4906 = vmul.f32 %v4867, %v4901
        %v4907 = vmul.f32 %v4870, %v4901
        %v4908 = vmul.f32 %v4872, %v4901
        %v4909 = vmul.f32 %v4875, %v4901
        %v4910 = vmul.f32 %v4877, %v4901
        %v4911 = vmul.f32 %v4880, %v4901
        %v4912 = vmul.f32 %v4882, %v4901
        %v4913 = vmul.f32 %v4885, %v4901
        %v4914 = vmul.f32 %v4887, %v4901
        %v4915 = vmul.f32 %v4890, %v4901
        %v4916 = vmul.f32 %v4892, %v4901
        %v4917 = vmul.f32 %v4895, %v4901
        %v4918 = vmul.f32 %v4897, %v4901
        %v4919 = vld [vmem:[%s10] sm:$0x1]
        %v4921 = vperm.slane %v4919, 0
        %v4923 = vadd.f32 %v4903, %v4921
        %v4924 = vadd.f32 %v4904, %v4921
        %v4925 = vadd.f32 %v4905, %v4921
        %v4926 = vadd.f32 %v4906, %v4921
        %v4927 = vadd.f32 %v4907, %v4921
        %v4928 = vadd.f32 %v4908, %v4921
        %v4929 = vadd.f32 %v4909, %v4921
        %v4930 = vadd.f32 %v4910, %v4921
        %v4931 = vadd.f32 %v4911, %v4921
        %v4932 = vadd.f32 %v4912, %v4921
        %v4933 = vadd.f32 %v4913, %v4921
        %v4934 = vadd.f32 %v4914, %v4921
        %v4935 = vadd.f32 %v4915, %v4921
        %v4936 = vadd.f32 %v4916, %v4921
        %v4937 = vadd.f32 %v4917, %v4921
        %v4938 = vadd.f32 %v4918, %v4921
        %v4939 = vmax.f32 %v4923, 0.0
        %v4940 = vmax.f32 %v4924, 0.0
        %v4941 = vmax.f32 %v4925, 0.0
        %v4942 = vmax.f32 %v4926, 0.0
        %v4943 = vmax.f32 %v4927, 0.0
        %v4944 = vmax.f32 %v4928, 0.0
        %v4945 = vmax.f32 %v4929, 0.0
        %v4946 = vmax.f32 %v4930, 0.0
        %v4947 = vmax.f32 %v4931, 0.0
        %v4948 = vmax.f32 %v4932, 0.0
        %v4949 = vmax.f32 %v4933, 0.0
        %v4950 = vmax.f32 %v4934, 0.0
        %v4951 = vmax.f32 %v4935, 0.0
        %v4952 = vmax.f32 %v4936, 0.0
        %v4953 = vmax.f32 %v4937, 0.0
        %v4954 = vmax.f32 %v4938, 0.0
        %v4955 = vunpack.c.l.bf16 %v525
        %v4956 = vunpack.c.l.bf16 %v526
        %v4957 = vunpack.c.l.bf16 %v527
        %v4958 = vunpack.c.l.bf16 %v528
        %v4959 = vunpack.c.l.bf16 %v529
        %v4960 = vunpack.c.l.bf16 %v530
        %v4961 = vunpack.c.l.bf16 %v531
        %v4962 = vunpack.c.l.bf16 %v532
        %v4963 = vunpack.c.l.bf16 %v533
        %v4964 = vunpack.c.l.bf16 %v534
        %v4965 = vunpack.c.l.bf16 %v535
        %v4966 = vunpack.c.l.bf16 %v536
        %v4967 = vunpack.c.l.bf16 %v537
        %v4968 = vunpack.c.l.bf16 %v538
        %v4969 = vunpack.c.l.bf16 %v539
        %v4970 = vunpack.c.l.bf16 %v540
        %v4971 = vadd.f32 %v4939, %v4955
        %v4972 = vadd.f32 %v4940, %v4956
        %v4973 = vadd.f32 %v4941, %v4957
        %v4974 = vadd.f32 %v4942, %v4958
        %v4975 = vadd.f32 %v4943, %v4959
        %v4976 = vadd.f32 %v4944, %v4960
        %v4977 = vadd.f32 %v4945, %v4961
        %v4978 = vadd.f32 %v4946, %v4962
        %v4979 = vadd.f32 %v4947, %v4963
        %v4980 = vadd.f32 %v4948, %v4964
        %v4981 = vadd.f32 %v4949, %v4965
        %v4982 = vadd.f32 %v4950, %v4966
        %v4983 = vadd.f32 %v4951, %v4967
        %v4984 = vadd.f32 %v4952, %v4968
        %v4985 = vadd.f32 %v4953, %v4969
        %v4986 = vadd.f32 %v4954, %v4970
        %v4987 = vpack.c.bf16 %v4971, %v4971
        %v4988 = vpack.c.bf16 %v4972, %v4972
        %v4989 = vpack.c.bf16 %v4973, %v4973
        %v4990 = vpack.c.bf16 %v4974, %v4974
        %v4991 = vpack.c.bf16 %v4975, %v4975
        %v4992 = vpack.c.bf16 %v4976, %v4976
        %v4993 = vpack.c.bf16 %v4977, %v4977
        %v4994 = vpack.c.bf16 %v4978, %v4978
        %v4995 = vpack.c.bf16 %v4979, %v4979
        %v4996 = vpack.c.bf16 %v4980, %v4980
        %v4997 = vpack.c.bf16 %v4981, %v4981
        %v4998 = vpack.c.bf16 %v4982, %v4982
        %v4999 = vpack.c.bf16 %v4983, %v4983
        %v5000 = vpack.c.bf16 %v4984, %v4984
        %v5001 = vpack.c.bf16 %v4985, %v4985
        %v5002 = vpack.c.bf16 %v4986, %v4986
        %5003 = vst [vmem:[%s449] sm:$0xf] %v4987
        %5004 = vst [vmem:[%s449 + $0x4] sm:$0xf] %v4988
        %5005 = vst [vmem:[%s449 + $0x8] sm:$0xf] %v4989
        %5006 = vst [vmem:[%s449 + $0xc] sm:$0xf] %v4990
        %5007 = vst [vmem:[%s449 + $0x10] sm:$0xf] %v4991
        %5008 = vst [vmem:[%s449 + $0x14] sm:$0xf] %v4992
        %5009 = vst [vmem:[%s449 + $0x18] sm:$0xf] %v4993
        %5010 = vst [vmem:[%s449 + $0x1c] sm:$0xf] %v4994
        %5011 = vst [vmem:[%s449 + $0x20] sm:$0xf] %v4995
        %5012 = vst [vmem:[%s449 + $0x24] sm:$0xf] %v4996
        %5013 = vst [vmem:[%s449 + $0x28] sm:$0xf] %v4997
        %5014 = vst [vmem:[%s449 + $0x2c] sm:$0xf] %v4998
        %5015 = vst [vmem:[%s449 + $0x30] sm:$0xf] %v4999
        %5016 = vst [vmem:[%s449 + $0x34] sm:$0xf] %v5000
        %5017 = vst [vmem:[%s449 + $0x38] sm:$0xf] %v5001
        %5018 = vst [vmem:[%s449 + $0x3c] sm:$0xf] %v5002
        %s5019 = sand.u32 %s269, 1
        %s5020 = scalar_lea.sflag [#allocation9], %s5019
        %s5021 = sand.u32 %s269, 1
        %s5022 = smul.addr %s5021, 64
        %s5023 = scalar_lea.vmem [#allocation15], %s5022
        // Predicated region
        $region109: #{tpu_custom_call.1} parent=59 // pred_check
          %p5024 = pneg %p279
        $region110: #{tpu_custom_call.1} parent=59 // pred_check_branch
          %5026 = sbr.rel (%p5024) target = $region112
        $region111: #{tpu_custom_call.1} parent=59 // pred_region
          %s5027 = smul.u32 8, %s35
          %5029 = vsyncadd %s5020, 0
          %s5030 = smul.addr %s5027, 2
          %s5031 = smul.addr %s34, 48
          %s5032 = sadd.s32 %s5030, %s5031
          %s5033 = smul.addr %s5032, 4
          %s5034 = scalar_lea.hbm %s11, %s5033
          %s5035 = sshll.u32 %s5023, 4
          %s5036 = int_to_ptr.vmem [resolvable:$true] %s5035
          %s5037 = sshll.u32 %s5034, 4
          %s5038 = int_to_ptr.hbm [resolvable:$true] %s5037
          %5043 = dma.vmem_to_hbm [thread:$0]  %s5036, 1024, %s5038, %s5020, 64, 64, 4
        $region112: #{tpu_custom_call.1} parent=59 // pred_fallthru
          _
      $region60: #{tpu_custom_call.1} parent=5 // pred_fallthru
        _
      %p5044 = scmp.le.s32.totalorder 2, %s25
      // Predicated region
      $region113: #{tpu_custom_call.1} parent=5 // pred_check
        %p5045 = pneg %p5044
      $region114: #{tpu_custom_call.1} parent=5 // pred_check_branch
        %5047 = sbr.rel (%p5045) target = $region116
      $region115: #{tpu_custom_call.1} parent=5 // pred_region
        %s5048 = ssub.s32 %s25, 2
        // Predicated region
        $region117: #{tpu_custom_call.1} parent=115 // pred_check
          %p5049 = pneg %p285
        $region118: #{tpu_custom_call.1} parent=115 // pred_check_branch
          %5051 = sbr.rel (%p5049) target = $region120
        $region119: #{tpu_custom_call.1} parent=115 // pred_region
          %s5052 = sand.u32 %s270, 1
          %s5053 = scalar_lea.sflag [#allocation9], %s5052
          %s5054 = sand.u32 %s270, 1
          %s5055 = smul.addr %s5054, 64
          %s5056 = scalar_lea.vmem [#allocation15], %s5055
          %5058 = dma.done %s5053, 1024
        $region120: #{tpu_custom_call.1} parent=115 // pred_fallthru
          _
      $region116: #{tpu_custom_call.1} parent=5 // pred_fallthru
        _
    $region6: #{tpu_custom_call.1} parent=1 // loop_footer
      %s29 = sadd.s32 1, %s25
    $region7: #{tpu_custom_call.1} parent=1 // loop_footer_branch
      %24 = sbr.rel target = $region3
    $region8: #{tpu_custom_call.1} parent=1 // loop_exit
      _
    %5059 = vsyncpa [#allocation8], 1
    %s5060 = scalar_lea.sflag [#allocation8], 1
    %5061 = vsyncpa %s5060, 1
    %5062 = vsyncpa [#allocation11], 1
    %5063 = vsyncpa [#allocation14], 1
    %5064 = vsyncpa [#allocation9], 1
    %s5065 = scalar_lea.sflag [#allocation9], 1
    %5066 = vsyncpa %s5065, 1
  %5067 = vsyncmov [#allocation3]
  %s5068 = vpop.sfrf %5067
  %p5069 = scmp.eq.s32.totalorder %s5068, 0
  %p5070 = pneg %p5069
  %5072 = shalt.err (%p5070)
  %s5073 = scalar_lea.sflag [#allocation3], 1
  %5074 = vsyncmov %s5073
  %s5075 = vpop.sfrf %5074
  %p5076 = scmp.eq.s32.totalorder %s5075, 0
  %p5077 = pneg %p5076
  %5079 = shalt.err (%p5077)

</llo_original>
